<compile_context>
chip_gen: v7x
topology: tpu7x:2x2x1
jax: 0.10.0
libtpu: 0.0.40
codegen_flags: <defaults>
</compile_context>

<pallas_src>
import jax
import jax.numpy as jnp
from jax.experimental import pallas as pl
from jax.experimental.pallas import tpu as pltpu

# ---- small, shape-consistent configuration (mirrors module hyper-params) ----
N_EMBED = 32          # n_embed
N_HEADS = 4           # n_heads
HEAD_SIZE = N_EMBED // N_HEADS
N_LAYERS = 2          # n_layers
BLOCK_SIZE = 8        # block_size (max context)
VOCAB_SIZE = 64       # vocab_size
V_PAD = 128           # lane-dense padded lm_head width (multiple of 128)
LN_EPS = 1e-5         # torch.nn.LayerNorm default eps


def _layernorm(x, w, b):
    # PyTorch LayerNorm semantics: biased variance, eps inside rsqrt.
    mu = jnp.mean(x, axis=-1, keepdims=True)
    var = jnp.mean((x - mu) ** 2, axis=-1, keepdims=True)
    return (x - mu) * jax.lax.rsqrt(var + LN_EPS) * w + b


# ----------------------------- fused Pallas kernel ---------------------------
def gpt_fused_kernel(x_ref,
                     ln1w_ref, ln1b_ref, wqkv_ref, wo_ref, bo_ref,
                     ln2w_ref, ln2b_ref, w1_ref, b1_ref, w2_ref, b2_ref,
                     wlm_ref, blm_ref,
                     o_ref):
    """Entire GPT forward (all blocks + lm_head) for Bstep batch elements."""
    Bstep, T, D = x_ref.shape
    N = Bstep * T
    H, hs = N_HEADS, HEAD_SIZE

    # Flatten batch for all dense (position-independent) matmuls.
    x = x_ref[...].reshape(N, D)                                   # (N, D)

    # Additive causal mask (T, T), built once, broadcast over (batch, head).
    row = jax.lax.broadcasted_iota(jnp.int32, (T, T), 0)
    col = jax.lax.broadcasted_iota(jnp.int32, (T, T), 1)
    mask = jnp.where(row >= col, 0.0, -1e30).astype(jnp.float32)   # (T, T)

    for l in range(N_LAYERS):                    # static unrolled layer loop
        # ---------------- self-attention branch (pre-LN) ----------------
        xn = _layernorm(x, ln1w_ref[l], ln1b_ref[l])               # (N, D)

        # Single fused QKV projection (scale folded into the q columns).
        qkv = jnp.dot(xn, wqkv_ref[l],
                      preferred_element_type=jnp.float32)          # (N, 3D)

        def gather_heads(base):
            # (N, D) lane-sliced per head -> (Bstep*H, T, hs), g = h*Bstep + b
            return jnp.concatenate(
                [qkv[:, base + h * hs: base + (h + 1) * hs].reshape(Bstep, T, hs)
                 for h in range(H)], axis=0)

        q = gather_heads(0)                                        # (G, T, hs)
        k = gather_heads(D)
        v = gather_heads(2 * D)

        wei = jnp.einsum('gqe,gke->gqk', q, k,
                         preferred_element_type=jnp.float32)       # (G, T, T)
        wei = wei + mask[None]
        wei = wei - jnp.max(wei, axis=-1, keepdims=True)
        p = jnp.exp(wei)
        p = p / jnp.sum(p, axis=-1, keepdims=True)                 # exact softmax
        # attention dropout is identity in eval mode

        oh = jnp.einsum('gqk,gke->gqe', p, v,
                        preferred_element_type=jnp.float32)        # (G, T, hs)

        # Concatenate heads back into features (col h*hs+e = head h, dim e),
        # then a single output-projection matmul with K = H*hs = D.
        oh_cat = jnp.concatenate(
            [oh[h * Bstep:(h + 1) * Bstep].reshape(N, hs) for h in range(H)],
            axis=-1)                                               # (N, D)
        sa = jnp.dot(oh_cat, wo_ref[l],
                     preferred_element_type=jnp.float32) + bo_ref[l]
        # proj dropout is identity in eval mode
        x = x + sa

        # ---------------- feed-forward branch (pre-LN) -------------------
        xn2 = _layernorm(x, ln2w_ref[l], ln2b_ref[l])
        h1 = jnp.dot(xn2, w1_ref[l], preferred_element_type=jnp.float32) + b1_ref[l]
        h1 = jnp.maximum(h1, 0.0)                                  # ReLU
        h2 = jnp.dot(h1, w2_ref[l], preferred_element_type=jnp.float32) + b2_ref[l]
        # ffwd dropout is identity in eval mode
        x = x + h2

    # lm_head (reference forward applies NO final LayerNorm).  Output padded
    # to 128 lanes so the only store is lane-dense (unmasked vst).
    logits = jnp.dot(x, wlm_ref[...], preferred_element_type=jnp.float32) + blm_ref[...]
    o_ref[...] = logits.reshape(Bstep, T, V_PAD)


# ----------------------------- wrappers --------------------------------------
def _replicated_spec(arr):
    nd = arr.ndim
    return pl.BlockSpec(arr.shape, lambda b, _nd=nd: (0,) * _nd)


def _num_grid_steps(batch):
    """2 parallel steps on v7x (2 TensorCores/chip), 1 step on v5e/v6e."""
    kind = ""
    try:
        kind = jax.devices()[0].device_kind.lower()
    except Exception:  # pragma: no cover - defensive
        pass
    steps = 2 if ("v7" in kind or "7x" in kind) else 1
    if batch % steps != 0:
        steps = 1
    return steps


def gpt_pallas_forward(x_emb, weights):
    """x_emb: f32 [B, T, D] embedded tokens.  Returns logits [B, T, VOCAB_SIZE]."""
    B, T, D = x_emb.shape
    num_steps = _num_grid_steps(B)
    Bstep = B // num_steps

    in_specs = [pl.BlockSpec((Bstep, T, D), lambda b: (b, 0, 0))]
    in_specs += [_replicated_spec(w) for w in weights]
    out_spec = pl.BlockSpec((Bstep, T, V_PAD), lambda b: (b, 0, 0))

    # Advisory cost estimate so XLA schedules the custom call sensibly.
    flops_per_tok = N_LAYERS * (2 * D * 3 * D            # fused qkv projection
                                + 2 * 2 * T * D          # scores + weighted values
                                + 2 * D * D              # output projection
                                + 2 * (2 * D * 4 * D)    # MLP up + down
                                ) + 2 * D * V_PAD        # lm_head
    flops = int(B * T * flops_per_tok)
    transcendentals = int(B * N_LAYERS * N_HEADS * T * T)      # softmax exps
    weight_bytes = int(sum(int(w.size) for w in weights) * 4)
    bytes_accessed = int(4 * (B * T * D + B * T * V_PAD) + weight_bytes)

    # TODO(synk): when D/L grow (e.g. D=384, 6 layers) add an "arbitrary" layer
    # grid axis with per-layer weight BlockSpecs (pl.Buffered) and consider
    # bf16 weights so the resident footprint fits v7x's smaller VMEM.
    logits_pad = pl.pallas_call(
        gpt_fused_kernel,
        out_shape=jax.ShapeDtypeStruct((B, T, V_PAD), jnp.float32),
        grid_spec=pltpu.PrefetchScalarGridSpec(
            num_scalar_prefetch=0,
            grid=(num_steps,),
            in_specs=in_specs,
            out_specs=out_spec,
        ),
        compiler_params=pltpu.CompilerParams(
            dimension_semantics=("parallel",),
            vmem_limit_bytes=32 * 1024 * 1024),
        cost_estimate=pl.CostEstimate(flops=flops,
                                      transcendentals=transcendentals,
                                      bytes_accessed=bytes_accessed),
    )(x_emb, *weights)
    return logits_pad[:, :, :VOCAB_SIZE]


@jax.jit
def gpt_forward(idx, tok_emb, pos_emb, weights):
    """idx: int32 [B, T] token ids.  Returns logits [B, T, VOCAB_SIZE]."""
    B, T = idx.shape
    # TODO(synk): token/positional embedding gather stays in plain JAX glue
    # (data-dependent row gather has no payoff as a Pallas kernel at this size).
    x = jnp.take(tok_emb, idx, axis=0) + pos_emb[:T][None, :, :]     # (B, T, D)
    return gpt_pallas_forward(x, weights)


# ----------------------------- parameter init / prep -------------------------
def init_params(key):
    def lin(k, fan_in, fan_out):
        return jax.random.normal(k, (fan_in, fan_out), jnp.float32) * 0.02

    keys = jax.random.split(key, 4 + N_LAYERS)
    params = {
        "tok_emb": jax.random.normal(keys[0], (VOCAB_SIZE, N_EMBED), jnp.float32) * 0.02,
        "pos_emb": jax.random.normal(keys[1], (BLOCK_SIZE, N_EMBED), jnp.float32) * 0.02,
        # ln_f exists on the torch module but is never used in its forward().
        "lnf_w": jnp.ones((1, N_EMBED), jnp.float32),
        "lnf_b": jnp.zeros((1, N_EMBED), jnp.float32),
        "w_lm": lin(keys[2], N_EMBED, VOCAB_SIZE),
        "b_lm": jnp.zeros((1, VOCAB_SIZE), jnp.float32),
        "blocks": [],
    }
    for l in range(N_LAYERS):
        bk = jax.random.split(keys[4 + l], 6)
        params["blocks"].append({
            "ln1_w": jnp.ones((1, N_EMBED), jnp.float32),
            "ln1_b": jnp.zeros((1, N_EMBED), jnp.float32),
            # per-head key/query/value Linear(bias=False) weights, concatenated
            # along the output axis (head-major columns).
            "w_q": lin(bk[0], N_EMBED, N_EMBED),
            "w_k": lin(bk[1], N_EMBED, N_EMBED),
            "w_v": lin(bk[2], N_EMBED, N_EMBED),
            "w_o": lin(bk[3], N_EMBED, N_EMBED),
            "b_o": jnp.zeros((1, N_EMBED), jnp.float32),
            "ln2_w": jnp.ones((1, N_EMBED), jnp.float32),
            "ln2_b": jnp.zeros((1, N_EMBED), jnp.float32),
            "w_ff1": lin(bk[4], N_EMBED, 4 * N_EMBED),
            "b_ff1": jnp.zeros((1, 4 * N_EMBED), jnp.float32),
            "w_ff2": lin(bk[5], 4 * N_EMBED, N_EMBED),
            "b_ff2": jnp.zeros((1, N_EMBED), jnp.float32),
        })
    return params


def prepare_weights(params):
    """One-time host-side prep: stack per-layer weights along a leading L axis,
    fuse q/k/v into a single (D, 3D) slab (scale folded into the q columns),
    and pad the lm_head to a lane-dense (128) output width."""
    blocks = params["blocks"]
    stack = lambda name: jnp.stack([b[name] for b in blocks], axis=0)

    # Reference scales scores by C**-0.5 with C = n_embed (C = x.shape[-1] in
    # Head.forward); fold it into the query columns once, host-side.
    scale = float(N_EMBED) ** -0.5
    w_qkv = jnp.stack(
        [jnp.concatenate([b["w_q"] * scale, b["w_k"], b["w_v"]], axis=1)
         for b in blocks], axis=0)                                   # (L, D, 3D)

    pad = V_PAD - VOCAB_SIZE
    w_lm = jnp.pad(params["w_lm"], ((0, 0), (0, pad)))
    b_lm = jnp.pad(params["b_lm"], ((0, 0), (0, pad)))

    return (stack("ln1_w"), stack("ln1_b"),
            w_qkv, stack("w_o"), stack("b_o"),
            stack("ln2_w"), stack("ln2_b"),
            stack("w_ff1"), stack("b_ff1"), stack("w_ff2"), stack("b_ff2"),
            w_lm, b_lm)


# ----------------------------- pure-JAX reference ----------------------------
def gpt_reference(idx, params):
    """Straightforward JAX port of the PyTorch module's forward (eval mode)."""
    B, T = idx.shape
    x = jnp.take(params["tok_emb"], idx, axis=0) + params["pos_emb"][:T][None]
    scale = float(N_EMBED) ** -0.5
    tril = jnp.tril(jnp.ones((T, T), dtype=bool))
    for blk in params["blocks"]:
        xn = _layernorm(x, blk["ln1_w"], blk["ln1_b"])
        outs = []
        for h in range(N_HEADS):
            sl = slice(h * HEAD_SIZE, (h + 1) * HEAD_SIZE)
            q = xn @ blk["w_q"][:, sl]
            k = xn @ blk["w_k"][:, sl]
            v = xn @ blk["w_v"][:, sl]
            wei = jnp.einsum('btd,bsd->bts', q, k) * scale
            wei = jnp.where(tril[None], wei, -jnp.inf)
            wei = jax.nn.softmax(wei, axis=-1)
            outs.append(jnp.einsum('bts,bsd->btd', wei, v))
        x = x + (jnp.concatenate(outs, axis=-1) @ blk["w_o"] + blk["b_o"])
        xn2 = _layernorm(x, blk["ln2_w"], blk["ln2_b"])
        h1 = jax.nn.relu(xn2 @ blk["w_ff1"] + blk["b_ff1"])
        x = x + (h1 @ blk["w_ff2"] + blk["b_ff2"])
    return x @ params["w_lm"] + params["b_lm"]        # no ln_f, as in reference


# ----------------------------- main -------------------------------------------
if __name__ == "__main__":
    key = jax.random.PRNGKey(0)
    pkey, ikey = jax.random.split(key)
    params = init_params(pkey)
    weights = prepare_weights(params)

    B, T = 2, BLOCK_SIZE
    idx = jax.random.randint(ikey, (B, T), 0, VOCAB_SIZE, dtype=jnp.int32)

    logits = gpt_forward(idx, params["tok_emb"], params["pos_emb"], weights)
    jax.block_until_ready(logits)
    assert logits.shape == (B, T, VOCAB_SIZE)
    assert bool(jnp.all(jnp.isfinite(logits)))

    ref = gpt_reference(idx, params)
    assert bool(jnp.allclose(logits, ref, atol=1e-3, rtol=1e-3))
    print("KERNEL_OK")
</pallas_src>

<mosaic_0001>
module attributes {stable_mosaic.version = 11 : i64} {
  func.func @gpt_fused_kernel(%arg0: i32, %arg1: memref<2x8x32xf32, #tpu.memory_space<vmem>>, %arg2: memref<2x1x32xf32, #tpu.memory_space<vmem>>, %arg3: memref<2x1x32xf32, #tpu.memory_space<vmem>>, %arg4: memref<2x32x96xf32, #tpu.memory_space<vmem>>, %arg5: memref<2x32x32xf32, #tpu.memory_space<vmem>>, %arg6: memref<2x1x32xf32, #tpu.memory_space<vmem>>, %arg7: memref<2x1x32xf32, #tpu.memory_space<vmem>>, %arg8: memref<2x1x32xf32, #tpu.memory_space<vmem>>, %arg9: memref<2x32x128xf32, #tpu.memory_space<vmem>>, %arg10: memref<2x1x128xf32, #tpu.memory_space<vmem>>, %arg11: memref<2x128x32xf32, #tpu.memory_space<vmem>>, %arg12: memref<2x1x32xf32, #tpu.memory_space<vmem>>, %arg13: memref<32x128xf32, #tpu.memory_space<vmem>>, %arg14: memref<1x128xf32, #tpu.memory_space<vmem>>, %arg15: memref<2x8x128xf32, #tpu.memory_space<vmem>>) attributes {dimension_semantics = [#tpu.dimension_semantics<parallel>], iteration_bounds = array<i64: 1>, scalar_prefetch = 0 : i64, scratch_operands = 0 : i64, tpu.core_type = #tpu.core_type<tc>, window_params = [{transform_indices = @transform_0, window_bounds = array<i64: 2, 8, 32>}, {pipeline_mode = #tpu.pipeline_mode<synchronous>, transform_indices = @transform_1, window_bounds = array<i64: 2, 1, 32>}, {pipeline_mode = #tpu.pipeline_mode<synchronous>, transform_indices = @transform_2, window_bounds = array<i64: 2, 1, 32>}, {pipeline_mode = #tpu.pipeline_mode<synchronous>, transform_indices = @transform_3, window_bounds = array<i64: 2, 32, 96>}, {pipeline_mode = #tpu.pipeline_mode<synchronous>, transform_indices = @transform_4, window_bounds = array<i64: 2, 32, 32>}, {pipeline_mode = #tpu.pipeline_mode<synchronous>, transform_indices = @transform_5, window_bounds = array<i64: 2, 1, 32>}, {pipeline_mode = #tpu.pipeline_mode<synchronous>, transform_indices = @transform_6, window_bounds = array<i64: 2, 1, 32>}, {pipeline_mode = #tpu.pipeline_mode<synchronous>, transform_indices = @transform_7, window_bounds = array<i64: 2, 1, 32>}, {pipeline_mode = #tpu.pipeline_mode<synchronous>, transform_indices = @transform_8, window_bounds = array<i64: 2, 32, 128>}, {pipeline_mode = #tpu.pipeline_mode<synchronous>, transform_indices = @transform_9, window_bounds = array<i64: 2, 1, 128>}, {pipeline_mode = #tpu.pipeline_mode<synchronous>, transform_indices = @transform_10, window_bounds = array<i64: 2, 128, 32>}, {pipeline_mode = #tpu.pipeline_mode<synchronous>, transform_indices = @transform_11, window_bounds = array<i64: 2, 1, 32>}, {pipeline_mode = #tpu.pipeline_mode<synchronous>, transform_indices = @transform_12, window_bounds = array<i64: 32, 128>}, {pipeline_mode = #tpu.pipeline_mode<synchronous>, transform_indices = @transform_13, window_bounds = array<i64: 1, 128>}, {transform_indices = @transform_14, window_bounds = array<i64: 2, 8, 128>}]} {
    %c0 = arith.constant 0 : index
    %c0_0 = arith.constant 0 : index
    %c0_1 = arith.constant 0 : index
    %0 = vector.load %arg1[%c0, %c0_0, %c0_1] : memref<2x8x32xf32, #tpu.memory_space<vmem>>, vector<2x8x32xf32>
    %1 = vector.shape_cast %0 : vector<2x8x32xf32> to vector<16x32xf32>
    %2 = tpu.iota {dimensions = array<i32: 0>} : vector<8x8xi32>
    %3 = tpu.iota {dimensions = array<i32: 1>} : vector<8x8xi32>
    %4 = arith.cmpi sge, %2, %3 : vector<8x8xi32>
    %cst = arith.constant 0.000000e+00 : f32
    %cst_2 = arith.constant -1.000000e+30 : f32
    %5 = vector.broadcast %cst : f32 to vector<8x8xf32>
    %6 = vector.broadcast %cst_2 : f32 to vector<8x8xf32>
    %7 = arith.select %4, %5, %6 : vector<8x8xi1>, vector<8x8xf32>
    %c0_3 = arith.constant 0 : index
    %c0_4 = arith.constant 0 : index
    %c0_5 = arith.constant 0 : index
    %8 = vector.load %arg2[%c0_3, %c0_4, %c0_5] : memref<2x1x32xf32, #tpu.memory_space<vmem>>, vector<1x1x32xf32>
    %9 = vector.shape_cast %8 : vector<1x1x32xf32> to vector<1x32xf32>
    %c0_6 = arith.constant 0 : index
    %c0_7 = arith.constant 0 : index
    %c0_8 = arith.constant 0 : index
    %10 = vector.load %arg3[%c0_6, %c0_7, %c0_8] : memref<2x1x32xf32, #tpu.memory_space<vmem>>, vector<1x1x32xf32>
    %11 = vector.shape_cast %10 : vector<1x1x32xf32> to vector<1x32xf32>
    %cst_9 = arith.constant dense<0.000000e+00> : vector<16xf32>
    %12 = vector.multi_reduction <add>, %1, %cst_9 [1] : vector<16x32xf32> to vector<16xf32>
    %13 = vector.shape_cast %12 : vector<16xf32> to vector<16x1xf32>
    %cst_10 = arith.constant 3.200000e+01 : f32
    %14 = vector.broadcast %cst_10 : f32 to vector<16x1xf32>
    %15 = arith.divf %13, %14 : vector<16x1xf32>
    %16 = vector.broadcast %15 : vector<16x1xf32> to vector<16x32xf32>
    %17 = arith.subf %1, %16 : vector<16x32xf32>
    %18 = arith.mulf %17, %17 : vector<16x32xf32>
    %cst_11 = arith.constant dense<0.000000e+00> : vector<16xf32>
    %19 = vector.multi_reduction <add>, %18, %cst_11 [1] : vector<16x32xf32> to vector<16xf32>
    %20 = vector.shape_cast %19 : vector<16xf32> to vector<16x1xf32>
    %cst_12 = arith.constant 3.200000e+01 : f32
    %21 = vector.broadcast %cst_12 : f32 to vector<16x1xf32>
    %22 = arith.divf %20, %21 : vector<16x1xf32>
    %23 = vector.broadcast %15 : vector<16x1xf32> to vector<16x32xf32>
    %24 = arith.subf %1, %23 : vector<16x32xf32>
    %cst_13 = arith.constant 9.99999974E-6 : f32
    %25 = vector.broadcast %cst_13 : f32 to vector<16x1xf32>
    %26 = arith.addf %22, %25 : vector<16x1xf32>
    %27 = math.rsqrt %26 : vector<16x1xf32>
    %28 = vector.broadcast %27 : vector<16x1xf32> to vector<16x32xf32>
    %29 = arith.mulf %24, %28 : vector<16x32xf32>
    %30 = vector.broadcast %9 : vector<1x32xf32> to vector<16x32xf32>
    %31 = arith.mulf %29, %30 : vector<16x32xf32>
    %32 = vector.broadcast %11 : vector<1x32xf32> to vector<16x32xf32>
    %33 = arith.addf %31, %32 : vector<16x32xf32>
    %c0_14 = arith.constant 0 : index
    %c0_15 = arith.constant 0 : index
    %c0_16 = arith.constant 0 : index
    %34 = vector.load %arg4[%c0_14, %c0_15, %c0_16] : memref<2x32x96xf32, #tpu.memory_space<vmem>>, vector<1x32x96xf32>
    %35 = vector.shape_cast %34 : vector<1x32x96xf32> to vector<32x96xf32>
    %cst_17 = arith.constant dense<0.000000e+00> : vector<16x96xf32>
    %36 = tpu.matmul %33, %35, %cst_17 {dimension_numbers = #tpu.dot_dimension_numbers<[1], [0], [0], [1], [0, 0, 1, 1], [], []>} : vector<16x32xf32>, vector<32x96xf32>, vector<16x96xf32> -> vector<16x96xf32>
    %37 = vector.extract_strided_slice %36 {offsets = [0, 0], sizes = [16, 8], strides = [1, 1]} : vector<16x96xf32> to vector<16x8xf32>
    %38 = vector.shape_cast %37 : vector<16x8xf32> to vector<2x8x8xf32>
    %39 = vector.extract_strided_slice %36 {offsets = [0, 8], sizes = [16, 8], strides = [1, 1]} : vector<16x96xf32> to vector<16x8xf32>
    %40 = vector.shape_cast %39 : vector<16x8xf32> to vector<2x8x8xf32>
    %41 = vector.extract_strided_slice %36 {offsets = [0, 16], sizes = [16, 8], strides = [1, 1]} : vector<16x96xf32> to vector<16x8xf32>
    %42 = vector.shape_cast %41 : vector<16x8xf32> to vector<2x8x8xf32>
    %43 = vector.extract_strided_slice %36 {offsets = [0, 24], sizes = [16, 8], strides = [1, 1]} : vector<16x96xf32> to vector<16x8xf32>
    %44 = vector.shape_cast %43 : vector<16x8xf32> to vector<2x8x8xf32>
    %45 = tpu.concatenate %38, %40, %42, %44 in 0 : vector<2x8x8xf32>, vector<2x8x8xf32>, vector<2x8x8xf32>, vector<2x8x8xf32> -> vector<8x8x8xf32>
    %46 = vector.extract_strided_slice %36 {offsets = [0, 32], sizes = [16, 8], strides = [1, 1]} : vector<16x96xf32> to vector<16x8xf32>
    %47 = vector.shape_cast %46 : vector<16x8xf32> to vector<2x8x8xf32>
    %48 = vector.extract_strided_slice %36 {offsets = [0, 40], sizes = [16, 8], strides = [1, 1]} : vector<16x96xf32> to vector<16x8xf32>
    %49 = vector.shape_cast %48 : vector<16x8xf32> to vector<2x8x8xf32>
    %50 = vector.extract_strided_slice %36 {offsets = [0, 48], sizes = [16, 8], strides = [1, 1]} : vector<16x96xf32> to vector<16x8xf32>
    %51 = vector.shape_cast %50 : vector<16x8xf32> to vector<2x8x8xf32>
    %52 = vector.extract_strided_slice %36 {offsets = [0, 56], sizes = [16, 8], strides = [1, 1]} : vector<16x96xf32> to vector<16x8xf32>
    %53 = vector.shape_cast %52 : vector<16x8xf32> to vector<2x8x8xf32>
    %54 = tpu.concatenate %47, %49, %51, %53 in 0 : vector<2x8x8xf32>, vector<2x8x8xf32>, vector<2x8x8xf32>, vector<2x8x8xf32> -> vector<8x8x8xf32>
    %55 = vector.extract_strided_slice %36 {offsets = [0, 64], sizes = [16, 8], strides = [1, 1]} : vector<16x96xf32> to vector<16x8xf32>
    %56 = vector.shape_cast %55 : vector<16x8xf32> to vector<2x8x8xf32>
    %57 = vector.extract_strided_slice %36 {offsets = [0, 72], sizes = [16, 8], strides = [1, 1]} : vector<16x96xf32> to vector<16x8xf32>
    %58 = vector.shape_cast %57 : vector<16x8xf32> to vector<2x8x8xf32>
    %59 = vector.extract_strided_slice %36 {offsets = [0, 80], sizes = [16, 8], strides = [1, 1]} : vector<16x96xf32> to vector<16x8xf32>
    %60 = vector.shape_cast %59 : vector<16x8xf32> to vector<2x8x8xf32>
    %61 = vector.extract_strided_slice %36 {offsets = [0, 88], sizes = [16, 8], strides = [1, 1]} : vector<16x96xf32> to vector<16x8xf32>
    %62 = vector.shape_cast %61 : vector<16x8xf32> to vector<2x8x8xf32>
    %63 = tpu.concatenate %56, %58, %60, %62 in 0 : vector<2x8x8xf32>, vector<2x8x8xf32>, vector<2x8x8xf32>, vector<2x8x8xf32> -> vector<8x8x8xf32>
    "tpu.trace_start"() <{level = 10 : i32, message = "gqe,gke->gqk"}> : () -> ()
    %cst_18 = arith.constant dense<0.000000e+00> : vector<8x8x8xf32>
    %64 = tpu.matmul %45, %54, %cst_18 {dimension_numbers = #tpu.dot_dimension_numbers<[2], [2], [1], [1], [0, 0, 0, 1, 1, 1], [0], [0]>} : vector<8x8x8xf32>, vector<8x8x8xf32>, vector<8x8x8xf32> -> vector<8x8x8xf32>
    "tpu.trace_stop"() : () -> ()
    %65 = vector.shape_cast %7 : vector<8x8xf32> to vector<1x8x8xf32>
    %66 = vector.broadcast %65 : vector<1x8x8xf32> to vector<8x8x8xf32>
    %67 = arith.addf %64, %66 : vector<8x8x8xf32>
    %cst_19 = arith.constant dense<0xFF800000> : vector<8x8xf32>
    %68 = vector.multi_reduction <maximumf>, %67, %cst_19 [2] : vector<8x8x8xf32> to vector<8x8xf32>
    %69 = vector.shape_cast %68 : vector<8x8xf32> to vector<8x8x1xf32>
    %70 = vector.broadcast %69 : vector<8x8x1xf32> to vector<8x8x8xf32>
    %71 = arith.subf %67, %70 : vector<8x8x8xf32>
    %72 = math.exp %71 : vector<8x8x8xf32>
    %cst_20 = arith.constant dense<0.000000e+00> : vector<8x8xf32>
    %73 = vector.multi_reduction <add>, %72, %cst_20 [2] : vector<8x8x8xf32> to vector<8x8xf32>
    %74 = vector.shape_cast %73 : vector<8x8xf32> to vector<8x8x1xf32>
    %75 = vector.broadcast %74 : vector<8x8x1xf32> to vector<8x8x8xf32>
    %76 = arith.divf %72, %75 : vector<8x8x8xf32>
    "tpu.trace_start"() <{level = 10 : i32, message = "gqk,gke->gqe"}> : () -> ()
    %cst_21 = arith.constant dense<0.000000e+00> : vector<8x8x8xf32>
    %77 = tpu.matmul %76, %63, %cst_21 {dimension_numbers = #tpu.dot_dimension_numbers<[2], [1], [1], [2], [0, 0, 0, 1, 1, 2], [0], [0]>} : vector<8x8x8xf32>, vector<8x8x8xf32>, vector<8x8x8xf32> -> vector<8x8x8xf32>
    "tpu.trace_stop"() : () -> ()
    %78 = vector.extract_strided_slice %77 {offsets = [0, 0, 0], sizes = [2, 8, 8], strides = [1, 1, 1]} : vector<8x8x8xf32> to vector<2x8x8xf32>
    %79 = vector.shape_cast %78 : vector<2x8x8xf32> to vector<16x8xf32>
    %80 = vector.extract_strided_slice %77 {offsets = [2, 0, 0], sizes = [2, 8, 8], strides = [1, 1, 1]} : vector<8x8x8xf32> to vector<2x8x8xf32>
    %81 = vector.shape_cast %80 : vector<2x8x8xf32> to vector<16x8xf32>
    %82 = vector.extract_strided_slice %77 {offsets = [4, 0, 0], sizes = [2, 8, 8], strides = [1, 1, 1]} : vector<8x8x8xf32> to vector<2x8x8xf32>
    %83 = vector.shape_cast %82 : vector<2x8x8xf32> to vector<16x8xf32>
    %84 = vector.extract_strided_slice %77 {offsets = [6, 0, 0], sizes = [2, 8, 8], strides = [1, 1, 1]} : vector<8x8x8xf32> to vector<2x8x8xf32>
    %85 = vector.shape_cast %84 : vector<2x8x8xf32> to vector<16x8xf32>
    %86 = tpu.concatenate %79, %81, %83, %85 in 1 : vector<16x8xf32>, vector<16x8xf32>, vector<16x8xf32>, vector<16x8xf32> -> vector<16x32xf32>
    %c0_22 = arith.constant 0 : index
    %c0_23 = arith.constant 0 : index
    %c0_24 = arith.constant 0 : index
    %87 = vector.load %arg5[%c0_22, %c0_23, %c0_24] : memref<2x32x32xf32, #tpu.memory_space<vmem>>, vector<1x32x32xf32>
    %88 = vector.shape_cast %87 : vector<1x32x32xf32> to vector<32x32xf32>
    %cst_25 = arith.constant dense<0.000000e+00> : vector<16x32xf32>
    %89 = tpu.matmul %86, %88, %cst_25 {dimension_numbers = #tpu.dot_dimension_numbers<[1], [0], [0], [1], [0, 0, 1, 1], [], []>} : vector<16x32xf32>, vector<32x32xf32>, vector<16x32xf32> -> vector<16x32xf32>
    %c0_26 = arith.constant 0 : index
    %c0_27 = arith.constant 0 : index
    %c0_28 = arith.constant 0 : index
    %90 = vector.load %arg6[%c0_26, %c0_27, %c0_28] : memref<2x1x32xf32, #tpu.memory_space<vmem>>, vector<1x1x32xf32>
    %91 = vector.shape_cast %90 : vector<1x1x32xf32> to vector<1x32xf32>
    %92 = vector.broadcast %91 : vector<1x32xf32> to vector<16x32xf32>
    %93 = arith.addf %89, %92 : vector<16x32xf32>
    %94 = arith.addf %1, %93 : vector<16x32xf32>
    %c0_29 = arith.constant 0 : index
    %c0_30 = arith.constant 0 : index
    %c0_31 = arith.constant 0 : index
    %95 = vector.load %arg7[%c0_29, %c0_30, %c0_31] : memref<2x1x32xf32, #tpu.memory_space<vmem>>, vector<1x1x32xf32>
    %96 = vector.shape_cast %95 : vector<1x1x32xf32> to vector<1x32xf32>
    %c0_32 = arith.constant 0 : index
    %c0_33 = arith.constant 0 : index
    %c0_34 = arith.constant 0 : index
    %97 = vector.load %arg8[%c0_32, %c0_33, %c0_34] : memref<2x1x32xf32, #tpu.memory_space<vmem>>, vector<1x1x32xf32>
    %98 = vector.shape_cast %97 : vector<1x1x32xf32> to vector<1x32xf32>
    %cst_35 = arith.constant dense<0.000000e+00> : vector<16xf32>
    %99 = vector.multi_reduction <add>, %94, %cst_35 [1] : vector<16x32xf32> to vector<16xf32>
    %100 = vector.shape_cast %99 : vector<16xf32> to vector<16x1xf32>
    %cst_36 = arith.constant 3.200000e+01 : f32
    %101 = vector.broadcast %cst_36 : f32 to vector<16x1xf32>
    %102 = arith.divf %100, %101 : vector<16x1xf32>
    %103 = vector.broadcast %102 : vector<16x1xf32> to vector<16x32xf32>
    %104 = arith.subf %94, %103 : vector<16x32xf32>
    %105 = arith.mulf %104, %104 : vector<16x32xf32>
    %cst_37 = arith.constant dense<0.000000e+00> : vector<16xf32>
    %106 = vector.multi_reduction <add>, %105, %cst_37 [1] : vector<16x32xf32> to vector<16xf32>
    %107 = vector.shape_cast %106 : vector<16xf32> to vector<16x1xf32>
    %cst_38 = arith.constant 3.200000e+01 : f32
    %108 = vector.broadcast %cst_38 : f32 to vector<16x1xf32>
    %109 = arith.divf %107, %108 : vector<16x1xf32>
    %110 = vector.broadcast %102 : vector<16x1xf32> to vector<16x32xf32>
    %111 = arith.subf %94, %110 : vector<16x32xf32>
    %cst_39 = arith.constant 9.99999974E-6 : f32
    %112 = vector.broadcast %cst_39 : f32 to vector<16x1xf32>
    %113 = arith.addf %109, %112 : vector<16x1xf32>
    %114 = math.rsqrt %113 : vector<16x1xf32>
    %115 = vector.broadcast %114 : vector<16x1xf32> to vector<16x32xf32>
    %116 = arith.mulf %111, %115 : vector<16x32xf32>
    %117 = vector.broadcast %96 : vector<1x32xf32> to vector<16x32xf32>
    %118 = arith.mulf %116, %117 : vector<16x32xf32>
    %119 = vector.broadcast %98 : vector<1x32xf32> to vector<16x32xf32>
    %120 = arith.addf %118, %119 : vector<16x32xf32>
    %c0_40 = arith.constant 0 : index
    %c0_41 = arith.constant 0 : index
    %c0_42 = arith.constant 0 : index
    %121 = vector.load %arg9[%c0_40, %c0_41, %c0_42] : memref<2x32x128xf32, #tpu.memory_space<vmem>>, vector<1x32x128xf32>
    %122 = vector.shape_cast %121 : vector<1x32x128xf32> to vector<32x128xf32>
    %cst_43 = arith.constant dense<0.000000e+00> : vector<16x128xf32>
    %123 = tpu.matmul %120, %122, %cst_43 {dimension_numbers = #tpu.dot_dimension_numbers<[1], [0], [0], [1], [0, 0, 1, 1], [], []>} : vector<16x32xf32>, vector<32x128xf32>, vector<16x128xf32> -> vector<16x128xf32>
    %c0_44 = arith.constant 0 : index
    %c0_45 = arith.constant 0 : index
    %c0_46 = arith.constant 0 : index
    %124 = vector.load %arg10[%c0_44, %c0_45, %c0_46] : memref<2x1x128xf32, #tpu.memory_space<vmem>>, vector<1x1x128xf32>
    %125 = vector.shape_cast %124 : vector<1x1x128xf32> to vector<1x128xf32>
    %126 = vector.broadcast %125 : vector<1x128xf32> to vector<16x128xf32>
    %127 = arith.addf %123, %126 : vector<16x128xf32>
    %cst_47 = arith.constant 0.000000e+00 : f32
    %128 = vector.broadcast %cst_47 : f32 to vector<16x128xf32>
    %129 = arith.maximumf %127, %128 : vector<16x128xf32>
    %c0_48 = arith.constant 0 : index
    %c0_49 = arith.constant 0 : index
    %c0_50 = arith.constant 0 : index
    %130 = vector.load %arg11[%c0_48, %c0_49, %c0_50] : memref<2x128x32xf32, #tpu.memory_space<vmem>>, vector<1x128x32xf32>
    %131 = vector.shape_cast %130 : vector<1x128x32xf32> to vector<128x32xf32>
    %cst_51 = arith.constant dense<0.000000e+00> : vector<16x32xf32>
    %132 = tpu.matmul %129, %131, %cst_51 {dimension_numbers = #tpu.dot_dimension_numbers<[1], [0], [0], [1], [0, 0, 1, 1], [], []>} : vector<16x128xf32>, vector<128x32xf32>, vector<16x32xf32> -> vector<16x32xf32>
    %c0_52 = arith.constant 0 : index
    %c0_53 = arith.constant 0 : index
    %c0_54 = arith.constant 0 : index
    %133 = vector.load %arg12[%c0_52, %c0_53, %c0_54] : memref<2x1x32xf32, #tpu.memory_space<vmem>>, vector<1x1x32xf32>
    %134 = vector.shape_cast %133 : vector<1x1x32xf32> to vector<1x32xf32>
    %135 = vector.broadcast %134 : vector<1x32xf32> to vector<16x32xf32>
    %136 = arith.addf %132, %135 : vector<16x32xf32>
    %137 = arith.addf %94, %136 : vector<16x32xf32>
    %c1 = arith.constant 1 : index
    %c0_55 = arith.constant 0 : index
    %c0_56 = arith.constant 0 : index
    %138 = vector.load %arg2[%c1, %c0_55, %c0_56] : memref<2x1x32xf32, #tpu.memory_space<vmem>>, vector<1x1x32xf32>
    %139 = vector.shape_cast %138 : vector<1x1x32xf32> to vector<1x32xf32>
    %c1_57 = arith.constant 1 : index
    %c0_58 = arith.constant 0 : index
    %c0_59 = arith.constant 0 : index
    %140 = vector.load %arg3[%c1_57, %c0_58, %c0_59] : memref<2x1x32xf32, #tpu.memory_space<vmem>>, vector<1x1x32xf32>
    %141 = vector.shape_cast %140 : vector<1x1x32xf32> to vector<1x32xf32>
    %cst_60 = arith.constant dense<0.000000e+00> : vector<16xf32>
    %142 = vector.multi_reduction <add>, %137, %cst_60 [1] : vector<16x32xf32> to vector<16xf32>
    %143 = vector.shape_cast %142 : vector<16xf32> to vector<16x1xf32>
    %cst_61 = arith.constant 3.200000e+01 : f32
    %144 = vector.broadcast %cst_61 : f32 to vector<16x1xf32>
    %145 = arith.divf %143, %144 : vector<16x1xf32>
    %146 = vector.broadcast %145 : vector<16x1xf32> to vector<16x32xf32>
    %147 = arith.subf %137, %146 : vector<16x32xf32>
    %148 = arith.mulf %147, %147 : vector<16x32xf32>
    %cst_62 = arith.constant dense<0.000000e+00> : vector<16xf32>
    %149 = vector.multi_reduction <add>, %148, %cst_62 [1] : vector<16x32xf32> to vector<16xf32>
    %150 = vector.shape_cast %149 : vector<16xf32> to vector<16x1xf32>
    %cst_63 = arith.constant 3.200000e+01 : f32
    %151 = vector.broadcast %cst_63 : f32 to vector<16x1xf32>
    %152 = arith.divf %150, %151 : vector<16x1xf32>
    %153 = vector.broadcast %145 : vector<16x1xf32> to vector<16x32xf32>
    %154 = arith.subf %137, %153 : vector<16x32xf32>
    %cst_64 = arith.constant 9.99999974E-6 : f32
    %155 = vector.broadcast %cst_64 : f32 to vector<16x1xf32>
    %156 = arith.addf %152, %155 : vector<16x1xf32>
    %157 = math.rsqrt %156 : vector<16x1xf32>
    %158 = vector.broadcast %157 : vector<16x1xf32> to vector<16x32xf32>
    %159 = arith.mulf %154, %158 : vector<16x32xf32>
    %160 = vector.broadcast %139 : vector<1x32xf32> to vector<16x32xf32>
    %161 = arith.mulf %159, %160 : vector<16x32xf32>
    %162 = vector.broadcast %141 : vector<1x32xf32> to vector<16x32xf32>
    %163 = arith.addf %161, %162 : vector<16x32xf32>
    %c1_65 = arith.constant 1 : index
    %c0_66 = arith.constant 0 : index
    %c0_67 = arith.constant 0 : index
    %164 = vector.load %arg4[%c1_65, %c0_66, %c0_67] : memref<2x32x96xf32, #tpu.memory_space<vmem>>, vector<1x32x96xf32>
    %165 = vector.shape_cast %164 : vector<1x32x96xf32> to vector<32x96xf32>
    %cst_68 = arith.constant dense<0.000000e+00> : vector<16x96xf32>
    %166 = tpu.matmul %163, %165, %cst_68 {dimension_numbers = #tpu.dot_dimension_numbers<[1], [0], [0], [1], [0, 0, 1, 1], [], []>} : vector<16x32xf32>, vector<32x96xf32>, vector<16x96xf32> -> vector<16x96xf32>
    %167 = vector.extract_strided_slice %166 {offsets = [0, 0], sizes = [16, 8], strides = [1, 1]} : vector<16x96xf32> to vector<16x8xf32>
    %168 = vector.shape_cast %167 : vector<16x8xf32> to vector<2x8x8xf32>
    %169 = vector.extract_strided_slice %166 {offsets = [0, 8], sizes = [16, 8], strides = [1, 1]} : vector<16x96xf32> to vector<16x8xf32>
    %170 = vector.shape_cast %169 : vector<16x8xf32> to vector<2x8x8xf32>
    %171 = vector.extract_strided_slice %166 {offsets = [0, 16], sizes = [16, 8], strides = [1, 1]} : vector<16x96xf32> to vector<16x8xf32>
    %172 = vector.shape_cast %171 : vector<16x8xf32> to vector<2x8x8xf32>
    %173 = vector.extract_strided_slice %166 {offsets = [0, 24], sizes = [16, 8], strides = [1, 1]} : vector<16x96xf32> to vector<16x8xf32>
    %174 = vector.shape_cast %173 : vector<16x8xf32> to vector<2x8x8xf32>
    %175 = tpu.concatenate %168, %170, %172, %174 in 0 : vector<2x8x8xf32>, vector<2x8x8xf32>, vector<2x8x8xf32>, vector<2x8x8xf32> -> vector<8x8x8xf32>
    %176 = vector.extract_strided_slice %166 {offsets = [0, 32], sizes = [16, 8], strides = [1, 1]} : vector<16x96xf32> to vector<16x8xf32>
    %177 = vector.shape_cast %176 : vector<16x8xf32> to vector<2x8x8xf32>
    %178 = vector.extract_strided_slice %166 {offsets = [0, 40], sizes = [16, 8], strides = [1, 1]} : vector<16x96xf32> to vector<16x8xf32>
    %179 = vector.shape_cast %178 : vector<16x8xf32> to vector<2x8x8xf32>
    %180 = vector.extract_strided_slice %166 {offsets = [0, 48], sizes = [16, 8], strides = [1, 1]} : vector<16x96xf32> to vector<16x8xf32>
    %181 = vector.shape_cast %180 : vector<16x8xf32> to vector<2x8x8xf32>
    %182 = vector.extract_strided_slice %166 {offsets = [0, 56], sizes = [16, 8], strides = [1, 1]} : vector<16x96xf32> to vector<16x8xf32>
    %183 = vector.shape_cast %182 : vector<16x8xf32> to vector<2x8x8xf32>
    %184 = tpu.concatenate %177, %179, %181, %183 in 0 : vector<2x8x8xf32>, vector<2x8x8xf32>, vector<2x8x8xf32>, vector<2x8x8xf32> -> vector<8x8x8xf32>
    %185 = vector.extract_strided_slice %166 {offsets = [0, 64], sizes = [16, 8], strides = [1, 1]} : vector<16x96xf32> to vector<16x8xf32>
    %186 = vector.shape_cast %185 : vector<16x8xf32> to vector<2x8x8xf32>
    %187 = vector.extract_strided_slice %166 {offsets = [0, 72], sizes = [16, 8], strides = [1, 1]} : vector<16x96xf32> to vector<16x8xf32>
    %188 = vector.shape_cast %187 : vector<16x8xf32> to vector<2x8x8xf32>
    %189 = vector.extract_strided_slice %166 {offsets = [0, 80], sizes = [16, 8], strides = [1, 1]} : vector<16x96xf32> to vector<16x8xf32>
    %190 = vector.shape_cast %189 : vector<16x8xf32> to vector<2x8x8xf32>
    %191 = vector.extract_strided_slice %166 {offsets = [0, 88], sizes = [16, 8], strides = [1, 1]} : vector<16x96xf32> to vector<16x8xf32>
    %192 = vector.shape_cast %191 : vector<16x8xf32> to vector<2x8x8xf32>
    %193 = tpu.concatenate %186, %188, %190, %192 in 0 : vector<2x8x8xf32>, vector<2x8x8xf32>, vector<2x8x8xf32>, vector<2x8x8xf32> -> vector<8x8x8xf32>
    "tpu.trace_start"() <{level = 10 : i32, message = "gqe,gke->gqk"}> : () -> ()
    %cst_69 = arith.constant dense<0.000000e+00> : vector<8x8x8xf32>
    %194 = tpu.matmul %175, %184, %cst_69 {dimension_numbers = #tpu.dot_dimension_numbers<[2], [2], [1], [1], [0, 0, 0, 1, 1, 1], [0], [0]>} : vector<8x8x8xf32>, vector<8x8x8xf32>, vector<8x8x8xf32> -> vector<8x8x8xf32>
    "tpu.trace_stop"() : () -> ()
    %195 = vector.shape_cast %7 : vector<8x8xf32> to vector<1x8x8xf32>
    %196 = vector.broadcast %195 : vector<1x8x8xf32> to vector<8x8x8xf32>
    %197 = arith.addf %194, %196 : vector<8x8x8xf32>
    %cst_70 = arith.constant dense<0xFF800000> : vector<8x8xf32>
    %198 = vector.multi_reduction <maximumf>, %197, %cst_70 [2] : vector<8x8x8xf32> to vector<8x8xf32>
    %199 = vector.shape_cast %198 : vector<8x8xf32> to vector<8x8x1xf32>
    %200 = vector.broadcast %199 : vector<8x8x1xf32> to vector<8x8x8xf32>
    %201 = arith.subf %197, %200 : vector<8x8x8xf32>
    %202 = math.exp %201 : vector<8x8x8xf32>
    %cst_71 = arith.constant dense<0.000000e+00> : vector<8x8xf32>
    %203 = vector.multi_reduction <add>, %202, %cst_71 [2] : vector<8x8x8xf32> to vector<8x8xf32>
    %204 = vector.shape_cast %203 : vector<8x8xf32> to vector<8x8x1xf32>
    %205 = vector.broadcast %204 : vector<8x8x1xf32> to vector<8x8x8xf32>
    %206 = arith.divf %202, %205 : vector<8x8x8xf32>
    "tpu.trace_start"() <{level = 10 : i32, message = "gqk,gke->gqe"}> : () -> ()
    %cst_72 = arith.constant dense<0.000000e+00> : vector<8x8x8xf32>
    %207 = tpu.matmul %206, %193, %cst_72 {dimension_numbers = #tpu.dot_dimension_numbers<[2], [1], [1], [2], [0, 0, 0, 1, 1, 2], [0], [0]>} : vector<8x8x8xf32>, vector<8x8x8xf32>, vector<8x8x8xf32> -> vector<8x8x8xf32>
    "tpu.trace_stop"() : () -> ()
    %208 = vector.extract_strided_slice %207 {offsets = [0, 0, 0], sizes = [2, 8, 8], strides = [1, 1, 1]} : vector<8x8x8xf32> to vector<2x8x8xf32>
    %209 = vector.shape_cast %208 : vector<2x8x8xf32> to vector<16x8xf32>
    %210 = vector.extract_strided_slice %207 {offsets = [2, 0, 0], sizes = [2, 8, 8], strides = [1, 1, 1]} : vector<8x8x8xf32> to vector<2x8x8xf32>
    %211 = vector.shape_cast %210 : vector<2x8x8xf32> to vector<16x8xf32>
    %212 = vector.extract_strided_slice %207 {offsets = [4, 0, 0], sizes = [2, 8, 8], strides = [1, 1, 1]} : vector<8x8x8xf32> to vector<2x8x8xf32>
    %213 = vector.shape_cast %212 : vector<2x8x8xf32> to vector<16x8xf32>
    %214 = vector.extract_strided_slice %207 {offsets = [6, 0, 0], sizes = [2, 8, 8], strides = [1, 1, 1]} : vector<8x8x8xf32> to vector<2x8x8xf32>
    %215 = vector.shape_cast %214 : vector<2x8x8xf32> to vector<16x8xf32>
    %216 = tpu.concatenate %209, %211, %213, %215 in 1 : vector<16x8xf32>, vector<16x8xf32>, vector<16x8xf32>, vector<16x8xf32> -> vector<16x32xf32>
    %c1_73 = arith.constant 1 : index
    %c0_74 = arith.constant 0 : index
    %c0_75 = arith.constant 0 : index
    %217 = vector.load %arg5[%c1_73, %c0_74, %c0_75] : memref<2x32x32xf32, #tpu.memory_space<vmem>>, vector<1x32x32xf32>
    %218 = vector.shape_cast %217 : vector<1x32x32xf32> to vector<32x32xf32>
    %cst_76 = arith.constant dense<0.000000e+00> : vector<16x32xf32>
    %219 = tpu.matmul %216, %218, %cst_76 {dimension_numbers = #tpu.dot_dimension_numbers<[1], [0], [0], [1], [0, 0, 1, 1], [], []>} : vector<16x32xf32>, vector<32x32xf32>, vector<16x32xf32> -> vector<16x32xf32>
    %c1_77 = arith.constant 1 : index
    %c0_78 = arith.constant 0 : index
    %c0_79 = arith.constant 0 : index
    %220 = vector.load %arg6[%c1_77, %c0_78, %c0_79] : memref<2x1x32xf32, #tpu.memory_space<vmem>>, vector<1x1x32xf32>
    %221 = vector.shape_cast %220 : vector<1x1x32xf32> to vector<1x32xf32>
    %222 = vector.broadcast %221 : vector<1x32xf32> to vector<16x32xf32>
    %223 = arith.addf %219, %222 : vector<16x32xf32>
    %224 = arith.addf %137, %223 : vector<16x32xf32>
    %c1_80 = arith.constant 1 : index
    %c0_81 = arith.constant 0 : index
    %c0_82 = arith.constant 0 : index
    %225 = vector.load %arg7[%c1_80, %c0_81, %c0_82] : memref<2x1x32xf32, #tpu.memory_space<vmem>>, vector<1x1x32xf32>
    %226 = vector.shape_cast %225 : vector<1x1x32xf32> to vector<1x32xf32>
    %c1_83 = arith.constant 1 : index
    %c0_84 = arith.constant 0 : index
    %c0_85 = arith.constant 0 : index
    %227 = vector.load %arg8[%c1_83, %c0_84, %c0_85] : memref<2x1x32xf32, #tpu.memory_space<vmem>>, vector<1x1x32xf32>
    %228 = vector.shape_cast %227 : vector<1x1x32xf32> to vector<1x32xf32>
    %cst_86 = arith.constant dense<0.000000e+00> : vector<16xf32>
    %229 = vector.multi_reduction <add>, %224, %cst_86 [1] : vector<16x32xf32> to vector<16xf32>
    %230 = vector.shape_cast %229 : vector<16xf32> to vector<16x1xf32>
    %cst_87 = arith.constant 3.200000e+01 : f32
    %231 = vector.broadcast %cst_87 : f32 to vector<16x1xf32>
    %232 = arith.divf %230, %231 : vector<16x1xf32>
    %233 = vector.broadcast %232 : vector<16x1xf32> to vector<16x32xf32>
    %234 = arith.subf %224, %233 : vector<16x32xf32>
    %235 = arith.mulf %234, %234 : vector<16x32xf32>
    %cst_88 = arith.constant dense<0.000000e+00> : vector<16xf32>
    %236 = vector.multi_reduction <add>, %235, %cst_88 [1] : vector<16x32xf32> to vector<16xf32>
    %237 = vector.shape_cast %236 : vector<16xf32> to vector<16x1xf32>
    %cst_89 = arith.constant 3.200000e+01 : f32
    %238 = vector.broadcast %cst_89 : f32 to vector<16x1xf32>
    %239 = arith.divf %237, %238 : vector<16x1xf32>
    %240 = vector.broadcast %232 : vector<16x1xf32> to vector<16x32xf32>
    %241 = arith.subf %224, %240 : vector<16x32xf32>
    %cst_90 = arith.constant 9.99999974E-6 : f32
    %242 = vector.broadcast %cst_90 : f32 to vector<16x1xf32>
    %243 = arith.addf %239, %242 : vector<16x1xf32>
    %244 = math.rsqrt %243 : vector<16x1xf32>
    %245 = vector.broadcast %244 : vector<16x1xf32> to vector<16x32xf32>
    %246 = arith.mulf %241, %245 : vector<16x32xf32>
    %247 = vector.broadcast %226 : vector<1x32xf32> to vector<16x32xf32>
    %248 = arith.mulf %246, %247 : vector<16x32xf32>
    %249 = vector.broadcast %228 : vector<1x32xf32> to vector<16x32xf32>
    %250 = arith.addf %248, %249 : vector<16x32xf32>
    %c1_91 = arith.constant 1 : index
    %c0_92 = arith.constant 0 : index
    %c0_93 = arith.constant 0 : index
    %251 = vector.load %arg9[%c1_91, %c0_92, %c0_93] : memref<2x32x128xf32, #tpu.memory_space<vmem>>, vector<1x32x128xf32>
    %252 = vector.shape_cast %251 : vector<1x32x128xf32> to vector<32x128xf32>
    %cst_94 = arith.constant dense<0.000000e+00> : vector<16x128xf32>
    %253 = tpu.matmul %250, %252, %cst_94 {dimension_numbers = #tpu.dot_dimension_numbers<[1], [0], [0], [1], [0, 0, 1, 1], [], []>} : vector<16x32xf32>, vector<32x128xf32>, vector<16x128xf32> -> vector<16x128xf32>
    %c1_95 = arith.constant 1 : index
    %c0_96 = arith.constant 0 : index
    %c0_97 = arith.constant 0 : index
    %254 = vector.load %arg10[%c1_95, %c0_96, %c0_97] : memref<2x1x128xf32, #tpu.memory_space<vmem>>, vector<1x1x128xf32>
    %255 = vector.shape_cast %254 : vector<1x1x128xf32> to vector<1x128xf32>
    %256 = vector.broadcast %255 : vector<1x128xf32> to vector<16x128xf32>
    %257 = arith.addf %253, %256 : vector<16x128xf32>
    %cst_98 = arith.constant 0.000000e+00 : f32
    %258 = vector.broadcast %cst_98 : f32 to vector<16x128xf32>
    %259 = arith.maximumf %257, %258 : vector<16x128xf32>
    %c1_99 = arith.constant 1 : index
    %c0_100 = arith.constant 0 : index
    %c0_101 = arith.constant 0 : index
    %260 = vector.load %arg11[%c1_99, %c0_100, %c0_101] : memref<2x128x32xf32, #tpu.memory_space<vmem>>, vector<1x128x32xf32>
    %261 = vector.shape_cast %260 : vector<1x128x32xf32> to vector<128x32xf32>
    %cst_102 = arith.constant dense<0.000000e+00> : vector<16x32xf32>
    %262 = tpu.matmul %259, %261, %cst_102 {dimension_numbers = #tpu.dot_dimension_numbers<[1], [0], [0], [1], [0, 0, 1, 1], [], []>} : vector<16x128xf32>, vector<128x32xf32>, vector<16x32xf32> -> vector<16x32xf32>
    %c1_103 = arith.constant 1 : index
    %c0_104 = arith.constant 0 : index
    %c0_105 = arith.constant 0 : index
    %263 = vector.load %arg12[%c1_103, %c0_104, %c0_105] : memref<2x1x32xf32, #tpu.memory_space<vmem>>, vector<1x1x32xf32>
    %264 = vector.shape_cast %263 : vector<1x1x32xf32> to vector<1x32xf32>
    %265 = vector.broadcast %264 : vector<1x32xf32> to vector<16x32xf32>
    %266 = arith.addf %262, %265 : vector<16x32xf32>
    %267 = arith.addf %224, %266 : vector<16x32xf32>
    %c0_106 = arith.constant 0 : index
    %c0_107 = arith.constant 0 : index
    %268 = vector.load %arg13[%c0_106, %c0_107] : memref<32x128xf32, #tpu.memory_space<vmem>>, vector<32x128xf32>
    %cst_108 = arith.constant dense<0.000000e+00> : vector<16x128xf32>
    %269 = tpu.matmul %267, %268, %cst_108 {dimension_numbers = #tpu.dot_dimension_numbers<[1], [0], [0], [1], [0, 0, 1, 1], [], []>} : vector<16x32xf32>, vector<32x128xf32>, vector<16x128xf32> -> vector<16x128xf32>
    %c0_109 = arith.constant 0 : index
    %c0_110 = arith.constant 0 : index
    %270 = vector.load %arg14[%c0_109, %c0_110] : memref<1x128xf32, #tpu.memory_space<vmem>>, vector<1x128xf32>
    %271 = vector.broadcast %270 : vector<1x128xf32> to vector<16x128xf32>
    %272 = arith.addf %269, %271 : vector<16x128xf32>
    %273 = vector.shape_cast %272 : vector<16x128xf32> to vector<2x8x128xf32>
    %c0_111 = arith.constant 0 : index
    %c0_112 = arith.constant 0 : index
    %c0_113 = arith.constant 0 : index
    %274 = vector.load %arg15[%c0_111, %c0_112, %c0_113] : memref<2x8x128xf32, #tpu.memory_space<vmem>>, vector<2x8x128xf32>
    tpu.vector_store %arg15[%c0_111, %c0_112, %c0_113], %273 {strides = array<i32>} : memref<2x8x128xf32, #tpu.memory_space<vmem>>, vector<2x8x128xf32>,
    return
  }
  func.func @transform_0(%arg0: i32) -> (i32, i32, i32) {
    %c0_i32 = arith.constant 0 : i32
    %c0_i32_0 = arith.constant 0 : i32
    %c0_i32_1 = arith.constant 0 : i32
    return %arg0, %c0_i32, %c0_i32_0 : i32, i32, i32
  }
  func.func @transform_1(%arg0: i32) -> (i32, i32, i32) {
    %c0_i32 = arith.constant 0 : i32
    %c0_i32_0 = arith.constant 0 : i32
    %c0_i32_1 = arith.constant 0 : i32
    %c0_i32_2 = arith.constant 0 : i32
    return %c0_i32, %c0_i32_0, %c0_i32_1 : i32, i32, i32
  }
  func.func @transform_2(%arg0: i32) -> (i32, i32, i32) {
    %c0_i32 = arith.constant 0 : i32
    %c0_i32_0 = arith.constant 0 : i32
    %c0_i32_1 = arith.constant 0 : i32
    %c0_i32_2 = arith.constant 0 : i32
    return %c0_i32, %c0_i32_0, %c0_i32_1 : i32, i32, i32
  }
  func.func @transform_3(%arg0: i32) -> (i32, i32, i32) {
    %c0_i32 = arith.constant 0 : i32
    %c0_i32_0 = arith.constant 0 : i32
    %c0_i32_1 = arith.constant 0 : i32
    %c0_i32_2 = arith.constant 0 : i32
    return %c0_i32, %c0_i32_0, %c0_i32_1 : i32, i32, i32
  }
  func.func @transform_4(%arg0: i32) -> (i32, i32, i32) {
    %c0_i32 = arith.constant 0 : i32
    %c0_i32_0 = arith.constant 0 : i32
    %c0_i32_1 = arith.constant 0 : i32
    %c0_i32_2 = arith.constant 0 : i32
    return %c0_i32, %c0_i32_0, %c0_i32_1 : i32, i32, i32
  }
  func.func @transform_5(%arg0: i32) -> (i32, i32, i32) {
    %c0_i32 = arith.constant 0 : i32
    %c0_i32_0 = arith.constant 0 : i32
    %c0_i32_1 = arith.constant 0 : i32
    %c0_i32_2 = arith.constant 0 : i32
    return %c0_i32, %c0_i32_0, %c0_i32_1 : i32, i32, i32
  }
  func.func @transform_6(%arg0: i32) -> (i32, i32, i32) {
    %c0_i32 = arith.constant 0 : i32
    %c0_i32_0 = arith.constant 0 : i32
    %c0_i32_1 = arith.constant 0 : i32
    %c0_i32_2 = arith.constant 0 : i32
    return %c0_i32, %c0_i32_0, %c0_i32_1 : i32, i32, i32
  }
  func.func @transform_7(%arg0: i32) -> (i32, i32, i32) {
    %c0_i32 = arith.constant 0 : i32
    %c0_i32_0 = arith.constant 0 : i32
    %c0_i32_1 = arith.constant 0 : i32
    %c0_i32_2 = arith.constant 0 : i32
    return %c0_i32, %c0_i32_0, %c0_i32_1 : i32, i32, i32
  }
  func.func @transform_8(%arg0: i32) -> (i32, i32, i32) {
    %c0_i32 = arith.constant 0 : i32
    %c0_i32_0 = arith.constant 0 : i32
    %c0_i32_1 = arith.constant 0 : i32
    %c0_i32_2 = arith.constant 0 : i32
    return %c0_i32, %c0_i32_0, %c0_i32_1 : i32, i32, i32
  }
  func.func @transform_9(%arg0: i32) -> (i32, i32, i32) {
    %c0_i32 = arith.constant 0 : i32
    %c0_i32_0 = arith.constant 0 : i32
    %c0_i32_1 = arith.constant 0 : i32
    %c0_i32_2 = arith.constant 0 : i32
    return %c0_i32, %c0_i32_0, %c0_i32_1 : i32, i32, i32
  }
  func.func @transform_10(%arg0: i32) -> (i32, i32, i32) {
    %c0_i32 = arith.constant 0 : i32
    %c0_i32_0 = arith.constant 0 : i32
    %c0_i32_1 = arith.constant 0 : i32
    %c0_i32_2 = arith.constant 0 : i32
    return %c0_i32, %c0_i32_0, %c0_i32_1 : i32, i32, i32
  }
  func.func @transform_11(%arg0: i32) -> (i32, i32, i32) {
    %c0_i32 = arith.constant 0 : i32
    %c0_i32_0 = arith.constant 0 : i32
    %c0_i32_1 = arith.constant 0 : i32
    %c0_i32_2 = arith.constant 0 : i32
    return %c0_i32, %c0_i32_0, %c0_i32_1 : i32, i32, i32
  }
  func.func @transform_12(%arg0: i32) -> (i32, i32) {
    %c0_i32 = arith.constant 0 : i32
    %c0_i32_0 = arith.constant 0 : i32
    %c0_i32_1 = arith.constant 0 : i32
    return %c0_i32, %c0_i32_0 : i32, i32
  }
  func.func @transform_13(%arg0: i32) -> (i32, i32) {
    %c0_i32 = arith.constant 0 : i32
    %c0_i32_0 = arith.constant 0 : i32
    %c0_i32_1 = arith.constant 0 : i32
    return %c0_i32, %c0_i32_0 : i32, i32
  }
  func.func @transform_14(%arg0: i32) -> (i32, i32, i32) {
    %c0_i32 = arith.constant 0 : i32
    %c0_i32_0 = arith.constant 0 : i32
    %c0_i32_1 = arith.constant 0 : i32
    return %arg0, %c0_i32, %c0_i32_0 : i32, i32, i32
  }
}

</mosaic_0001>

<llo_original>
// kernel: gpt_forward.1
$region0: #{gpt_forward.1}
  #allocation0 [shape = 'u32[]', space=smem, size = 0x4, offset = 0x4, fixed_abs, tag = 'smem constant byte address 0x4 - core index']
  #allocation1 [shape = 'u32[144,128]{1,0:T(1,128)}', space=vmem, size = 0x12000, scoped, tag = 'internal scratch']
  %s0 = inlined_call_operand.vmem [shape: f32[2,8,32], index: 0, kind: input, shape index: {}]
  %s1 = inlined_call_operand.vmem [shape: f32[2,1,32], index: 1, kind: input, shape index: {}]
  %s2 = inlined_call_operand.vmem [shape: f32[2,1,32], index: 2, kind: input, shape index: {}]
  %s3 = inlined_call_operand.vmem [shape: f32[2,32,96], index: 3, kind: input, shape index: {}]
  %s4 = inlined_call_operand.vmem [shape: f32[2,32,32], index: 4, kind: input, shape index: {}]
  %s5 = inlined_call_operand.vmem [shape: f32[2,1,32], index: 5, kind: input, shape index: {}]
  %s6 = inlined_call_operand.vmem [shape: f32[2,1,32], index: 6, kind: input, shape index: {}]
  %s7 = inlined_call_operand.vmem [shape: f32[2,1,32], index: 7, kind: input, shape index: {}]
  %s8 = inlined_call_operand.vmem [shape: f32[2,32,128], index: 8, kind: input, shape index: {}]
  %s9 = inlined_call_operand.vmem [shape: f32[2,1,128], index: 9, kind: input, shape index: {}]
  %s10 = inlined_call_operand.vmem [shape: f32[2,128,32], index: 10, kind: input, shape index: {}]
  %s11 = inlined_call_operand.vmem [shape: f32[2,1,32], index: 11, kind: input, shape index: {}]
  %s12 = inlined_call_operand.vmem [shape: f32[32,128], index: 12, kind: input, shape index: {}]
  %s13 = inlined_call_operand.vmem [shape: f32[1,128], index: 13, kind: input, shape index: {}]
  %s14 = inlined_call_operand.hbm [shape: f32[2,8,128], index: 14, kind: output, shape index: {}]
  %s15 = sld [smem:[#allocation0]]
  $region66: #{gpt_forward.1} parent=0
    _
  %s17 = ssub.s32 1, %s15
  %s18 = scalar_select 0, %s17, %s15
  $region1: #{gpt_forward.1} parent=0
    #allocation2 [shape = 'u8[8192]{0}', space=vmem, size = 0x2000, scoped, tag = 'output window, operand 0, single buffered']
    #allocation3 [shape = 's32[1]{0}', space=sflag, size = 0x4, scoped, tag = 'scoped memory for gpt_forward.1']
    %19 = vsyncpa [#allocation3], 0
    // Predicated region
    $region2: #{gpt_forward.1} parent=1 // pred_check
      _
    $region3: #{gpt_forward.1} parent=1 // pred_check_branch
      %21 = sbr.rel (0) target = $region5
    $region4: #{gpt_forward.1} parent=1 // pred_region
      _
    $region5: #{gpt_forward.1} parent=1 // pred_fallthru
      _
    // Predicated region
    $region6: #{gpt_forward.1} parent=1 // pred_check
      _
    $region7: #{gpt_forward.1} parent=1 // pred_check_branch
      %23 = sbr.rel (0) target = $region9
    $region8: #{gpt_forward.1} parent=1 // pred_region
      _
    $region9: #{gpt_forward.1} parent=1 // pred_fallthru
      _
    // Predicated region
    $region10: #{gpt_forward.1} parent=1 // pred_check
      _
    $region11: #{gpt_forward.1} parent=1 // pred_check_branch
      %25 = sbr.rel (0) target = $region13
    $region12: #{gpt_forward.1} parent=1 // pred_region
      _
    $region13: #{gpt_forward.1} parent=1 // pred_fallthru
      _
    // Predicated region
    $region14: #{gpt_forward.1} parent=1 // pred_check
      _
    $region15: #{gpt_forward.1} parent=1 // pred_check_branch
      %27 = sbr.rel (0) target = $region17
    $region16: #{gpt_forward.1} parent=1 // pred_region
      _
    $region17: #{gpt_forward.1} parent=1 // pred_fallthru
      _
    // Predicated region
    $region18: #{gpt_forward.1} parent=1 // pred_check
      _
    $region19: #{gpt_forward.1} parent=1 // pred_check_branch
      %29 = sbr.rel (0) target = $region21
    $region20: #{gpt_forward.1} parent=1 // pred_region
      _
    $region21: #{gpt_forward.1} parent=1 // pred_fallthru
      _
    // Predicated region
    $region22: #{gpt_forward.1} parent=1 // pred_check
      _
    $region23: #{gpt_forward.1} parent=1 // pred_check_branch
      %31 = sbr.rel (0) target = $region25
    $region24: #{gpt_forward.1} parent=1 // pred_region
      _
    $region25: #{gpt_forward.1} parent=1 // pred_fallthru
      _
    // Predicated region
    $region26: #{gpt_forward.1} parent=1 // pred_check
      _
    $region27: #{gpt_forward.1} parent=1 // pred_check_branch
      %33 = sbr.rel (0) target = $region29
    $region28: #{gpt_forward.1} parent=1 // pred_region
      _
    $region29: #{gpt_forward.1} parent=1 // pred_fallthru
      _
    // Predicated region
    $region30: #{gpt_forward.1} parent=1 // pred_check
      _
    $region31: #{gpt_forward.1} parent=1 // pred_check_branch
      %35 = sbr.rel (0) target = $region33
    $region32: #{gpt_forward.1} parent=1 // pred_region
      _
    $region33: #{gpt_forward.1} parent=1 // pred_fallthru
      _
    // Predicated region
    $region34: #{gpt_forward.1} parent=1 // pred_check
      _
    $region35: #{gpt_forward.1} parent=1 // pred_check_branch
      %37 = sbr.rel (0) target = $region37
    $region36: #{gpt_forward.1} parent=1 // pred_region
      _
    $region37: #{gpt_forward.1} parent=1 // pred_fallthru
      _
    // Predicated region
    $region38: #{gpt_forward.1} parent=1 // pred_check
      _
    $region39: #{gpt_forward.1} parent=1 // pred_check_branch
      %39 = sbr.rel (0) target = $region41
    $region40: #{gpt_forward.1} parent=1 // pred_region
      _
    $region41: #{gpt_forward.1} parent=1 // pred_fallthru
      _
    // Predicated region
    $region42: #{gpt_forward.1} parent=1 // pred_check
      _
    $region43: #{gpt_forward.1} parent=1 // pred_check_branch
      %41 = sbr.rel (0) target = $region45
    $region44: #{gpt_forward.1} parent=1 // pred_region
      _
    $region45: #{gpt_forward.1} parent=1 // pred_fallthru
      _
    // Predicated region
    $region46: #{gpt_forward.1} parent=1 // pred_check
      _
    $region47: #{gpt_forward.1} parent=1 // pred_check_branch
      %43 = sbr.rel (0) target = $region49
    $region48: #{gpt_forward.1} parent=1 // pred_region
      _
    $region49: #{gpt_forward.1} parent=1 // pred_fallthru
      _
    // Predicated region
    $region50: #{gpt_forward.1} parent=1 // pred_check
      _
    $region51: #{gpt_forward.1} parent=1 // pred_check_branch
      %45 = sbr.rel (0) target = $region53
    $region52: #{gpt_forward.1} parent=1 // pred_region
      _
    $region53: #{gpt_forward.1} parent=1 // pred_fallthru
      _
    // Predicated region
    $region54: #{gpt_forward.1} parent=1 // pred_check
      _
    $region55: #{gpt_forward.1} parent=1 // pred_check_branch
      %47 = sbr.rel (0) target = $region57
    $region56: #{gpt_forward.1} parent=1 // pred_region
      _
    $region57: #{gpt_forward.1} parent=1 // pred_fallthru
      _
    %v48 = vld [vmem:[%s0] sm:$0xff]
    %v49 = vld [vmem:[%s0 + $0x8] sm:$0xff]
    %v50 = vlaneseq
    %v51 = vshrl.u32 %v50, 7
    %v52 = vlaneseq
    %v53 = vand.u32 %v52, 127
    %vm54 = vcmp.ge.s32.totalorder %v51, %v53
    %v55 = vsel %vm54, 0.0, -1e+30
    %v56 = vld [vmem:[%s1] sm:$0x1]
    %v57 = vld [vmem:[%s2] sm:$0x1]
    %vm58 = vcmask 261120
    %v59 = vsel %vm58, %v48, 0.0
    %60 = vadd.xlane.f32.xlu0 %v59
    %v61 = vpop.xlane.xlu0 %60
    %v62 = vsel %vm58, %v49, 0.0
    %63 = vadd.xlane.f32.xlu0 %v62
    %v64 = vpop.xlane.xlu0 %63
    %v65 = vrcp.pop 32.0
    %v66 = vmul.f32 %v61, %v65
    %v67 = vmul.f32 %v64, %v65
    %v68 = vsub.f32 %v48, %v66
    %v69 = vsub.f32 %v49, %v67
    %v70 = vmul.f32 %v68, %v68
    %v71 = vmul.f32 %v69, %v69
    %v72 = vsel %vm58, %v70, 0.0
    %73 = vadd.xlane.f32.xlu0 %v72
    %v74 = vpop.xlane.xlu0 %73
    %v75 = vsel %vm58, %v71, 0.0
    %76 = vadd.xlane.f32.xlu0 %v75
    %v77 = vpop.xlane.xlu0 %76
    %v78 = vmul.f32 %v74, %v65
    %v79 = vmul.f32 %v77, %v65
    %v80 = vadd.f32 %v78, 1e-05
    %v81 = vadd.f32 %v79, 1e-05
    %v82 = vrsqrt.pop %v80
    %v83 = vrsqrt.pop %v81
    %v84 = vmul.f32 %v68, %v82
    %v85 = vmul.f32 %v69, %v83
    %v87 = vlaneseq
    %v88 = vshrl.u32 %v87, 7
    %v89 = vsub.s32 0, %v88
    %v90 = vrot.slane %v56, %v89
    %v92 = vmul.f32 %v84, %v90
    %v93 = vmul.f32 %v85, %v90
    %v95 = vlaneseq
    %v96 = vshrl.u32 %v95, 7
    %v97 = vsub.s32 0, %v96
    %v98 = vrot.slane %v57, %v97
    %v100 = vadd.f32 %v92, %v98
    %v101 = vadd.f32 %v93, %v98
    %v102 = vld [vmem:[%s3] sm:$0xff]
    %v103 = vld [vmem:[%s3 + $0x8] sm:$0xff]
    %v104 = vld [vmem:[%s3 + $0x10] sm:$0xff]
    %v105 = vld [vmem:[%s3 + $0x18] sm:$0xff]
    %v107 = vsel %vm58, %v100, 0
    %v110 = vsel %vm58, %v101, 0
    %112 = vmatprep.subr.mxu0 0.0
    %113 = vmatpush1.msra.mxu0 %v102
    %114 = vmatprep.subr.mxu0 0.0
    %115 = vmatpush1.msra.mxu0 %v103
    %116 = vmatprep.subr.mxu0 0.0
    %117 = vmatpush1.msra.mxu0 %v104
    %118 = vmatprep.subr.mxu0 0.0
    %119 = vmatpush1.msra.mxu0 %v105
    %120 = vmatprep.subr.mxu0 0.0
    %121 = vmatpush1.msra.mxu0 0.0
    %122 = vmatprep.subr.mxu0 0.0
    %123 = vmatpush1.msra.mxu0 0.0
    %124 = vmatprep.subr.mxu0 0.0
    %125 = vmatpush1.msra.mxu0 0.0
    %126 = vmatprep.subr.mxu0 0.0
    %127 = vmatpush1.msra.mxu0 0.0
    %128 = vmatprep.subr.mxu0 0.0
    %129 = vmatpush1.msra.mxu0 0.0
    %130 = vmatprep.subr.mxu0 0.0
    %131 = vmatpush1.msra.mxu0 0.0
    %132 = vmatprep.subr.mxu0 0.0
    %133 = vmatpush1.msra.mxu0 0.0
    %134 = vmatprep.subr.mxu0 0.0
    %135 = vmatpush1.msra.mxu0 0.0
    %136 = vmatprep.subr.mxu0 0.0
    %137 = vmatpush1.msra.mxu0 0.0
    %138 = vmatprep.subr.mxu0 0.0
    %139 = vmatpush1.msra.mxu0 0.0
    %140 = vmatprep.subr.mxu0 0.0
    %141 = vmatpush1.msra.mxu0 0.0
    %142 = vmatprep.subr.mxu0 0.0
    %143 = vmatpush1.msra.mxu0 0.0
    %144 = vmatprep.subr.mxu0 0.0
    %145 = vmatpush1.msra.mxu0 0.0
    %146 = vmatprep.subr.mxu0 0.0
    %147 = vmatpush1.msra.mxu0 0.0
    %148 = vmatprep.subr.mxu0 0.0
    %149 = vmatpush1.msra.mxu0 0.0
    %150 = vmatprep.subr.mxu0 0.0
    %151 = vmatpush1.msra.mxu0 0.0
    %152 = vmatprep.subr.mxu0 0.0
    %153 = vmatpush1.msra.mxu0 0.0
    %154 = vmatprep.subr.mxu0 0.0
    %155 = vmatpush1.msra.mxu0 0.0
    %156 = vmatprep.subr.mxu0 0.0
    %157 = vmatpush1.msra.mxu0 0.0
    %158 = vmatprep.subr.mxu0 0.0
    %159 = vmatpush1.msra.mxu0 0.0
    %160 = vmatprep.subr.mxu0 0.0
    %161 = vmatpush1.msra.mxu0 0.0
    %162 = vmatprep.subr.mxu0 0.0
    %163 = vmatpush1.msra.mxu0 0.0
    %164 = vmatprep.subr.mxu0 0.0
    %165 = vmatpush1.msra.mxu0 0.0
    %166 = vmatprep.subr.mxu0 0.0
    %167 = vmatpush1.msra.mxu0 0.0
    %168 = vmatprep.subr.mxu0 0.0
    %169 = vmatpush1.msra.mxu0 0.0
    %170 = vmatprep.subr.mxu0 0.0
    %171 = vmatpush1.msra.mxu0 0.0
    %172 = vmatprep.subr.mxu0 0.0
    %173 = vmatpush1.msra.mxu0 0.0
    %174 = vmatprep.subr.mxu0 0.0
    %175 = vmatpush1.msra.mxu0 0.0
    %176 = vmatprep.mubr.f32.mxu0 0.0
    %177 = vmatmul.mubr.f32.gmra.mrb[0].mxu0 %v107
    %v178 = vpop.f32.mrb[0].mxu0
    %v179 = vadd.f32 0.0, %v178
    %v180 = vpop.f32.mrb[0].mxu0
    %181 = vmatprep.mubr.f32.mxu0 0.0
    %182 = vmatmul.mubr.f32.gmra.mrb[0].mxu0 %v110
    %v183 = vpop.f32.mrb[0].mxu0
    %v184 = vadd.f32 0.0, %v183
    %v185 = vpop.f32.mrb[0].mxu0
    %186 = vdwg.mxu0
    %189 = vrot.lane.b32.xlu0 %v179, 120
    %v190 = vpop.permute.xlu0 %189
    %191 = vrot.lane.b32.xlu0 %v184, 120
    %v192 = vpop.permute.xlu0 %191
    %193 = vrot.lane.b32.xlu0 %v179, 112
    %v194 = vpop.permute.xlu0 %193
    %195 = vrot.lane.b32.xlu0 %v184, 112
    %v196 = vpop.permute.xlu0 %195
    %197 = vrot.lane.b32.xlu0 %v179, 104
    %v198 = vpop.permute.xlu0 %197
    %199 = vrot.lane.b32.xlu0 %v184, 104
    %v200 = vpop.permute.xlu0 %199
    %201 = vrot.lane.b32.xlu0 %v179, 96
    %v202 = vpop.permute.xlu0 %201
    %vm203 = vcmask 64512
    %v204 = vsel %vm203, %v179, 0
    %v206 = vsel %vm203, %v202, 0
    %208 = vmatprep.subr.mxu0 0.0
    %209 = vmatpush1.xpose.msra.mxu0 %v206
    %210 = vmatprep.subr.mxu0 0.0
    %211 = vmatpush1.xpose.msra.mxu0 0.0
    %212 = vmatprep.subr.mxu0 0.0
    %213 = vmatpush1.xpose.msra.mxu0 0.0
    %214 = vmatprep.subr.mxu0 0.0
    %215 = vmatpush1.xpose.msra.mxu0 0.0
    %216 = vmatprep.subr.mxu0 0.0
    %217 = vmatpush1.xpose.msra.mxu0 0.0
    %218 = vmatprep.subr.mxu0 0.0
    %219 = vmatpush1.xpose.msra.mxu0 0.0
    %220 = vmatprep.subr.mxu0 0.0
    %221 = vmatpush1.xpose.msra.mxu0 0.0
    %222 = vmatprep.subr.mxu0 0.0
    %223 = vmatpush1.xpose.msra.mxu0 0.0
    %224 = vmatprep.subr.mxu0 0.0
    %225 = vmatpush1.xpose.msra.mxu0 0.0
    %226 = vmatprep.subr.mxu0 0.0
    %227 = vmatpush1.xpose.msra.mxu0 0.0
    %228 = vmatprep.subr.mxu0 0.0
    %229 = vmatpush1.xpose.msra.mxu0 0.0
    %230 = vmatprep.subr.mxu0 0.0
    %231 = vmatpush1.xpose.msra.mxu0 0.0
    %232 = vmatprep.subr.mxu0 0.0
    %233 = vmatpush1.xpose.msra.mxu0 0.0
    %234 = vmatprep.subr.mxu0 0.0
    %235 = vmatpush1.xpose.msra.mxu0 0.0
    %236 = vmatprep.subr.mxu0 0.0
    %237 = vmatpush1.xpose.msra.mxu0 0.0
    %238 = vmatprep.subr.mxu0 0.0
    %239 = vmatpush1.xpose.msra.mxu0 0.0
    %240 = vmatprep.subr.mxu0 0.0
    %241 = vmatpush1.xpose.msra.mxu0 0.0
    %242 = vmatprep.subr.mxu0 0.0
    %243 = vmatpush1.xpose.msra.mxu0 0.0
    %244 = vmatprep.subr.mxu0 0.0
    %245 = vmatpush1.xpose.msra.mxu0 0.0
    %246 = vmatprep.subr.mxu0 0.0
    %247 = vmatpush1.xpose.msra.mxu0 0.0
    %248 = vmatprep.subr.mxu0 0.0
    %249 = vmatpush1.xpose.msra.mxu0 0.0
    %250 = vmatprep.subr.mxu0 0.0
    %251 = vmatpush1.xpose.msra.mxu0 0.0
    %252 = vmatprep.subr.mxu0 0.0
    %253 = vmatpush1.xpose.msra.mxu0 0.0
    %254 = vmatprep.subr.mxu0 0.0
    %255 = vmatpush1.xpose.msra.mxu0 0.0
    %256 = vmatprep.subr.mxu0 0.0
    %257 = vmatpush1.xpose.msra.mxu0 0.0
    %258 = vmatprep.subr.mxu0 0.0
    %259 = vmatpush1.xpose.msra.mxu0 0.0
    %260 = vmatprep.subr.mxu0 0.0
    %261 = vmatpush1.xpose.msra.mxu0 0.0
    %262 = vmatprep.subr.mxu0 0.0
    %263 = vmatpush1.xpose.msra.mxu0 0.0
    %264 = vmatprep.subr.mxu0 0.0
    %265 = vmatpush1.xpose.msra.mxu0 0.0
    %266 = vmatprep.subr.mxu0 0.0
    %267 = vmatpush1.xpose.msra.mxu0 0.0
    %268 = vmatprep.subr.mxu0 0.0
    %269 = vmatpush1.xpose.msra.mxu0 0.0
    %270 = vmatprep.subr.mxu0 0.0
    %271 = vmatpush1.xpose.msra.mxu0 0.0
    %272 = vmatprep.mubr.f32.mxu0 0.0
    %273 = vmatmul.mubr.f32.gmra.mrb[0].mxu0 %v204
    %v274 = vpop.f32.mrb[0].mxu0
    %v275 = vadd.f32 %v55, %v274
    %v276 = vpop.f32.mrb[0].mxu0
    %277 = vdwg.mxu0
    %278 = vrot.lane.b32.xlu0 %v184, 96
    %v279 = vpop.permute.xlu0 %278
    %v280 = vsel %vm203, %v184, 0
    %v282 = vsel %vm203, %v279, 0
    %284 = vmatprep.subr.mxu0 0.0
    %285 = vmatpush1.xpose.msra.mxu0 %v282
    %286 = vmatprep.subr.mxu0 0.0
    %287 = vmatpush1.xpose.msra.mxu0 0.0
    %288 = vmatprep.subr.mxu0 0.0
    %289 = vmatpush1.xpose.msra.mxu0 0.0
    %290 = vmatprep.subr.mxu0 0.0
    %291 = vmatpush1.xpose.msra.mxu0 0.0
    %292 = vmatprep.subr.mxu0 0.0
    %293 = vmatpush1.xpose.msra.mxu0 0.0
    %294 = vmatprep.subr.mxu0 0.0
    %295 = vmatpush1.xpose.msra.mxu0 0.0
    %296 = vmatprep.subr.mxu0 0.0
    %297 = vmatpush1.xpose.msra.mxu0 0.0
    %298 = vmatprep.subr.mxu0 0.0
    %299 = vmatpush1.xpose.msra.mxu0 0.0
    %300 = vmatprep.subr.mxu0 0.0
    %301 = vmatpush1.xpose.msra.mxu0 0.0
    %302 = vmatprep.subr.mxu0 0.0
    %303 = vmatpush1.xpose.msra.mxu0 0.0
    %304 = vmatprep.subr.mxu0 0.0
    %305 = vmatpush1.xpose.msra.mxu0 0.0
    %306 = vmatprep.subr.mxu0 0.0
    %307 = vmatpush1.xpose.msra.mxu0 0.0
    %308 = vmatprep.subr.mxu0 0.0
    %309 = vmatpush1.xpose.msra.mxu0 0.0
    %310 = vmatprep.subr.mxu0 0.0
    %311 = vmatpush1.xpose.msra.mxu0 0.0
    %312 = vmatprep.subr.mxu0 0.0
    %313 = vmatpush1.xpose.msra.mxu0 0.0
    %314 = vmatprep.subr.mxu0 0.0
    %315 = vmatpush1.xpose.msra.mxu0 0.0
    %316 = vmatprep.subr.mxu0 0.0
    %317 = vmatpush1.xpose.msra.mxu0 0.0
    %318 = vmatprep.subr.mxu0 0.0
    %319 = vmatpush1.xpose.msra.mxu0 0.0
    %320 = vmatprep.subr.mxu0 0.0
    %321 = vmatpush1.xpose.msra.mxu0 0.0
    %322 = vmatprep.subr.mxu0 0.0
    %323 = vmatpush1.xpose.msra.mxu0 0.0
    %324 = vmatprep.subr.mxu0 0.0
    %325 = vmatpush1.xpose.msra.mxu0 0.0
    %326 = vmatprep.subr.mxu0 0.0
    %327 = vmatpush1.xpose.msra.mxu0 0.0
    %328 = vmatprep.subr.mxu0 0.0
    %329 = vmatpush1.xpose.msra.mxu0 0.0
    %330 = vmatprep.subr.mxu0 0.0
    %331 = vmatpush1.xpose.msra.mxu0 0.0
    %332 = vmatprep.subr.mxu0 0.0
    %333 = vmatpush1.xpose.msra.mxu0 0.0
    %334 = vmatprep.subr.mxu0 0.0
    %335 = vmatpush1.xpose.msra.mxu0 0.0
    %336 = vmatprep.subr.mxu0 0.0
    %337 = vmatpush1.xpose.msra.mxu0 0.0
    %338 = vmatprep.subr.mxu0 0.0
    %339 = vmatpush1.xpose.msra.mxu0 0.0
    %340 = vmatprep.subr.mxu0 0.0
    %341 = vmatpush1.xpose.msra.mxu0 0.0
    %342 = vmatprep.subr.mxu0 0.0
    %343 = vmatpush1.xpose.msra.mxu0 0.0
    %344 = vmatprep.subr.mxu0 0.0
    %345 = vmatpush1.xpose.msra.mxu0 0.0
    %346 = vmatprep.subr.mxu0 0.0
    %347 = vmatpush1.xpose.msra.mxu0 0.0
    %348 = vmatprep.mubr.f32.mxu0 0.0
    %349 = vmatmul.mubr.f32.gmra.mrb[0].mxu0 %v280
    %v350 = vpop.f32.mrb[0].mxu0
    %v351 = vadd.f32 %v55, %v350
    %v352 = vpop.f32.mrb[0].mxu0
    %353 = vdwg.mxu0
    %354 = vrot.lane.b32.xlu0 %v190, 96
    %v355 = vpop.permute.xlu0 %354
    %v356 = vsel %vm203, %v190, 0
    %v358 = vsel %vm203, %v355, 0
    %360 = vmatprep.subr.mxu0 0.0
    %361 = vmatpush1.xpose.msra.mxu0 %v358
    %362 = vmatprep.subr.mxu0 0.0
    %363 = vmatpush1.xpose.msra.mxu0 0.0
    %364 = vmatprep.subr.mxu0 0.0
    %365 = vmatpush1.xpose.msra.mxu0 0.0
    %366 = vmatprep.subr.mxu0 0.0
    %367 = vmatpush1.xpose.msra.mxu0 0.0
    %368 = vmatprep.subr.mxu0 0.0
    %369 = vmatpush1.xpose.msra.mxu0 0.0
    %370 = vmatprep.subr.mxu0 0.0
    %371 = vmatpush1.xpose.msra.mxu0 0.0
    %372 = vmatprep.subr.mxu0 0.0
    %373 = vmatpush1.xpose.msra.mxu0 0.0
    %374 = vmatprep.subr.mxu0 0.0
    %375 = vmatpush1.xpose.msra.mxu0 0.0
    %376 = vmatprep.subr.mxu0 0.0
    %377 = vmatpush1.xpose.msra.mxu0 0.0
    %378 = vmatprep.subr.mxu0 0.0
    %379 = vmatpush1.xpose.msra.mxu0 0.0
    %380 = vmatprep.subr.mxu0 0.0
    %381 = vmatpush1.xpose.msra.mxu0 0.0
    %382 = vmatprep.subr.mxu0 0.0
    %383 = vmatpush1.xpose.msra.mxu0 0.0
    %384 = vmatprep.subr.mxu0 0.0
    %385 = vmatpush1.xpose.msra.mxu0 0.0
    %386 = vmatprep.subr.mxu0 0.0
    %387 = vmatpush1.xpose.msra.mxu0 0.0
    %388 = vmatprep.subr.mxu0 0.0
    %389 = vmatpush1.xpose.msra.mxu0 0.0
    %390 = vmatprep.subr.mxu0 0.0
    %391 = vmatpush1.xpose.msra.mxu0 0.0
    %392 = vmatprep.subr.mxu0 0.0
    %393 = vmatpush1.xpose.msra.mxu0 0.0
    %394 = vmatprep.subr.mxu0 0.0
    %395 = vmatpush1.xpose.msra.mxu0 0.0
    %396 = vmatprep.subr.mxu0 0.0
    %397 = vmatpush1.xpose.msra.mxu0 0.0
    %398 = vmatprep.subr.mxu0 0.0
    %399 = vmatpush1.xpose.msra.mxu0 0.0
    %400 = vmatprep.subr.mxu0 0.0
    %401 = vmatpush1.xpose.msra.mxu0 0.0
    %402 = vmatprep.subr.mxu0 0.0
    %403 = vmatpush1.xpose.msra.mxu0 0.0
    %404 = vmatprep.subr.mxu0 0.0
    %405 = vmatpush1.xpose.msra.mxu0 0.0
    %406 = vmatprep.subr.mxu0 0.0
    %407 = vmatpush1.xpose.msra.mxu0 0.0
    %408 = vmatprep.subr.mxu0 0.0
    %409 = vmatpush1.xpose.msra.mxu0 0.0
    %410 = vmatprep.subr.mxu0 0.0
    %411 = vmatpush1.xpose.msra.mxu0 0.0
    %412 = vmatprep.subr.mxu0 0.0
    %413 = vmatpush1.xpose.msra.mxu0 0.0
    %414 = vmatprep.subr.mxu0 0.0
    %415 = vmatpush1.xpose.msra.mxu0 0.0
    %416 = vmatprep.subr.mxu0 0.0
    %417 = vmatpush1.xpose.msra.mxu0 0.0
    %418 = vmatprep.subr.mxu0 0.0
    %419 = vmatpush1.xpose.msra.mxu0 0.0
    %420 = vmatprep.subr.mxu0 0.0
    %421 = vmatpush1.xpose.msra.mxu0 0.0
    %422 = vmatprep.subr.mxu0 0.0
    %423 = vmatpush1.xpose.msra.mxu0 0.0
    %424 = vmatprep.mubr.f32.mxu0 0.0
    %425 = vmatmul.mubr.f32.gmra.mrb[0].mxu0 %v356
    %v426 = vpop.f32.mrb[0].mxu0
    %v427 = vadd.f32 %v55, %v426
    %v428 = vpop.f32.mrb[0].mxu0
    %429 = vdwg.mxu0
    %430 = vrot.lane.b32.xlu0 %v192, 96
    %v431 = vpop.permute.xlu0 %430
    %v432 = vsel %vm203, %v192, 0
    %v434 = vsel %vm203, %v431, 0
    %436 = vmatprep.subr.mxu0 0.0
    %437 = vmatpush1.xpose.msra.mxu0 %v434
    %438 = vmatprep.subr.mxu0 0.0
    %439 = vmatpush1.xpose.msra.mxu0 0.0
    %440 = vmatprep.subr.mxu0 0.0
    %441 = vmatpush1.xpose.msra.mxu0 0.0
    %442 = vmatprep.subr.mxu0 0.0
    %443 = vmatpush1.xpose.msra.mxu0 0.0
    %444 = vmatprep.subr.mxu0 0.0
    %445 = vmatpush1.xpose.msra.mxu0 0.0
    %446 = vmatprep.subr.mxu0 0.0
    %447 = vmatpush1.xpose.msra.mxu0 0.0
    %448 = vmatprep.subr.mxu0 0.0
    %449 = vmatpush1.xpose.msra.mxu0 0.0
    %450 = vmatprep.subr.mxu0 0.0
    %451 = vmatpush1.xpose.msra.mxu0 0.0
    %452 = vmatprep.subr.mxu0 0.0
    %453 = vmatpush1.xpose.msra.mxu0 0.0
    %454 = vmatprep.subr.mxu0 0.0
    %455 = vmatpush1.xpose.msra.mxu0 0.0
    %456 = vmatprep.subr.mxu0 0.0
    %457 = vmatpush1.xpose.msra.mxu0 0.0
    %458 = vmatprep.subr.mxu0 0.0
    %459 = vmatpush1.xpose.msra.mxu0 0.0
    %460 = vmatprep.subr.mxu0 0.0
    %461 = vmatpush1.xpose.msra.mxu0 0.0
    %462 = vmatprep.subr.mxu0 0.0
    %463 = vmatpush1.xpose.msra.mxu0 0.0
    %464 = vmatprep.subr.mxu0 0.0
    %465 = vmatpush1.xpose.msra.mxu0 0.0
    %466 = vmatprep.subr.mxu0 0.0
    %467 = vmatpush1.xpose.msra.mxu0 0.0
    %468 = vmatprep.subr.mxu0 0.0
    %469 = vmatpush1.xpose.msra.mxu0 0.0
    %470 = vmatprep.subr.mxu0 0.0
    %471 = vmatpush1.xpose.msra.mxu0 0.0
    %472 = vmatprep.subr.mxu0 0.0
    %473 = vmatpush1.xpose.msra.mxu0 0.0
    %474 = vmatprep.subr.mxu0 0.0
    %475 = vmatpush1.xpose.msra.mxu0 0.0
    %476 = vmatprep.subr.mxu0 0.0
    %477 = vmatpush1.xpose.msra.mxu0 0.0
    %478 = vmatprep.subr.mxu0 0.0
    %479 = vmatpush1.xpose.msra.mxu0 0.0
    %480 = vmatprep.subr.mxu0 0.0
    %481 = vmatpush1.xpose.msra.mxu0 0.0
    %482 = vmatprep.subr.mxu0 0.0
    %483 = vmatpush1.xpose.msra.mxu0 0.0
    %484 = vmatprep.subr.mxu0 0.0
    %485 = vmatpush1.xpose.msra.mxu0 0.0
    %486 = vmatprep.subr.mxu0 0.0
    %487 = vmatpush1.xpose.msra.mxu0 0.0
    %488 = vmatprep.subr.mxu0 0.0
    %489 = vmatpush1.xpose.msra.mxu0 0.0
    %490 = vmatprep.subr.mxu0 0.0
    %491 = vmatpush1.xpose.msra.mxu0 0.0
    %492 = vmatprep.subr.mxu0 0.0
    %493 = vmatpush1.xpose.msra.mxu0 0.0
    %494 = vmatprep.subr.mxu0 0.0
    %495 = vmatpush1.xpose.msra.mxu0 0.0
    %496 = vmatprep.subr.mxu0 0.0
    %497 = vmatpush1.xpose.msra.mxu0 0.0
    %498 = vmatprep.subr.mxu0 0.0
    %499 = vmatpush1.xpose.msra.mxu0 0.0
    %500 = vmatprep.mubr.f32.mxu0 0.0
    %501 = vmatmul.mubr.f32.gmra.mrb[0].mxu0 %v432
    %v502 = vpop.f32.mrb[0].mxu0
    %v503 = vadd.f32 %v55, %v502
    %v504 = vpop.f32.mrb[0].mxu0
    %505 = vdwg.mxu0
    %506 = vrot.lane.b32.xlu0 %v194, 96
    %v507 = vpop.permute.xlu0 %506
    %v508 = vsel %vm203, %v194, 0
    %v510 = vsel %vm203, %v507, 0
    %512 = vmatprep.subr.mxu0 0.0
    %513 = vmatpush1.xpose.msra.mxu0 %v510
    %514 = vmatprep.subr.mxu0 0.0
    %515 = vmatpush1.xpose.msra.mxu0 0.0
    %516 = vmatprep.subr.mxu0 0.0
    %517 = vmatpush1.xpose.msra.mxu0 0.0
    %518 = vmatprep.subr.mxu0 0.0
    %519 = vmatpush1.xpose.msra.mxu0 0.0
    %520 = vmatprep.subr.mxu0 0.0
    %521 = vmatpush1.xpose.msra.mxu0 0.0
    %522 = vmatprep.subr.mxu0 0.0
    %523 = vmatpush1.xpose.msra.mxu0 0.0
    %524 = vmatprep.subr.mxu0 0.0
    %525 = vmatpush1.xpose.msra.mxu0 0.0
    %526 = vmatprep.subr.mxu0 0.0
    %527 = vmatpush1.xpose.msra.mxu0 0.0
    %528 = vmatprep.subr.mxu0 0.0
    %529 = vmatpush1.xpose.msra.mxu0 0.0
    %530 = vmatprep.subr.mxu0 0.0
    %531 = vmatpush1.xpose.msra.mxu0 0.0
    %532 = vmatprep.subr.mxu0 0.0
    %533 = vmatpush1.xpose.msra.mxu0 0.0
    %534 = vmatprep.subr.mxu0 0.0
    %535 = vmatpush1.xpose.msra.mxu0 0.0
    %536 = vmatprep.subr.mxu0 0.0
    %537 = vmatpush1.xpose.msra.mxu0 0.0
    %538 = vmatprep.subr.mxu0 0.0
    %539 = vmatpush1.xpose.msra.mxu0 0.0
    %540 = vmatprep.subr.mxu0 0.0
    %541 = vmatpush1.xpose.msra.mxu0 0.0
    %542 = vmatprep.subr.mxu0 0.0
    %543 = vmatpush1.xpose.msra.mxu0 0.0
    %544 = vmatprep.subr.mxu0 0.0
    %545 = vmatpush1.xpose.msra.mxu0 0.0
    %546 = vmatprep.subr.mxu0 0.0
    %547 = vmatpush1.xpose.msra.mxu0 0.0
    %548 = vmatprep.subr.mxu0 0.0
    %549 = vmatpush1.xpose.msra.mxu0 0.0
    %550 = vmatprep.subr.mxu0 0.0
    %551 = vmatpush1.xpose.msra.mxu0 0.0
    %552 = vmatprep.subr.mxu0 0.0
    %553 = vmatpush1.xpose.msra.mxu0 0.0
    %554 = vmatprep.subr.mxu0 0.0
    %555 = vmatpush1.xpose.msra.mxu0 0.0
    %556 = vmatprep.subr.mxu0 0.0
    %557 = vmatpush1.xpose.msra.mxu0 0.0
    %558 = vmatprep.subr.mxu0 0.0
    %559 = vmatpush1.xpose.msra.mxu0 0.0
    %560 = vmatprep.subr.mxu0 0.0
    %561 = vmatpush1.xpose.msra.mxu0 0.0
    %562 = vmatprep.subr.mxu0 0.0
    %563 = vmatpush1.xpose.msra.mxu0 0.0
    %564 = vmatprep.subr.mxu0 0.0
    %565 = vmatpush1.xpose.msra.mxu0 0.0
    %566 = vmatprep.subr.mxu0 0.0
    %567 = vmatpush1.xpose.msra.mxu0 0.0
    %568 = vmatprep.subr.mxu0 0.0
    %569 = vmatpush1.xpose.msra.mxu0 0.0
    %570 = vmatprep.subr.mxu0 0.0
    %571 = vmatpush1.xpose.msra.mxu0 0.0
    %572 = vmatprep.subr.mxu0 0.0
    %573 = vmatpush1.xpose.msra.mxu0 0.0
    %574 = vmatprep.subr.mxu0 0.0
    %575 = vmatpush1.xpose.msra.mxu0 0.0
    %576 = vmatprep.mubr.f32.mxu0 0.0
    %577 = vmatmul.mubr.f32.gmra.mrb[0].mxu0 %v508
    %v578 = vpop.f32.mrb[0].mxu0
    %v579 = vadd.f32 %v55, %v578
    %v580 = vpop.f32.mrb[0].mxu0
    %581 = vdwg.mxu0
    %582 = vrot.lane.b32.xlu0 %v196, 96
    %v583 = vpop.permute.xlu0 %582
    %v584 = vsel %vm203, %v196, 0
    %v586 = vsel %vm203, %v583, 0
    %588 = vmatprep.subr.mxu0 0.0
    %589 = vmatpush1.xpose.msra.mxu0 %v586
    %590 = vmatprep.subr.mxu0 0.0
    %591 = vmatpush1.xpose.msra.mxu0 0.0
    %592 = vmatprep.subr.mxu0 0.0
    %593 = vmatpush1.xpose.msra.mxu0 0.0
    %594 = vmatprep.subr.mxu0 0.0
    %595 = vmatpush1.xpose.msra.mxu0 0.0
    %596 = vmatprep.subr.mxu0 0.0
    %597 = vmatpush1.xpose.msra.mxu0 0.0
    %598 = vmatprep.subr.mxu0 0.0
    %599 = vmatpush1.xpose.msra.mxu0 0.0
    %600 = vmatprep.subr.mxu0 0.0
    %601 = vmatpush1.xpose.msra.mxu0 0.0
    %602 = vmatprep.subr.mxu0 0.0
    %603 = vmatpush1.xpose.msra.mxu0 0.0
    %604 = vmatprep.subr.mxu0 0.0
    %605 = vmatpush1.xpose.msra.mxu0 0.0
    %606 = vmatprep.subr.mxu0 0.0
    %607 = vmatpush1.xpose.msra.mxu0 0.0
    %608 = vmatprep.subr.mxu0 0.0
    %609 = vmatpush1.xpose.msra.mxu0 0.0
    %610 = vmatprep.subr.mxu0 0.0
    %611 = vmatpush1.xpose.msra.mxu0 0.0
    %612 = vmatprep.subr.mxu0 0.0
    %613 = vmatpush1.xpose.msra.mxu0 0.0
    %614 = vmatprep.subr.mxu0 0.0
    %615 = vmatpush1.xpose.msra.mxu0 0.0
    %616 = vmatprep.subr.mxu0 0.0
    %617 = vmatpush1.xpose.msra.mxu0 0.0
    %618 = vmatprep.subr.mxu0 0.0
    %619 = vmatpush1.xpose.msra.mxu0 0.0
    %620 = vmatprep.subr.mxu0 0.0
    %621 = vmatpush1.xpose.msra.mxu0 0.0
    %622 = vmatprep.subr.mxu0 0.0
    %623 = vmatpush1.xpose.msra.mxu0 0.0
    %624 = vmatprep.subr.mxu0 0.0
    %625 = vmatpush1.xpose.msra.mxu0 0.0
    %626 = vmatprep.subr.mxu0 0.0
    %627 = vmatpush1.xpose.msra.mxu0 0.0
    %628 = vmatprep.subr.mxu0 0.0
    %629 = vmatpush1.xpose.msra.mxu0 0.0
    %630 = vmatprep.subr.mxu0 0.0
    %631 = vmatpush1.xpose.msra.mxu0 0.0
    %632 = vmatprep.subr.mxu0 0.0
    %633 = vmatpush1.xpose.msra.mxu0 0.0
    %634 = vmatprep.subr.mxu0 0.0
    %635 = vmatpush1.xpose.msra.mxu0 0.0
    %636 = vmatprep.subr.mxu0 0.0
    %637 = vmatpush1.xpose.msra.mxu0 0.0
    %638 = vmatprep.subr.mxu0 0.0
    %639 = vmatpush1.xpose.msra.mxu0 0.0
    %640 = vmatprep.subr.mxu0 0.0
    %641 = vmatpush1.xpose.msra.mxu0 0.0
    %642 = vmatprep.subr.mxu0 0.0
    %643 = vmatpush1.xpose.msra.mxu0 0.0
    %644 = vmatprep.subr.mxu0 0.0
    %645 = vmatpush1.xpose.msra.mxu0 0.0
    %646 = vmatprep.subr.mxu0 0.0
    %647 = vmatpush1.xpose.msra.mxu0 0.0
    %648 = vmatprep.subr.mxu0 0.0
    %649 = vmatpush1.xpose.msra.mxu0 0.0
    %650 = vmatprep.subr.mxu0 0.0
    %651 = vmatpush1.xpose.msra.mxu0 0.0
    %652 = vmatprep.mubr.f32.mxu0 0.0
    %653 = vmatmul.mubr.f32.gmra.mrb[0].mxu0 %v584
    %v654 = vpop.f32.mrb[0].mxu0
    %v655 = vadd.f32 %v55, %v654
    %v656 = vpop.f32.mrb[0].mxu0
    %657 = vdwg.mxu0
    %658 = vrot.lane.b32.xlu0 %v198, 96
    %v659 = vpop.permute.xlu0 %658
    %v660 = vsel %vm203, %v198, 0
    %v662 = vsel %vm203, %v659, 0
    %664 = vmatprep.subr.mxu0 0.0
    %665 = vmatpush1.xpose.msra.mxu0 %v662
    %666 = vmatprep.subr.mxu0 0.0
    %667 = vmatpush1.xpose.msra.mxu0 0.0
    %668 = vmatprep.subr.mxu0 0.0
    %669 = vmatpush1.xpose.msra.mxu0 0.0
    %670 = vmatprep.subr.mxu0 0.0
    %671 = vmatpush1.xpose.msra.mxu0 0.0
    %672 = vmatprep.subr.mxu0 0.0
    %673 = vmatpush1.xpose.msra.mxu0 0.0
    %674 = vmatprep.subr.mxu0 0.0
    %675 = vmatpush1.xpose.msra.mxu0 0.0
    %676 = vmatprep.subr.mxu0 0.0
    %677 = vmatpush1.xpose.msra.mxu0 0.0
    %678 = vmatprep.subr.mxu0 0.0
    %679 = vmatpush1.xpose.msra.mxu0 0.0
    %680 = vmatprep.subr.mxu0 0.0
    %681 = vmatpush1.xpose.msra.mxu0 0.0
    %682 = vmatprep.subr.mxu0 0.0
    %683 = vmatpush1.xpose.msra.mxu0 0.0
    %684 = vmatprep.subr.mxu0 0.0
    %685 = vmatpush1.xpose.msra.mxu0 0.0
    %686 = vmatprep.subr.mxu0 0.0
    %687 = vmatpush1.xpose.msra.mxu0 0.0
    %688 = vmatprep.subr.mxu0 0.0
    %689 = vmatpush1.xpose.msra.mxu0 0.0
    %690 = vmatprep.subr.mxu0 0.0
    %691 = vmatpush1.xpose.msra.mxu0 0.0
    %692 = vmatprep.subr.mxu0 0.0
    %693 = vmatpush1.xpose.msra.mxu0 0.0
    %694 = vmatprep.subr.mxu0 0.0
    %695 = vmatpush1.xpose.msra.mxu0 0.0
    %696 = vmatprep.subr.mxu0 0.0
    %697 = vmatpush1.xpose.msra.mxu0 0.0
    %698 = vmatprep.subr.mxu0 0.0
    %699 = vmatpush1.xpose.msra.mxu0 0.0
    %700 = vmatprep.subr.mxu0 0.0
    %701 = vmatpush1.xpose.msra.mxu0 0.0
    %702 = vmatprep.subr.mxu0 0.0
    %703 = vmatpush1.xpose.msra.mxu0 0.0
    %704 = vmatprep.subr.mxu0 0.0
    %705 = vmatpush1.xpose.msra.mxu0 0.0
    %706 = vmatprep.subr.mxu0 0.0
    %707 = vmatpush1.xpose.msra.mxu0 0.0
    %708 = vmatprep.subr.mxu0 0.0
    %709 = vmatpush1.xpose.msra.mxu0 0.0
    %710 = vmatprep.subr.mxu0 0.0
    %711 = vmatpush1.xpose.msra.mxu0 0.0
    %712 = vmatprep.subr.mxu0 0.0
    %713 = vmatpush1.xpose.msra.mxu0 0.0
    %714 = vmatprep.subr.mxu0 0.0
    %715 = vmatpush1.xpose.msra.mxu0 0.0
    %716 = vmatprep.subr.mxu0 0.0
    %717 = vmatpush1.xpose.msra.mxu0 0.0
    %718 = vmatprep.subr.mxu0 0.0
    %719 = vmatpush1.xpose.msra.mxu0 0.0
    %720 = vmatprep.subr.mxu0 0.0
    %721 = vmatpush1.xpose.msra.mxu0 0.0
    %722 = vmatprep.subr.mxu0 0.0
    %723 = vmatpush1.xpose.msra.mxu0 0.0
    %724 = vmatprep.subr.mxu0 0.0
    %725 = vmatpush1.xpose.msra.mxu0 0.0
    %726 = vmatprep.subr.mxu0 0.0
    %727 = vmatpush1.xpose.msra.mxu0 0.0
    %728 = vmatprep.mubr.f32.mxu0 0.0
    %729 = vmatmul.mubr.f32.gmra.mrb[0].mxu0 %v660
    %v730 = vpop.f32.mrb[0].mxu0
    %v731 = vadd.f32 %v55, %v730
    %v732 = vpop.f32.mrb[0].mxu0
    %733 = vdwg.mxu0
    %734 = vrot.lane.b32.xlu0 %v200, 96
    %v735 = vpop.permute.xlu0 %734
    %v736 = vsel %vm203, %v200, 0
    %v738 = vsel %vm203, %v735, 0
    %740 = vmatprep.subr.mxu0 0.0
    %741 = vmatpush1.xpose.msra.mxu0 %v738
    %742 = vmatprep.subr.mxu0 0.0
    %743 = vmatpush1.xpose.msra.mxu0 0.0
    %744 = vmatprep.subr.mxu0 0.0
    %745 = vmatpush1.xpose.msra.mxu0 0.0
    %746 = vmatprep.subr.mxu0 0.0
    %747 = vmatpush1.xpose.msra.mxu0 0.0
    %748 = vmatprep.subr.mxu0 0.0
    %749 = vmatpush1.xpose.msra.mxu0 0.0
    %750 = vmatprep.subr.mxu0 0.0
    %751 = vmatpush1.xpose.msra.mxu0 0.0
    %752 = vmatprep.subr.mxu0 0.0
    %753 = vmatpush1.xpose.msra.mxu0 0.0
    %754 = vmatprep.subr.mxu0 0.0
    %755 = vmatpush1.xpose.msra.mxu0 0.0
    %756 = vmatprep.subr.mxu0 0.0
    %757 = vmatpush1.xpose.msra.mxu0 0.0
    %758 = vmatprep.subr.mxu0 0.0
    %759 = vmatpush1.xpose.msra.mxu0 0.0
    %760 = vmatprep.subr.mxu0 0.0
    %761 = vmatpush1.xpose.msra.mxu0 0.0
    %762 = vmatprep.subr.mxu0 0.0
    %763 = vmatpush1.xpose.msra.mxu0 0.0
    %764 = vmatprep.subr.mxu0 0.0
    %765 = vmatpush1.xpose.msra.mxu0 0.0
    %766 = vmatprep.subr.mxu0 0.0
    %767 = vmatpush1.xpose.msra.mxu0 0.0
    %768 = vmatprep.subr.mxu0 0.0
    %769 = vmatpush1.xpose.msra.mxu0 0.0
    %770 = vmatprep.subr.mxu0 0.0
    %771 = vmatpush1.xpose.msra.mxu0 0.0
    %772 = vmatprep.subr.mxu0 0.0
    %773 = vmatpush1.xpose.msra.mxu0 0.0
    %774 = vmatprep.subr.mxu0 0.0
    %775 = vmatpush1.xpose.msra.mxu0 0.0
    %776 = vmatprep.subr.mxu0 0.0
    %777 = vmatpush1.xpose.msra.mxu0 0.0
    %778 = vmatprep.subr.mxu0 0.0
    %779 = vmatpush1.xpose.msra.mxu0 0.0
    %780 = vmatprep.subr.mxu0 0.0
    %781 = vmatpush1.xpose.msra.mxu0 0.0
    %782 = vmatprep.subr.mxu0 0.0
    %783 = vmatpush1.xpose.msra.mxu0 0.0
    %784 = vmatprep.subr.mxu0 0.0
    %785 = vmatpush1.xpose.msra.mxu0 0.0
    %786 = vmatprep.subr.mxu0 0.0
    %787 = vmatpush1.xpose.msra.mxu0 0.0
    %788 = vmatprep.subr.mxu0 0.0
    %789 = vmatpush1.xpose.msra.mxu0 0.0
    %790 = vmatprep.subr.mxu0 0.0
    %791 = vmatpush1.xpose.msra.mxu0 0.0
    %792 = vmatprep.subr.mxu0 0.0
    %793 = vmatpush1.xpose.msra.mxu0 0.0
    %794 = vmatprep.subr.mxu0 0.0
    %795 = vmatpush1.xpose.msra.mxu0 0.0
    %796 = vmatprep.subr.mxu0 0.0
    %797 = vmatpush1.xpose.msra.mxu0 0.0
    %798 = vmatprep.subr.mxu0 0.0
    %799 = vmatpush1.xpose.msra.mxu0 0.0
    %800 = vmatprep.subr.mxu0 0.0
    %801 = vmatpush1.xpose.msra.mxu0 0.0
    %802 = vmatprep.subr.mxu0 0.0
    %803 = vmatpush1.xpose.msra.mxu0 0.0
    %804 = vmatprep.mubr.f32.mxu0 0.0
    %805 = vmatmul.mubr.f32.gmra.mrb[0].mxu0 %v736
    %v806 = vpop.f32.mrb[0].mxu0
    %v807 = vadd.f32 %v55, %v806
    %v808 = vpop.f32.mrb[0].mxu0
    %809 = vdwg.mxu0
    %v810 = vsel %vm203, %v275, -inf
    %811 = vmax.xlane.f32.xlu0 %v810
    %v812 = vpop.xlane.xlu0 %811
    %v813 = vsel %vm203, %v351, -inf
    %814 = vmax.xlane.f32.xlu0 %v813
    %v815 = vpop.xlane.xlu0 %814
    %v816 = vsel %vm203, %v427, -inf
    %817 = vmax.xlane.f32.xlu0 %v816
    %v818 = vpop.xlane.xlu0 %817
    %v819 = vsel %vm203, %v503, -inf
    %820 = vmax.xlane.f32.xlu0 %v819
    %v821 = vpop.xlane.xlu0 %820
    %v822 = vsel %vm203, %v579, -inf
    %823 = vmax.xlane.f32.xlu0 %v822
    %v824 = vpop.xlane.xlu0 %823
    %v825 = vsel %vm203, %v655, -inf
    %826 = vmax.xlane.f32.xlu0 %v825
    %v827 = vpop.xlane.xlu0 %826
    %v828 = vsel %vm203, %v731, -inf
    %829 = vmax.xlane.f32.xlu0 %v828
    %v830 = vpop.xlane.xlu0 %829
    %v831 = vsel %vm203, %v807, -inf
    %832 = vmax.xlane.f32.xlu0 %v831
    %v833 = vpop.xlane.xlu0 %832
    %v834 = vsub.f32 %v275, %v812
    %v835 = vsub.f32 %v351, %v815
    %v836 = vsub.f32 %v427, %v818
    %v837 = vsub.f32 %v503, %v821
    %v838 = vsub.f32 %v579, %v824
    %v839 = vsub.f32 %v655, %v827
    %v840 = vsub.f32 %v731, %v830
    %v841 = vsub.f32 %v807, %v833
    %v842 = vmul.f32 %v834, 1.442695
    %v843 = vpow.pop %v842
    %v844 = vmul.f32 %v835, 1.442695
    %v845 = vpow.pop %v844
    %v846 = vmul.f32 %v836, 1.442695
    %v847 = vpow.pop %v846
    %v848 = vmul.f32 %v837, 1.442695
    %v849 = vpow.pop %v848
    %v850 = vmul.f32 %v838, 1.442695
    %v851 = vpow.pop %v850
    %v852 = vmul.f32 %v839, 1.442695
    %v853 = vpow.pop %v852
    %v854 = vmul.f32 %v840, 1.442695
    %v855 = vpow.pop %v854
    %v856 = vmul.f32 %v841, 1.442695
    %v857 = vpow.pop %v856
    %v858 = vsel %vm203, %v843, 0.0
    %859 = vadd.xlane.f32.xlu0 %v858
    %v860 = vpop.xlane.xlu0 %859
    %v861 = vsel %vm203, %v845, 0.0
    %862 = vadd.xlane.f32.xlu0 %v861
    %v863 = vpop.xlane.xlu0 %862
    %v864 = vsel %vm203, %v847, 0.0
    %865 = vadd.xlane.f32.xlu0 %v864
    %v866 = vpop.xlane.xlu0 %865
    %v867 = vsel %vm203, %v849, 0.0
    %868 = vadd.xlane.f32.xlu0 %v867
    %v869 = vpop.xlane.xlu0 %868
    %v870 = vsel %vm203, %v851, 0.0
    %871 = vadd.xlane.f32.xlu0 %v870
    %v872 = vpop.xlane.xlu0 %871
    %v873 = vsel %vm203, %v853, 0.0
    %874 = vadd.xlane.f32.xlu0 %v873
    %v875 = vpop.xlane.xlu0 %874
    %v876 = vsel %vm203, %v855, 0.0
    %877 = vadd.xlane.f32.xlu0 %v876
    %v878 = vpop.xlane.xlu0 %877
    %v879 = vsel %vm203, %v857, 0.0
    %880 = vadd.xlane.f32.xlu0 %v879
    %v881 = vpop.xlane.xlu0 %880
    %v882 = vrcp.pop %v860
    %v883 = vmul.f32 %v843, %v882
    %v884 = vrcp.pop %v863
    %v885 = vmul.f32 %v845, %v884
    %v886 = vrcp.pop %v866
    %v887 = vmul.f32 %v847, %v886
    %v888 = vrcp.pop %v869
    %v889 = vmul.f32 %v849, %v888
    %v890 = vrcp.pop %v872
    %v891 = vmul.f32 %v851, %v890
    %v892 = vrcp.pop %v875
    %v893 = vmul.f32 %v853, %v892
    %v894 = vrcp.pop %v878
    %v895 = vmul.f32 %v855, %v894
    %v896 = vrcp.pop %v881
    %v897 = vmul.f32 %v857, %v896
    %898 = vrot.lane.b32.xlu0 %v179, 64
    %v899 = vpop.permute.xlu0 %898
    %v902 = vsel %vm203, %v883, 0
    %904 = vmatprep.subr.mxu0 0.0
    %905 = vmatpush1.msra.mxu0 %v899
    %906 = vmatprep.subr.mxu0 0.0
    %907 = vmatpush1.msra.mxu0 0.0
    %908 = vmatprep.subr.mxu0 0.0
    %909 = vmatpush1.msra.mxu0 0.0
    %910 = vmatprep.subr.mxu0 0.0
    %911 = vmatpush1.msra.mxu0 0.0
    %912 = vmatprep.subr.mxu0 0.0
    %913 = vmatpush1.msra.mxu0 0.0
    %914 = vmatprep.subr.mxu0 0.0
    %915 = vmatpush1.msra.mxu0 0.0
    %916 = vmatprep.subr.mxu0 0.0
    %917 = vmatpush1.msra.mxu0 0.0
    %918 = vmatprep.subr.mxu0 0.0
    %919 = vmatpush1.msra.mxu0 0.0
    %920 = vmatprep.subr.mxu0 0.0
    %921 = vmatpush1.msra.mxu0 0.0
    %922 = vmatprep.subr.mxu0 0.0
    %923 = vmatpush1.msra.mxu0 0.0
    %924 = vmatprep.subr.mxu0 0.0
    %925 = vmatpush1.msra.mxu0 0.0
    %926 = vmatprep.subr.mxu0 0.0
    %927 = vmatpush1.msra.mxu0 0.0
    %928 = vmatprep.subr.mxu0 0.0
    %929 = vmatpush1.msra.mxu0 0.0
    %930 = vmatprep.subr.mxu0 0.0
    %931 = vmatpush1.msra.mxu0 0.0
    %932 = vmatprep.subr.mxu0 0.0
    %933 = vmatpush1.msra.mxu0 0.0
    %934 = vmatprep.subr.mxu0 0.0
    %935 = vmatpush1.msra.mxu0 0.0
    %936 = vmatprep.subr.mxu0 0.0
    %937 = vmatpush1.msra.mxu0 0.0
    %938 = vmatprep.subr.mxu0 0.0
    %939 = vmatpush1.msra.mxu0 0.0
    %940 = vmatprep.subr.mxu0 0.0
    %941 = vmatpush1.msra.mxu0 0.0
    %942 = vmatprep.subr.mxu0 0.0
    %943 = vmatpush1.msra.mxu0 0.0
    %944 = vmatprep.subr.mxu0 0.0
    %945 = vmatpush1.msra.mxu0 0.0
    %946 = vmatprep.subr.mxu0 0.0
    %947 = vmatpush1.msra.mxu0 0.0
    %948 = vmatprep.subr.mxu0 0.0
    %949 = vmatpush1.msra.mxu0 0.0
    %950 = vmatprep.subr.mxu0 0.0
    %951 = vmatpush1.msra.mxu0 0.0
    %952 = vmatprep.subr.mxu0 0.0
    %953 = vmatpush1.msra.mxu0 0.0
    %954 = vmatprep.subr.mxu0 0.0
    %955 = vmatpush1.msra.mxu0 0.0
    %956 = vmatprep.subr.mxu0 0.0
    %957 = vmatpush1.msra.mxu0 0.0
    %958 = vmatprep.subr.mxu0 0.0
    %959 = vmatpush1.msra.mxu0 0.0
    %960 = vmatprep.subr.mxu0 0.0
    %961 = vmatpush1.msra.mxu0 0.0
    %962 = vmatprep.subr.mxu0 0.0
    %963 = vmatpush1.msra.mxu0 0.0
    %964 = vmatprep.subr.mxu0 0.0
    %965 = vmatpush1.msra.mxu0 0.0
    %966 = vmatprep.subr.mxu0 0.0
    %967 = vmatpush1.msra.mxu0 0.0
    %968 = vmatprep.mubr.f32.mxu0 0.0
    %969 = vmatmul.mubr.f32.gmra.mrb[0].mxu0 %v902
    %v970 = vpop.f32.mrb[0].mxu0
    %v971 = vadd.f32 0.0, %v970
    %v972 = vpop.f32.mrb[0].mxu0
    %973 = vdwg.mxu0
    %974 = vrot.lane.b32.xlu0 %v184, 64
    %v975 = vpop.permute.xlu0 %974
    %v978 = vsel %vm203, %v885, 0
    %980 = vmatprep.subr.mxu0 0.0
    %981 = vmatpush1.msra.mxu0 %v975
    %982 = vmatprep.subr.mxu0 0.0
    %983 = vmatpush1.msra.mxu0 0.0
    %984 = vmatprep.subr.mxu0 0.0
    %985 = vmatpush1.msra.mxu0 0.0
    %986 = vmatprep.subr.mxu0 0.0
    %987 = vmatpush1.msra.mxu0 0.0
    %988 = vmatprep.subr.mxu0 0.0
    %989 = vmatpush1.msra.mxu0 0.0
    %990 = vmatprep.subr.mxu0 0.0
    %991 = vmatpush1.msra.mxu0 0.0
    %992 = vmatprep.subr.mxu0 0.0
    %993 = vmatpush1.msra.mxu0 0.0
    %994 = vmatprep.subr.mxu0 0.0
    %995 = vmatpush1.msra.mxu0 0.0
    %996 = vmatprep.subr.mxu0 0.0
    %997 = vmatpush1.msra.mxu0 0.0
    %998 = vmatprep.subr.mxu0 0.0
    %999 = vmatpush1.msra.mxu0 0.0
    %1000 = vmatprep.subr.mxu0 0.0
    %1001 = vmatpush1.msra.mxu0 0.0
    %1002 = vmatprep.subr.mxu0 0.0
    %1003 = vmatpush1.msra.mxu0 0.0
    %1004 = vmatprep.subr.mxu0 0.0
    %1005 = vmatpush1.msra.mxu0 0.0
    %1006 = vmatprep.subr.mxu0 0.0
    %1007 = vmatpush1.msra.mxu0 0.0
    %1008 = vmatprep.subr.mxu0 0.0
    %1009 = vmatpush1.msra.mxu0 0.0
    %1010 = vmatprep.subr.mxu0 0.0
    %1011 = vmatpush1.msra.mxu0 0.0
    %1012 = vmatprep.subr.mxu0 0.0
    %1013 = vmatpush1.msra.mxu0 0.0
    %1014 = vmatprep.subr.mxu0 0.0
    %1015 = vmatpush1.msra.mxu0 0.0
    %1016 = vmatprep.subr.mxu0 0.0
    %1017 = vmatpush1.msra.mxu0 0.0
    %1018 = vmatprep.subr.mxu0 0.0
    %1019 = vmatpush1.msra.mxu0 0.0
    %1020 = vmatprep.subr.mxu0 0.0
    %1021 = vmatpush1.msra.mxu0 0.0
    %1022 = vmatprep.subr.mxu0 0.0
    %1023 = vmatpush1.msra.mxu0 0.0
    %1024 = vmatprep.subr.mxu0 0.0
    %1025 = vmatpush1.msra.mxu0 0.0
    %1026 = vmatprep.subr.mxu0 0.0
    %1027 = vmatpush1.msra.mxu0 0.0
    %1028 = vmatprep.subr.mxu0 0.0
    %1029 = vmatpush1.msra.mxu0 0.0
    %1030 = vmatprep.subr.mxu0 0.0
    %1031 = vmatpush1.msra.mxu0 0.0
    %1032 = vmatprep.subr.mxu0 0.0
    %1033 = vmatpush1.msra.mxu0 0.0
    %1034 = vmatprep.subr.mxu0 0.0
    %1035 = vmatpush1.msra.mxu0 0.0
    %1036 = vmatprep.subr.mxu0 0.0
    %1037 = vmatpush1.msra.mxu0 0.0
    %1038 = vmatprep.subr.mxu0 0.0
    %1039 = vmatpush1.msra.mxu0 0.0
    %1040 = vmatprep.subr.mxu0 0.0
    %1041 = vmatpush1.msra.mxu0 0.0
    %1042 = vmatprep.subr.mxu0 0.0
    %1043 = vmatpush1.msra.mxu0 0.0
    %1044 = vmatprep.mubr.f32.mxu0 0.0
    %1045 = vmatmul.mubr.f32.gmra.mrb[0].mxu0 %v978
    %v1046 = vpop.f32.mrb[0].mxu0
    %v1047 = vadd.f32 0.0, %v1046
    %v1048 = vpop.f32.mrb[0].mxu0
    %1049 = vdwg.mxu0
    %1050 = vrot.lane.b32.xlu0 %v190, 64
    %v1051 = vpop.permute.xlu0 %1050
    %v1054 = vsel %vm203, %v887, 0
    %1056 = vmatprep.subr.mxu0 0.0
    %1057 = vmatpush1.msra.mxu0 %v1051
    %1058 = vmatprep.subr.mxu0 0.0
    %1059 = vmatpush1.msra.mxu0 0.0
    %1060 = vmatprep.subr.mxu0 0.0
    %1061 = vmatpush1.msra.mxu0 0.0
    %1062 = vmatprep.subr.mxu0 0.0
    %1063 = vmatpush1.msra.mxu0 0.0
    %1064 = vmatprep.subr.mxu0 0.0
    %1065 = vmatpush1.msra.mxu0 0.0
    %1066 = vmatprep.subr.mxu0 0.0
    %1067 = vmatpush1.msra.mxu0 0.0
    %1068 = vmatprep.subr.mxu0 0.0
    %1069 = vmatpush1.msra.mxu0 0.0
    %1070 = vmatprep.subr.mxu0 0.0
    %1071 = vmatpush1.msra.mxu0 0.0
    %1072 = vmatprep.subr.mxu0 0.0
    %1073 = vmatpush1.msra.mxu0 0.0
    %1074 = vmatprep.subr.mxu0 0.0
    %1075 = vmatpush1.msra.mxu0 0.0
    %1076 = vmatprep.subr.mxu0 0.0
    %1077 = vmatpush1.msra.mxu0 0.0
    %1078 = vmatprep.subr.mxu0 0.0
    %1079 = vmatpush1.msra.mxu0 0.0
    %1080 = vmatprep.subr.mxu0 0.0
    %1081 = vmatpush1.msra.mxu0 0.0
    %1082 = vmatprep.subr.mxu0 0.0
    %1083 = vmatpush1.msra.mxu0 0.0
    %1084 = vmatprep.subr.mxu0 0.0
    %1085 = vmatpush1.msra.mxu0 0.0
    %1086 = vmatprep.subr.mxu0 0.0
    %1087 = vmatpush1.msra.mxu0 0.0
    %1088 = vmatprep.subr.mxu0 0.0
    %1089 = vmatpush1.msra.mxu0 0.0
    %1090 = vmatprep.subr.mxu0 0.0
    %1091 = vmatpush1.msra.mxu0 0.0
    %1092 = vmatprep.subr.mxu0 0.0
    %1093 = vmatpush1.msra.mxu0 0.0
    %1094 = vmatprep.subr.mxu0 0.0
    %1095 = vmatpush1.msra.mxu0 0.0
    %1096 = vmatprep.subr.mxu0 0.0
    %1097 = vmatpush1.msra.mxu0 0.0
    %1098 = vmatprep.subr.mxu0 0.0
    %1099 = vmatpush1.msra.mxu0 0.0
    %1100 = vmatprep.subr.mxu0 0.0
    %1101 = vmatpush1.msra.mxu0 0.0
    %1102 = vmatprep.subr.mxu0 0.0
    %1103 = vmatpush1.msra.mxu0 0.0
    %1104 = vmatprep.subr.mxu0 0.0
    %1105 = vmatpush1.msra.mxu0 0.0
    %1106 = vmatprep.subr.mxu0 0.0
    %1107 = vmatpush1.msra.mxu0 0.0
    %1108 = vmatprep.subr.mxu0 0.0
    %1109 = vmatpush1.msra.mxu0 0.0
    %1110 = vmatprep.subr.mxu0 0.0
    %1111 = vmatpush1.msra.mxu0 0.0
    %1112 = vmatprep.subr.mxu0 0.0
    %1113 = vmatpush1.msra.mxu0 0.0
    %1114 = vmatprep.subr.mxu0 0.0
    %1115 = vmatpush1.msra.mxu0 0.0
    %1116 = vmatprep.subr.mxu0 0.0
    %1117 = vmatpush1.msra.mxu0 0.0
    %1118 = vmatprep.subr.mxu0 0.0
    %1119 = vmatpush1.msra.mxu0 0.0
    %1120 = vmatprep.mubr.f32.mxu0 0.0
    %1121 = vmatmul.mubr.f32.gmra.mrb[0].mxu0 %v1054
    %v1122 = vpop.f32.mrb[0].mxu0
    %v1123 = vadd.f32 0.0, %v1122
    %v1124 = vpop.f32.mrb[0].mxu0
    %1125 = vdwg.mxu0
    %1126 = vrot.lane.b32.xlu0 %v192, 64
    %v1127 = vpop.permute.xlu0 %1126
    %v1130 = vsel %vm203, %v889, 0
    %1132 = vmatprep.subr.mxu0 0.0
    %1133 = vmatpush1.msra.mxu0 %v1127
    %1134 = vmatprep.subr.mxu0 0.0
    %1135 = vmatpush1.msra.mxu0 0.0
    %1136 = vmatprep.subr.mxu0 0.0
    %1137 = vmatpush1.msra.mxu0 0.0
    %1138 = vmatprep.subr.mxu0 0.0
    %1139 = vmatpush1.msra.mxu0 0.0
    %1140 = vmatprep.subr.mxu0 0.0
    %1141 = vmatpush1.msra.mxu0 0.0
    %1142 = vmatprep.subr.mxu0 0.0
    %1143 = vmatpush1.msra.mxu0 0.0
    %1144 = vmatprep.subr.mxu0 0.0
    %1145 = vmatpush1.msra.mxu0 0.0
    %1146 = vmatprep.subr.mxu0 0.0
    %1147 = vmatpush1.msra.mxu0 0.0
    %1148 = vmatprep.subr.mxu0 0.0
    %1149 = vmatpush1.msra.mxu0 0.0
    %1150 = vmatprep.subr.mxu0 0.0
    %1151 = vmatpush1.msra.mxu0 0.0
    %1152 = vmatprep.subr.mxu0 0.0
    %1153 = vmatpush1.msra.mxu0 0.0
    %1154 = vmatprep.subr.mxu0 0.0
    %1155 = vmatpush1.msra.mxu0 0.0
    %1156 = vmatprep.subr.mxu0 0.0
    %1157 = vmatpush1.msra.mxu0 0.0
    %1158 = vmatprep.subr.mxu0 0.0
    %1159 = vmatpush1.msra.mxu0 0.0
    %1160 = vmatprep.subr.mxu0 0.0
    %1161 = vmatpush1.msra.mxu0 0.0
    %1162 = vmatprep.subr.mxu0 0.0
    %1163 = vmatpush1.msra.mxu0 0.0
    %1164 = vmatprep.subr.mxu0 0.0
    %1165 = vmatpush1.msra.mxu0 0.0
    %1166 = vmatprep.subr.mxu0 0.0
    %1167 = vmatpush1.msra.mxu0 0.0
    %1168 = vmatprep.subr.mxu0 0.0
    %1169 = vmatpush1.msra.mxu0 0.0
    %1170 = vmatprep.subr.mxu0 0.0
    %1171 = vmatpush1.msra.mxu0 0.0
    %1172 = vmatprep.subr.mxu0 0.0
    %1173 = vmatpush1.msra.mxu0 0.0
    %1174 = vmatprep.subr.mxu0 0.0
    %1175 = vmatpush1.msra.mxu0 0.0
    %1176 = vmatprep.subr.mxu0 0.0
    %1177 = vmatpush1.msra.mxu0 0.0
    %1178 = vmatprep.subr.mxu0 0.0
    %1179 = vmatpush1.msra.mxu0 0.0
    %1180 = vmatprep.subr.mxu0 0.0
    %1181 = vmatpush1.msra.mxu0 0.0
    %1182 = vmatprep.subr.mxu0 0.0
    %1183 = vmatpush1.msra.mxu0 0.0
    %1184 = vmatprep.subr.mxu0 0.0
    %1185 = vmatpush1.msra.mxu0 0.0
    %1186 = vmatprep.subr.mxu0 0.0
    %1187 = vmatpush1.msra.mxu0 0.0
    %1188 = vmatprep.subr.mxu0 0.0
    %1189 = vmatpush1.msra.mxu0 0.0
    %1190 = vmatprep.subr.mxu0 0.0
    %1191 = vmatpush1.msra.mxu0 0.0
    %1192 = vmatprep.subr.mxu0 0.0
    %1193 = vmatpush1.msra.mxu0 0.0
    %1194 = vmatprep.subr.mxu0 0.0
    %1195 = vmatpush1.msra.mxu0 0.0
    %1196 = vmatprep.mubr.f32.mxu0 0.0
    %1197 = vmatmul.mubr.f32.gmra.mrb[0].mxu0 %v1130
    %v1198 = vpop.f32.mrb[0].mxu0
    %v1199 = vadd.f32 0.0, %v1198
    %v1200 = vpop.f32.mrb[0].mxu0
    %1201 = vdwg.mxu0
    %1202 = vrot.lane.b32.xlu0 %v194, 64
    %v1203 = vpop.permute.xlu0 %1202
    %v1206 = vsel %vm203, %v891, 0
    %1208 = vmatprep.subr.mxu0 0.0
    %1209 = vmatpush1.msra.mxu0 %v1203
    %1210 = vmatprep.subr.mxu0 0.0
    %1211 = vmatpush1.msra.mxu0 0.0
    %1212 = vmatprep.subr.mxu0 0.0
    %1213 = vmatpush1.msra.mxu0 0.0
    %1214 = vmatprep.subr.mxu0 0.0
    %1215 = vmatpush1.msra.mxu0 0.0
    %1216 = vmatprep.subr.mxu0 0.0
    %1217 = vmatpush1.msra.mxu0 0.0
    %1218 = vmatprep.subr.mxu0 0.0
    %1219 = vmatpush1.msra.mxu0 0.0
    %1220 = vmatprep.subr.mxu0 0.0
    %1221 = vmatpush1.msra.mxu0 0.0
    %1222 = vmatprep.subr.mxu0 0.0
    %1223 = vmatpush1.msra.mxu0 0.0
    %1224 = vmatprep.subr.mxu0 0.0
    %1225 = vmatpush1.msra.mxu0 0.0
    %1226 = vmatprep.subr.mxu0 0.0
    %1227 = vmatpush1.msra.mxu0 0.0
    %1228 = vmatprep.subr.mxu0 0.0
    %1229 = vmatpush1.msra.mxu0 0.0
    %1230 = vmatprep.subr.mxu0 0.0
    %1231 = vmatpush1.msra.mxu0 0.0
    %1232 = vmatprep.subr.mxu0 0.0
    %1233 = vmatpush1.msra.mxu0 0.0
    %1234 = vmatprep.subr.mxu0 0.0
    %1235 = vmatpush1.msra.mxu0 0.0
    %1236 = vmatprep.subr.mxu0 0.0
    %1237 = vmatpush1.msra.mxu0 0.0
    %1238 = vmatprep.subr.mxu0 0.0
    %1239 = vmatpush1.msra.mxu0 0.0
    %1240 = vmatprep.subr.mxu0 0.0
    %1241 = vmatpush1.msra.mxu0 0.0
    %1242 = vmatprep.subr.mxu0 0.0
    %1243 = vmatpush1.msra.mxu0 0.0
    %1244 = vmatprep.subr.mxu0 0.0
    %1245 = vmatpush1.msra.mxu0 0.0
    %1246 = vmatprep.subr.mxu0 0.0
    %1247 = vmatpush1.msra.mxu0 0.0
    %1248 = vmatprep.subr.mxu0 0.0
    %1249 = vmatpush1.msra.mxu0 0.0
    %1250 = vmatprep.subr.mxu0 0.0
    %1251 = vmatpush1.msra.mxu0 0.0
    %1252 = vmatprep.subr.mxu0 0.0
    %1253 = vmatpush1.msra.mxu0 0.0
    %1254 = vmatprep.subr.mxu0 0.0
    %1255 = vmatpush1.msra.mxu0 0.0
    %1256 = vmatprep.subr.mxu0 0.0
    %1257 = vmatpush1.msra.mxu0 0.0
    %1258 = vmatprep.subr.mxu0 0.0
    %1259 = vmatpush1.msra.mxu0 0.0
    %1260 = vmatprep.subr.mxu0 0.0
    %1261 = vmatpush1.msra.mxu0 0.0
    %1262 = vmatprep.subr.mxu0 0.0
    %1263 = vmatpush1.msra.mxu0 0.0
    %1264 = vmatprep.subr.mxu0 0.0
    %1265 = vmatpush1.msra.mxu0 0.0
    %1266 = vmatprep.subr.mxu0 0.0
    %1267 = vmatpush1.msra.mxu0 0.0
    %1268 = vmatprep.subr.mxu0 0.0
    %1269 = vmatpush1.msra.mxu0 0.0
    %1270 = vmatprep.subr.mxu0 0.0
    %1271 = vmatpush1.msra.mxu0 0.0
    %1272 = vmatprep.mubr.f32.mxu0 0.0
    %1273 = vmatmul.mubr.f32.gmra.mrb[0].mxu0 %v1206
    %v1274 = vpop.f32.mrb[0].mxu0
    %v1275 = vadd.f32 0.0, %v1274
    %v1276 = vpop.f32.mrb[0].mxu0
    %1277 = vdwg.mxu0
    %1278 = vrot.lane.b32.xlu0 %v196, 64
    %v1279 = vpop.permute.xlu0 %1278
    %v1282 = vsel %vm203, %v893, 0
    %1284 = vmatprep.subr.mxu0 0.0
    %1285 = vmatpush1.msra.mxu0 %v1279
    %1286 = vmatprep.subr.mxu0 0.0
    %1287 = vmatpush1.msra.mxu0 0.0
    %1288 = vmatprep.subr.mxu0 0.0
    %1289 = vmatpush1.msra.mxu0 0.0
    %1290 = vmatprep.subr.mxu0 0.0
    %1291 = vmatpush1.msra.mxu0 0.0
    %1292 = vmatprep.subr.mxu0 0.0
    %1293 = vmatpush1.msra.mxu0 0.0
    %1294 = vmatprep.subr.mxu0 0.0
    %1295 = vmatpush1.msra.mxu0 0.0
    %1296 = vmatprep.subr.mxu0 0.0
    %1297 = vmatpush1.msra.mxu0 0.0
    %1298 = vmatprep.subr.mxu0 0.0
    %1299 = vmatpush1.msra.mxu0 0.0
    %1300 = vmatprep.subr.mxu0 0.0
    %1301 = vmatpush1.msra.mxu0 0.0
    %1302 = vmatprep.subr.mxu0 0.0
    %1303 = vmatpush1.msra.mxu0 0.0
    %1304 = vmatprep.subr.mxu0 0.0
    %1305 = vmatpush1.msra.mxu0 0.0
    %1306 = vmatprep.subr.mxu0 0.0
    %1307 = vmatpush1.msra.mxu0 0.0
    %1308 = vmatprep.subr.mxu0 0.0
    %1309 = vmatpush1.msra.mxu0 0.0
    %1310 = vmatprep.subr.mxu0 0.0
    %1311 = vmatpush1.msra.mxu0 0.0
    %1312 = vmatprep.subr.mxu0 0.0
    %1313 = vmatpush1.msra.mxu0 0.0
    %1314 = vmatprep.subr.mxu0 0.0
    %1315 = vmatpush1.msra.mxu0 0.0
    %1316 = vmatprep.subr.mxu0 0.0
    %1317 = vmatpush1.msra.mxu0 0.0
    %1318 = vmatprep.subr.mxu0 0.0
    %1319 = vmatpush1.msra.mxu0 0.0
    %1320 = vmatprep.subr.mxu0 0.0
    %1321 = vmatpush1.msra.mxu0 0.0
    %1322 = vmatprep.subr.mxu0 0.0
    %1323 = vmatpush1.msra.mxu0 0.0
    %1324 = vmatprep.subr.mxu0 0.0
    %1325 = vmatpush1.msra.mxu0 0.0
    %1326 = vmatprep.subr.mxu0 0.0
    %1327 = vmatpush1.msra.mxu0 0.0
    %1328 = vmatprep.subr.mxu0 0.0
    %1329 = vmatpush1.msra.mxu0 0.0
    %1330 = vmatprep.subr.mxu0 0.0
    %1331 = vmatpush1.msra.mxu0 0.0
    %1332 = vmatprep.subr.mxu0 0.0
    %1333 = vmatpush1.msra.mxu0 0.0
    %1334 = vmatprep.subr.mxu0 0.0
    %1335 = vmatpush1.msra.mxu0 0.0
    %1336 = vmatprep.subr.mxu0 0.0
    %1337 = vmatpush1.msra.mxu0 0.0
    %1338 = vmatprep.subr.mxu0 0.0
    %1339 = vmatpush1.msra.mxu0 0.0
    %1340 = vmatprep.subr.mxu0 0.0
    %1341 = vmatpush1.msra.mxu0 0.0
    %1342 = vmatprep.subr.mxu0 0.0
    %1343 = vmatpush1.msra.mxu0 0.0
    %1344 = vmatprep.subr.mxu0 0.0
    %1345 = vmatpush1.msra.mxu0 0.0
    %1346 = vmatprep.subr.mxu0 0.0
    %1347 = vmatpush1.msra.mxu0 0.0
    %1348 = vmatprep.mubr.f32.mxu0 0.0
    %1349 = vmatmul.mubr.f32.gmra.mrb[0].mxu0 %v1282
    %v1350 = vpop.f32.mrb[0].mxu0
    %v1351 = vadd.f32 0.0, %v1350
    %v1352 = vpop.f32.mrb[0].mxu0
    %1353 = vdwg.mxu0
    %1354 = vrot.lane.b32.xlu0 %v198, 64
    %v1355 = vpop.permute.xlu0 %1354
    %v1358 = vsel %vm203, %v895, 0
    %1360 = vmatprep.subr.mxu0 0.0
    %1361 = vmatpush1.msra.mxu0 %v1355
    %1362 = vmatprep.subr.mxu0 0.0
    %1363 = vmatpush1.msra.mxu0 0.0
    %1364 = vmatprep.subr.mxu0 0.0
    %1365 = vmatpush1.msra.mxu0 0.0
    %1366 = vmatprep.subr.mxu0 0.0
    %1367 = vmatpush1.msra.mxu0 0.0
    %1368 = vmatprep.subr.mxu0 0.0
    %1369 = vmatpush1.msra.mxu0 0.0
    %1370 = vmatprep.subr.mxu0 0.0
    %1371 = vmatpush1.msra.mxu0 0.0
    %1372 = vmatprep.subr.mxu0 0.0
    %1373 = vmatpush1.msra.mxu0 0.0
    %1374 = vmatprep.subr.mxu0 0.0
    %1375 = vmatpush1.msra.mxu0 0.0
    %1376 = vmatprep.subr.mxu0 0.0
    %1377 = vmatpush1.msra.mxu0 0.0
    %1378 = vmatprep.subr.mxu0 0.0
    %1379 = vmatpush1.msra.mxu0 0.0
    %1380 = vmatprep.subr.mxu0 0.0
    %1381 = vmatpush1.msra.mxu0 0.0
    %1382 = vmatprep.subr.mxu0 0.0
    %1383 = vmatpush1.msra.mxu0 0.0
    %1384 = vmatprep.subr.mxu0 0.0
    %1385 = vmatpush1.msra.mxu0 0.0
    %1386 = vmatprep.subr.mxu0 0.0
    %1387 = vmatpush1.msra.mxu0 0.0
    %1388 = vmatprep.subr.mxu0 0.0
    %1389 = vmatpush1.msra.mxu0 0.0
    %1390 = vmatprep.subr.mxu0 0.0
    %1391 = vmatpush1.msra.mxu0 0.0
    %1392 = vmatprep.subr.mxu0 0.0
    %1393 = vmatpush1.msra.mxu0 0.0
    %1394 = vmatprep.subr.mxu0 0.0
    %1395 = vmatpush1.msra.mxu0 0.0
    %1396 = vmatprep.subr.mxu0 0.0
    %1397 = vmatpush1.msra.mxu0 0.0
    %1398 = vmatprep.subr.mxu0 0.0
    %1399 = vmatpush1.msra.mxu0 0.0
    %1400 = vmatprep.subr.mxu0 0.0
    %1401 = vmatpush1.msra.mxu0 0.0
    %1402 = vmatprep.subr.mxu0 0.0
    %1403 = vmatpush1.msra.mxu0 0.0
    %1404 = vmatprep.subr.mxu0 0.0
    %1405 = vmatpush1.msra.mxu0 0.0
    %1406 = vmatprep.subr.mxu0 0.0
    %1407 = vmatpush1.msra.mxu0 0.0
    %1408 = vmatprep.subr.mxu0 0.0
    %1409 = vmatpush1.msra.mxu0 0.0
    %1410 = vmatprep.subr.mxu0 0.0
    %1411 = vmatpush1.msra.mxu0 0.0
    %1412 = vmatprep.subr.mxu0 0.0
    %1413 = vmatpush1.msra.mxu0 0.0
    %1414 = vmatprep.subr.mxu0 0.0
    %1415 = vmatpush1.msra.mxu0 0.0
    %1416 = vmatprep.subr.mxu0 0.0
    %1417 = vmatpush1.msra.mxu0 0.0
    %1418 = vmatprep.subr.mxu0 0.0
    %1419 = vmatpush1.msra.mxu0 0.0
    %1420 = vmatprep.subr.mxu0 0.0
    %1421 = vmatpush1.msra.mxu0 0.0
    %1422 = vmatprep.subr.mxu0 0.0
    %1423 = vmatpush1.msra.mxu0 0.0
    %1424 = vmatprep.mubr.f32.mxu0 0.0
    %1425 = vmatmul.mubr.f32.gmra.mrb[0].mxu0 %v1358
    %v1426 = vpop.f32.mrb[0].mxu0
    %v1427 = vadd.f32 0.0, %v1426
    %v1428 = vpop.f32.mrb[0].mxu0
    %1429 = vdwg.mxu0
    %1430 = vrot.lane.b32.xlu0 %v200, 64
    %v1431 = vpop.permute.xlu0 %1430
    %v1434 = vsel %vm203, %v897, 0
    %1436 = vmatprep.subr.mxu0 0.0
    %1437 = vmatpush1.msra.mxu0 %v1431
    %1438 = vmatprep.subr.mxu0 0.0
    %1439 = vmatpush1.msra.mxu0 0.0
    %1440 = vmatprep.subr.mxu0 0.0
    %1441 = vmatpush1.msra.mxu0 0.0
    %1442 = vmatprep.subr.mxu0 0.0
    %1443 = vmatpush1.msra.mxu0 0.0
    %1444 = vmatprep.subr.mxu0 0.0
    %1445 = vmatpush1.msra.mxu0 0.0
    %1446 = vmatprep.subr.mxu0 0.0
    %1447 = vmatpush1.msra.mxu0 0.0
    %1448 = vmatprep.subr.mxu0 0.0
    %1449 = vmatpush1.msra.mxu0 0.0
    %1450 = vmatprep.subr.mxu0 0.0
    %1451 = vmatpush1.msra.mxu0 0.0
    %1452 = vmatprep.subr.mxu0 0.0
    %1453 = vmatpush1.msra.mxu0 0.0
    %1454 = vmatprep.subr.mxu0 0.0
    %1455 = vmatpush1.msra.mxu0 0.0
    %1456 = vmatprep.subr.mxu0 0.0
    %1457 = vmatpush1.msra.mxu0 0.0
    %1458 = vmatprep.subr.mxu0 0.0
    %1459 = vmatpush1.msra.mxu0 0.0
    %1460 = vmatprep.subr.mxu0 0.0
    %1461 = vmatpush1.msra.mxu0 0.0
    %1462 = vmatprep.subr.mxu0 0.0
    %1463 = vmatpush1.msra.mxu0 0.0
    %1464 = vmatprep.subr.mxu0 0.0
    %1465 = vmatpush1.msra.mxu0 0.0
    %1466 = vmatprep.subr.mxu0 0.0
    %1467 = vmatpush1.msra.mxu0 0.0
    %1468 = vmatprep.subr.mxu0 0.0
    %1469 = vmatpush1.msra.mxu0 0.0
    %1470 = vmatprep.subr.mxu0 0.0
    %1471 = vmatpush1.msra.mxu0 0.0
    %1472 = vmatprep.subr.mxu0 0.0
    %1473 = vmatpush1.msra.mxu0 0.0
    %1474 = vmatprep.subr.mxu0 0.0
    %1475 = vmatpush1.msra.mxu0 0.0
    %1476 = vmatprep.subr.mxu0 0.0
    %1477 = vmatpush1.msra.mxu0 0.0
    %1478 = vmatprep.subr.mxu0 0.0
    %1479 = vmatpush1.msra.mxu0 0.0
    %1480 = vmatprep.subr.mxu0 0.0
    %1481 = vmatpush1.msra.mxu0 0.0
    %1482 = vmatprep.subr.mxu0 0.0
    %1483 = vmatpush1.msra.mxu0 0.0
    %1484 = vmatprep.subr.mxu0 0.0
    %1485 = vmatpush1.msra.mxu0 0.0
    %1486 = vmatprep.subr.mxu0 0.0
    %1487 = vmatpush1.msra.mxu0 0.0
    %1488 = vmatprep.subr.mxu0 0.0
    %1489 = vmatpush1.msra.mxu0 0.0
    %1490 = vmatprep.subr.mxu0 0.0
    %1491 = vmatpush1.msra.mxu0 0.0
    %1492 = vmatprep.subr.mxu0 0.0
    %1493 = vmatpush1.msra.mxu0 0.0
    %1494 = vmatprep.subr.mxu0 0.0
    %1495 = vmatpush1.msra.mxu0 0.0
    %1496 = vmatprep.subr.mxu0 0.0
    %1497 = vmatpush1.msra.mxu0 0.0
    %1498 = vmatprep.subr.mxu0 0.0
    %1499 = vmatpush1.msra.mxu0 0.0
    %1500 = vmatprep.mubr.f32.mxu0 0.0
    %1501 = vmatmul.mubr.f32.gmra.mrb[0].mxu0 %v1434
    %v1502 = vpop.f32.mrb[0].mxu0
    %v1503 = vadd.f32 0.0, %v1502
    %v1504 = vpop.f32.mrb[0].mxu0
    %1505 = vdwg.mxu0
    %1508 = vrot.lane.b32.xlu0 %v1123, 8
    %v1509 = vpop.permute.xlu0 %1508
    %1510 = vrot.lane.b32.xlu0 %v1199, 8
    %v1511 = vpop.permute.xlu0 %1510
    %1516 = vrot.lane.b32.xlu0 %v1275, 16
    %v1517 = vpop.permute.xlu0 %1516
    %1518 = vrot.lane.b32.xlu0 %v1351, 16
    %v1519 = vpop.permute.xlu0 %1518
    %1524 = vrot.lane.b32.xlu0 %v1427, 24
    %v1525 = vpop.permute.xlu0 %1524
    %1526 = vrot.lane.b32.xlu0 %v1503, 24
    %v1527 = vpop.permute.xlu0 %1526
    %v1530 = vsel %vm203, %v971, %v1509
    %v1531 = vsel %vm203, %v1047, %v1511
    %vm1532 = vcmask 130048
    %v1533 = vsel %vm1532, %v1530, %v1517
    %v1534 = vsel %vm1532, %v1531, %v1519
    %vm1535 = vcmask 195584
    %v1536 = vsel %vm1535, %v1533, %v1525
    %v1537 = vsel %vm1535, %v1534, %v1527
    %v1538 = vld [vmem:[%s4] sm:$0xff]
    %v1539 = vld [vmem:[%s4 + $0x8] sm:$0xff]
    %v1540 = vld [vmem:[%s4 + $0x10] sm:$0xff]
    %v1541 = vld [vmem:[%s4 + $0x18] sm:$0xff]
    %v1542 = vld [vmem:[%s5] sm:$0x1]
    %v1544 = vlaneseq
    %v1545 = vshrl.u32 %v1544, 7
    %v1546 = vsub.s32 0, %v1545
    %v1547 = vrot.slane %v1542, %v1546
    %v1550 = vsel %vm58, %v1536, 0
    %v1553 = vsel %vm58, %v1537, 0
    %1555 = vmatprep.subr.mxu0 0.0
    %1556 = vmatpush1.msra.mxu0 %v1538
    %1557 = vmatprep.subr.mxu0 0.0
    %1558 = vmatpush1.msra.mxu0 %v1539
    %1559 = vmatprep.subr.mxu0 0.0
    %1560 = vmatpush1.msra.mxu0 %v1540
    %1561 = vmatprep.subr.mxu0 0.0
    %1562 = vmatpush1.msra.mxu0 %v1541
    %1563 = vmatprep.subr.mxu0 0.0
    %1564 = vmatpush1.msra.mxu0 0.0
    %1565 = vmatprep.subr.mxu0 0.0
    %1566 = vmatpush1.msra.mxu0 0.0
    %1567 = vmatprep.subr.mxu0 0.0
    %1568 = vmatpush1.msra.mxu0 0.0
    %1569 = vmatprep.subr.mxu0 0.0
    %1570 = vmatpush1.msra.mxu0 0.0
    %1571 = vmatprep.subr.mxu0 0.0
    %1572 = vmatpush1.msra.mxu0 0.0
    %1573 = vmatprep.subr.mxu0 0.0
    %1574 = vmatpush1.msra.mxu0 0.0
    %1575 = vmatprep.subr.mxu0 0.0
    %1576 = vmatpush1.msra.mxu0 0.0
    %1577 = vmatprep.subr.mxu0 0.0
    %1578 = vmatpush1.msra.mxu0 0.0
    %1579 = vmatprep.subr.mxu0 0.0
    %1580 = vmatpush1.msra.mxu0 0.0
    %1581 = vmatprep.subr.mxu0 0.0
    %1582 = vmatpush1.msra.mxu0 0.0
    %1583 = vmatprep.subr.mxu0 0.0
    %1584 = vmatpush1.msra.mxu0 0.0
    %1585 = vmatprep.subr.mxu0 0.0
    %1586 = vmatpush1.msra.mxu0 0.0
    %1587 = vmatprep.subr.mxu0 0.0
    %1588 = vmatpush1.msra.mxu0 0.0
    %1589 = vmatprep.subr.mxu0 0.0
    %1590 = vmatpush1.msra.mxu0 0.0
    %1591 = vmatprep.subr.mxu0 0.0
    %1592 = vmatpush1.msra.mxu0 0.0
    %1593 = vmatprep.subr.mxu0 0.0
    %1594 = vmatpush1.msra.mxu0 0.0
    %1595 = vmatprep.subr.mxu0 0.0
    %1596 = vmatpush1.msra.mxu0 0.0
    %1597 = vmatprep.subr.mxu0 0.0
    %1598 = vmatpush1.msra.mxu0 0.0
    %1599 = vmatprep.subr.mxu0 0.0
    %1600 = vmatpush1.msra.mxu0 0.0
    %1601 = vmatprep.subr.mxu0 0.0
    %1602 = vmatpush1.msra.mxu0 0.0
    %1603 = vmatprep.subr.mxu0 0.0
    %1604 = vmatpush1.msra.mxu0 0.0
    %1605 = vmatprep.subr.mxu0 0.0
    %1606 = vmatpush1.msra.mxu0 0.0
    %1607 = vmatprep.subr.mxu0 0.0
    %1608 = vmatpush1.msra.mxu0 0.0
    %1609 = vmatprep.subr.mxu0 0.0
    %1610 = vmatpush1.msra.mxu0 0.0
    %1611 = vmatprep.subr.mxu0 0.0
    %1612 = vmatpush1.msra.mxu0 0.0
    %1613 = vmatprep.subr.mxu0 0.0
    %1614 = vmatpush1.msra.mxu0 0.0
    %1615 = vmatprep.subr.mxu0 0.0
    %1616 = vmatpush1.msra.mxu0 0.0
    %1617 = vmatprep.subr.mxu0 0.0
    %1618 = vmatpush1.msra.mxu0 0.0
    %1619 = vmatprep.mubr.f32.mxu0 0.0
    %1620 = vmatmul.mubr.f32.gmra.mrb[0].mxu0 %v1550
    %v1621 = vpop.f32.mrb[0].mxu0
    %v1622 = vadd.f32 %v1547, %v1621
    %v1623 = vpop.f32.mrb[0].mxu0
    %1624 = vmatprep.mubr.f32.mxu0 0.0
    %1625 = vmatmul.mubr.f32.gmra.mrb[0].mxu0 %v1553
    %v1626 = vpop.f32.mrb[0].mxu0
    %v1627 = vadd.f32 %v1547, %v1626
    %v1628 = vpop.f32.mrb[0].mxu0
    %1629 = vdwg.mxu0
    %v1630 = vadd.f32 %v48, %v1622
    %v1631 = vadd.f32 %v49, %v1627
    %v1632 = vld [vmem:[%s6] sm:$0x1]
    %v1633 = vld [vmem:[%s7] sm:$0x1]
    %v1634 = vsel %vm58, %v1630, 0.0
    %1635 = vadd.xlane.f32.xlu0 %v1634
    %v1636 = vpop.xlane.xlu0 %1635
    %v1637 = vsel %vm58, %v1631, 0.0
    %1638 = vadd.xlane.f32.xlu0 %v1637
    %v1639 = vpop.xlane.xlu0 %1638
    %v1640 = vmul.f32 %v1636, %v65
    %v1641 = vmul.f32 %v1639, %v65
    %v1642 = vsub.f32 %v1630, %v1640
    %v1643 = vsub.f32 %v1631, %v1641
    %v1644 = vmul.f32 %v1642, %v1642
    %v1645 = vmul.f32 %v1643, %v1643
    %v1646 = vsel %vm58, %v1644, 0.0
    %1647 = vadd.xlane.f32.xlu0 %v1646
    %v1648 = vpop.xlane.xlu0 %1647
    %v1649 = vsel %vm58, %v1645, 0.0
    %1650 = vadd.xlane.f32.xlu0 %v1649
    %v1651 = vpop.xlane.xlu0 %1650
    %v1652 = vmul.f32 %v1648, %v65
    %v1653 = vmul.f32 %v1651, %v65
    %v1654 = vadd.f32 %v1652, 1e-05
    %v1655 = vadd.f32 %v1653, 1e-05
    %v1656 = vrsqrt.pop %v1654
    %v1657 = vrsqrt.pop %v1655
    %v1658 = vmul.f32 %v1642, %v1656
    %v1659 = vmul.f32 %v1643, %v1657
    %v1661 = vlaneseq
    %v1662 = vshrl.u32 %v1661, 7
    %v1663 = vsub.s32 0, %v1662
    %v1664 = vrot.slane %v1632, %v1663
    %v1666 = vmul.f32 %v1658, %v1664
    %v1667 = vmul.f32 %v1659, %v1664
    %v1669 = vlaneseq
    %v1670 = vshrl.u32 %v1669, 7
    %v1671 = vsub.s32 0, %v1670
    %v1672 = vrot.slane %v1633, %v1671
    %v1674 = vadd.f32 %v1666, %v1672
    %v1675 = vadd.f32 %v1667, %v1672
    %v1676 = vld [vmem:[%s8] sm:$0xff]
    %v1677 = vld [vmem:[%s8 + $0x8] sm:$0xff]
    %v1678 = vld [vmem:[%s8 + $0x10] sm:$0xff]
    %v1679 = vld [vmem:[%s8 + $0x18] sm:$0xff]
    %v1680 = vld [vmem:[%s9] sm:$0x1]
    %v1682 = vlaneseq
    %v1683 = vshrl.u32 %v1682, 7
    %v1684 = vsub.s32 0, %v1683
    %v1685 = vrot.slane %v1680, %v1684
    %v1688 = vsel %vm58, %v1674, 0
    %v1691 = vsel %vm58, %v1675, 0
    %1693 = vmatprep.subr.mxu0 0.0
    %1694 = vmatpush1.msra.mxu0 %v1676
    %1695 = vmatprep.subr.mxu0 0.0
    %1696 = vmatpush1.msra.mxu0 %v1677
    %1697 = vmatprep.subr.mxu0 0.0
    %1698 = vmatpush1.msra.mxu0 %v1678
    %1699 = vmatprep.subr.mxu0 0.0
    %1700 = vmatpush1.msra.mxu0 %v1679
    %1701 = vmatprep.subr.mxu0 0.0
    %1702 = vmatpush1.msra.mxu0 0.0
    %1703 = vmatprep.subr.mxu0 0.0
    %1704 = vmatpush1.msra.mxu0 0.0
    %1705 = vmatprep.subr.mxu0 0.0
    %1706 = vmatpush1.msra.mxu0 0.0
    %1707 = vmatprep.subr.mxu0 0.0
    %1708 = vmatpush1.msra.mxu0 0.0
    %1709 = vmatprep.subr.mxu0 0.0
    %1710 = vmatpush1.msra.mxu0 0.0
    %1711 = vmatprep.subr.mxu0 0.0
    %1712 = vmatpush1.msra.mxu0 0.0
    %1713 = vmatprep.subr.mxu0 0.0
    %1714 = vmatpush1.msra.mxu0 0.0
    %1715 = vmatprep.subr.mxu0 0.0
    %1716 = vmatpush1.msra.mxu0 0.0
    %1717 = vmatprep.subr.mxu0 0.0
    %1718 = vmatpush1.msra.mxu0 0.0
    %1719 = vmatprep.subr.mxu0 0.0
    %1720 = vmatpush1.msra.mxu0 0.0
    %1721 = vmatprep.subr.mxu0 0.0
    %1722 = vmatpush1.msra.mxu0 0.0
    %1723 = vmatprep.subr.mxu0 0.0
    %1724 = vmatpush1.msra.mxu0 0.0
    %1725 = vmatprep.subr.mxu0 0.0
    %1726 = vmatpush1.msra.mxu0 0.0
    %1727 = vmatprep.subr.mxu0 0.0
    %1728 = vmatpush1.msra.mxu0 0.0
    %1729 = vmatprep.subr.mxu0 0.0
    %1730 = vmatpush1.msra.mxu0 0.0
    %1731 = vmatprep.subr.mxu0 0.0
    %1732 = vmatpush1.msra.mxu0 0.0
    %1733 = vmatprep.subr.mxu0 0.0
    %1734 = vmatpush1.msra.mxu0 0.0
    %1735 = vmatprep.subr.mxu0 0.0
    %1736 = vmatpush1.msra.mxu0 0.0
    %1737 = vmatprep.subr.mxu0 0.0
    %1738 = vmatpush1.msra.mxu0 0.0
    %1739 = vmatprep.subr.mxu0 0.0
    %1740 = vmatpush1.msra.mxu0 0.0
    %1741 = vmatprep.subr.mxu0 0.0
    %1742 = vmatpush1.msra.mxu0 0.0
    %1743 = vmatprep.subr.mxu0 0.0
    %1744 = vmatpush1.msra.mxu0 0.0
    %1745 = vmatprep.subr.mxu0 0.0
    %1746 = vmatpush1.msra.mxu0 0.0
    %1747 = vmatprep.subr.mxu0 0.0
    %1748 = vmatpush1.msra.mxu0 0.0
    %1749 = vmatprep.subr.mxu0 0.0
    %1750 = vmatpush1.msra.mxu0 0.0
    %1751 = vmatprep.subr.mxu0 0.0
    %1752 = vmatpush1.msra.mxu0 0.0
    %1753 = vmatprep.subr.mxu0 0.0
    %1754 = vmatpush1.msra.mxu0 0.0
    %1755 = vmatprep.subr.mxu0 0.0
    %1756 = vmatpush1.msra.mxu0 0.0
    %1757 = vmatprep.mubr.f32.mxu0 0.0
    %1758 = vmatmul.mubr.f32.gmra.mrb[0].mxu0 %v1688
    %v1759 = vpop.f32.mrb[0].mxu0
    %v1760 = vadd.f32 %v1685, %v1759
    %v1761 = vpop.f32.mrb[0].mxu0
    %1762 = vmatprep.mubr.f32.mxu0 0.0
    %1763 = vmatmul.mubr.f32.gmra.mrb[0].mxu0 %v1691
    %v1764 = vpop.f32.mrb[0].mxu0
    %v1765 = vadd.f32 %v1685, %v1764
    %v1766 = vpop.f32.mrb[0].mxu0
    %1767 = vdwg.mxu0
    %v1768 = vmax.f32 %v1760, 0.0
    %v1769 = vmax.f32 %v1765, 0.0
    %v1770 = vld [vmem:[%s10] sm:$0xff]
    %v1771 = vld [vmem:[%s10 + $0x8] sm:$0xff]
    %v1772 = vld [vmem:[%s10 + $0x10] sm:$0xff]
    %v1773 = vld [vmem:[%s10 + $0x18] sm:$0xff]
    %v1774 = vld [vmem:[%s10 + $0x20] sm:$0xff]
    %v1775 = vld [vmem:[%s10 + $0x28] sm:$0xff]
    %v1776 = vld [vmem:[%s10 + $0x30] sm:$0xff]
    %v1777 = vld [vmem:[%s10 + $0x38] sm:$0xff]
    %v1778 = vld [vmem:[%s10 + $0x40] sm:$0xff]
    %v1779 = vld [vmem:[%s10 + $0x48] sm:$0xff]
    %v1780 = vld [vmem:[%s10 + $0x50] sm:$0xff]
    %v1781 = vld [vmem:[%s10 + $0x58] sm:$0xff]
    %v1782 = vld [vmem:[%s10 + $0x60] sm:$0xff]
    %v1783 = vld [vmem:[%s10 + $0x68] sm:$0xff]
    %v1784 = vld [vmem:[%s10 + $0x70] sm:$0xff]
    %v1785 = vld [vmem:[%s10 + $0x78] sm:$0xff]
    %v1786 = vld [vmem:[%s11] sm:$0x1]
    %v1788 = vlaneseq
    %v1789 = vshrl.u32 %v1788, 7
    %v1790 = vsub.s32 0, %v1789
    %v1791 = vrot.slane %v1786, %v1790
    %1793 = vmatprep.subr.mxu0 0.0
    %1794 = vmatpush1.msra.mxu0 %v1770
    %1795 = vmatprep.subr.mxu0 0.0
    %1796 = vmatpush1.msra.mxu0 %v1771
    %1797 = vmatprep.subr.mxu0 0.0
    %1798 = vmatpush1.msra.mxu0 %v1772
    %1799 = vmatprep.subr.mxu0 0.0
    %1800 = vmatpush1.msra.mxu0 %v1773
    %1801 = vmatprep.subr.mxu0 0.0
    %1802 = vmatpush1.msra.mxu0 %v1774
    %1803 = vmatprep.subr.mxu0 0.0
    %1804 = vmatpush1.msra.mxu0 %v1775
    %1805 = vmatprep.subr.mxu0 0.0
    %1806 = vmatpush1.msra.mxu0 %v1776
    %1807 = vmatprep.subr.mxu0 0.0
    %1808 = vmatpush1.msra.mxu0 %v1777
    %1809 = vmatprep.subr.mxu0 0.0
    %1810 = vmatpush1.msra.mxu0 %v1778
    %1811 = vmatprep.subr.mxu0 0.0
    %1812 = vmatpush1.msra.mxu0 %v1779
    %1813 = vmatprep.subr.mxu0 0.0
    %1814 = vmatpush1.msra.mxu0 %v1780
    %1815 = vmatprep.subr.mxu0 0.0
    %1816 = vmatpush1.msra.mxu0 %v1781
    %1817 = vmatprep.subr.mxu0 0.0
    %1818 = vmatpush1.msra.mxu0 %v1782
    %1819 = vmatprep.subr.mxu0 0.0
    %1820 = vmatpush1.msra.mxu0 %v1783
    %1821 = vmatprep.subr.mxu0 0.0
    %1822 = vmatpush1.msra.mxu0 %v1784
    %1823 = vmatprep.subr.mxu0 0.0
    %1824 = vmatpush1.msra.mxu0 %v1785
    %1825 = vmatprep.subr.mxu0 0.0
    %1826 = vmatpush1.msra.mxu0 0.0
    %1827 = vmatprep.subr.mxu0 0.0
    %1828 = vmatpush1.msra.mxu0 0.0
    %1829 = vmatprep.subr.mxu0 0.0
    %1830 = vmatpush1.msra.mxu0 0.0
    %1831 = vmatprep.subr.mxu0 0.0
    %1832 = vmatpush1.msra.mxu0 0.0
    %1833 = vmatprep.subr.mxu0 0.0
    %1834 = vmatpush1.msra.mxu0 0.0
    %1835 = vmatprep.subr.mxu0 0.0
    %1836 = vmatpush1.msra.mxu0 0.0
    %1837 = vmatprep.subr.mxu0 0.0
    %1838 = vmatpush1.msra.mxu0 0.0
    %1839 = vmatprep.subr.mxu0 0.0
    %1840 = vmatpush1.msra.mxu0 0.0
    %1841 = vmatprep.subr.mxu0 0.0
    %1842 = vmatpush1.msra.mxu0 0.0
    %1843 = vmatprep.subr.mxu0 0.0
    %1844 = vmatpush1.msra.mxu0 0.0
    %1845 = vmatprep.subr.mxu0 0.0
    %1846 = vmatpush1.msra.mxu0 0.0
    %1847 = vmatprep.subr.mxu0 0.0
    %1848 = vmatpush1.msra.mxu0 0.0
    %1849 = vmatprep.subr.mxu0 0.0
    %1850 = vmatpush1.msra.mxu0 0.0
    %1851 = vmatprep.subr.mxu0 0.0
    %1852 = vmatpush1.msra.mxu0 0.0
    %1853 = vmatprep.subr.mxu0 0.0
    %1854 = vmatpush1.msra.mxu0 0.0
    %1855 = vmatprep.subr.mxu0 0.0
    %1856 = vmatpush1.msra.mxu0 0.0
    %1857 = vmatprep.mubr.f32.mxu0 0.0
    %1858 = vmatmul.mubr.f32.gmra.mrb[0].mxu0 %v1768
    %v1859 = vpop.f32.mrb[0].mxu0
    %v1860 = vadd.f32 %v1791, %v1859
    %v1861 = vpop.f32.mrb[0].mxu0
    %1862 = vmatprep.mubr.f32.mxu0 0.0
    %1863 = vmatmul.mubr.f32.gmra.mrb[0].mxu0 %v1769
    %v1864 = vpop.f32.mrb[0].mxu0
    %v1865 = vadd.f32 %v1791, %v1864
    %v1866 = vpop.f32.mrb[0].mxu0
    %1867 = vdwg.mxu0
    %v1868 = vadd.f32 %v1630, %v1860
    %v1869 = vadd.f32 %v1631, %v1865
    %s1870 = scalar_lea.vmem %s1, 1
    %v1871 = vld [vmem:[%s1870] sm:$0x1]
    %s1872 = scalar_lea.vmem %s2, 1
    %v1873 = vld [vmem:[%s1872] sm:$0x1]
    %v1874 = vsel %vm58, %v1868, 0.0
    %1875 = vadd.xlane.f32.xlu0 %v1874
    %v1876 = vpop.xlane.xlu0 %1875
    %v1877 = vsel %vm58, %v1869, 0.0
    %1878 = vadd.xlane.f32.xlu0 %v1877
    %v1879 = vpop.xlane.xlu0 %1878
    %v1880 = vmul.f32 %v1876, %v65
    %v1881 = vmul.f32 %v1879, %v65
    %v1882 = vsub.f32 %v1868, %v1880
    %v1883 = vsub.f32 %v1869, %v1881
    %v1884 = vmul.f32 %v1882, %v1882
    %v1885 = vmul.f32 %v1883, %v1883
    %v1886 = vsel %vm58, %v1884, 0.0
    %1887 = vadd.xlane.f32.xlu0 %v1886
    %v1888 = vpop.xlane.xlu0 %1887
    %v1889 = vsel %vm58, %v1885, 0.0
    %1890 = vadd.xlane.f32.xlu0 %v1889
    %v1891 = vpop.xlane.xlu0 %1890
    %v1892 = vmul.f32 %v1888, %v65
    %v1893 = vmul.f32 %v1891, %v65
    %v1894 = vadd.f32 %v1892, 1e-05
    %v1895 = vadd.f32 %v1893, 1e-05
    %v1896 = vrsqrt.pop %v1894
    %v1897 = vrsqrt.pop %v1895
    %v1898 = vmul.f32 %v1882, %v1896
    %v1899 = vmul.f32 %v1883, %v1897
    %v1901 = vlaneseq
    %v1902 = vshrl.u32 %v1901, 7
    %v1903 = vsub.s32 0, %v1902
    %v1904 = vrot.slane %v1871, %v1903
    %v1906 = vmul.f32 %v1898, %v1904
    %v1907 = vmul.f32 %v1899, %v1904
    %v1909 = vlaneseq
    %v1910 = vshrl.u32 %v1909, 7
    %v1911 = vsub.s32 0, %v1910
    %v1912 = vrot.slane %v1873, %v1911
    %v1914 = vadd.f32 %v1906, %v1912
    %v1915 = vadd.f32 %v1907, %v1912
    %s1916 = scalar_lea.vmem %s3, 32
    %v1917 = vld [vmem:[%s1916] sm:$0xff]
    %v1918 = vld [vmem:[%s1916 + $0x8] sm:$0xff]
    %v1919 = vld [vmem:[%s1916 + $0x10] sm:$0xff]
    %v1920 = vld [vmem:[%s1916 + $0x18] sm:$0xff]
    %v1922 = vsel %vm58, %v1914, 0
    %v1925 = vsel %vm58, %v1915, 0
    %1927 = vmatprep.subr.mxu0 0.0
    %1928 = vmatpush1.msra.mxu0 %v1917
    %1929 = vmatprep.subr.mxu0 0.0
    %1930 = vmatpush1.msra.mxu0 %v1918
    %1931 = vmatprep.subr.mxu0 0.0
    %1932 = vmatpush1.msra.mxu0 %v1919
    %1933 = vmatprep.subr.mxu0 0.0
    %1934 = vmatpush1.msra.mxu0 %v1920
    %1935 = vmatprep.subr.mxu0 0.0
    %1936 = vmatpush1.msra.mxu0 0.0
    %1937 = vmatprep.subr.mxu0 0.0
    %1938 = vmatpush1.msra.mxu0 0.0
    %1939 = vmatprep.subr.mxu0 0.0
    %1940 = vmatpush1.msra.mxu0 0.0
    %1941 = vmatprep.subr.mxu0 0.0
    %1942 = vmatpush1.msra.mxu0 0.0
    %1943 = vmatprep.subr.mxu0 0.0
    %1944 = vmatpush1.msra.mxu0 0.0
    %1945 = vmatprep.subr.mxu0 0.0
    %1946 = vmatpush1.msra.mxu0 0.0
    %1947 = vmatprep.subr.mxu0 0.0
    %1948 = vmatpush1.msra.mxu0 0.0
    %1949 = vmatprep.subr.mxu0 0.0
    %1950 = vmatpush1.msra.mxu0 0.0
    %1951 = vmatprep.subr.mxu0 0.0
    %1952 = vmatpush1.msra.mxu0 0.0
    %1953 = vmatprep.subr.mxu0 0.0
    %1954 = vmatpush1.msra.mxu0 0.0
    %1955 = vmatprep.subr.mxu0 0.0
    %1956 = vmatpush1.msra.mxu0 0.0
    %1957 = vmatprep.subr.mxu0 0.0
    %1958 = vmatpush1.msra.mxu0 0.0
    %1959 = vmatprep.subr.mxu0 0.0
    %1960 = vmatpush1.msra.mxu0 0.0
    %1961 = vmatprep.subr.mxu0 0.0
    %1962 = vmatpush1.msra.mxu0 0.0
    %1963 = vmatprep.subr.mxu0 0.0
    %1964 = vmatpush1.msra.mxu0 0.0
    %1965 = vmatprep.subr.mxu0 0.0
    %1966 = vmatpush1.msra.mxu0 0.0
    %1967 = vmatprep.subr.mxu0 0.0
    %1968 = vmatpush1.msra.mxu0 0.0
    %1969 = vmatprep.subr.mxu0 0.0
    %1970 = vmatpush1.msra.mxu0 0.0
    %1971 = vmatprep.subr.mxu0 0.0
    %1972 = vmatpush1.msra.mxu0 0.0
    %1973 = vmatprep.subr.mxu0 0.0
    %1974 = vmatpush1.msra.mxu0 0.0
    %1975 = vmatprep.subr.mxu0 0.0
    %1976 = vmatpush1.msra.mxu0 0.0
    %1977 = vmatprep.subr.mxu0 0.0
    %1978 = vmatpush1.msra.mxu0 0.0
    %1979 = vmatprep.subr.mxu0 0.0
    %1980 = vmatpush1.msra.mxu0 0.0
    %1981 = vmatprep.subr.mxu0 0.0
    %1982 = vmatpush1.msra.mxu0 0.0
    %1983 = vmatprep.subr.mxu0 0.0
    %1984 = vmatpush1.msra.mxu0 0.0
    %1985 = vmatprep.subr.mxu0 0.0
    %1986 = vmatpush1.msra.mxu0 0.0
    %1987 = vmatprep.subr.mxu0 0.0
    %1988 = vmatpush1.msra.mxu0 0.0
    %1989 = vmatprep.subr.mxu0 0.0
    %1990 = vmatpush1.msra.mxu0 0.0
    %1991 = vmatprep.mubr.f32.mxu0 0.0
    %1992 = vmatmul.mubr.f32.gmra.mrb[0].mxu0 %v1922
    %v1993 = vpop.f32.mrb[0].mxu0
    %v1994 = vadd.f32 0.0, %v1993
    %v1995 = vpop.f32.mrb[0].mxu0
    %1996 = vmatprep.mubr.f32.mxu0 0.0
    %1997 = vmatmul.mubr.f32.gmra.mrb[0].mxu0 %v1925
    %v1998 = vpop.f32.mrb[0].mxu0
    %v1999 = vadd.f32 0.0, %v1998
    %v2000 = vpop.f32.mrb[0].mxu0
    %2001 = vdwg.mxu0
    %2004 = vrot.lane.b32.xlu0 %v1994, 120
    %v2005 = vpop.permute.xlu0 %2004
    %2006 = vrot.lane.b32.xlu0 %v1999, 120
    %v2007 = vpop.permute.xlu0 %2006
    %2008 = vrot.lane.b32.xlu0 %v1994, 112
    %v2009 = vpop.permute.xlu0 %2008
    %2010 = vrot.lane.b32.xlu0 %v1999, 112
    %v2011 = vpop.permute.xlu0 %2010
    %2012 = vrot.lane.b32.xlu0 %v1994, 104
    %v2013 = vpop.permute.xlu0 %2012
    %2014 = vrot.lane.b32.xlu0 %v1999, 104
    %v2015 = vpop.permute.xlu0 %2014
    %2016 = vrot.lane.b32.xlu0 %v1994, 96
    %v2017 = vpop.permute.xlu0 %2016
    %v2018 = vsel %vm203, %v1994, 0
    %v2020 = vsel %vm203, %v2017, 0
    %2022 = vmatprep.subr.mxu0 0.0
    %2023 = vmatpush1.xpose.msra.mxu0 %v2020
    %2024 = vmatprep.subr.mxu0 0.0
    %2025 = vmatpush1.xpose.msra.mxu0 0.0
    %2026 = vmatprep.subr.mxu0 0.0
    %2027 = vmatpush1.xpose.msra.mxu0 0.0
    %2028 = vmatprep.subr.mxu0 0.0
    %2029 = vmatpush1.xpose.msra.mxu0 0.0
    %2030 = vmatprep.subr.mxu0 0.0
    %2031 = vmatpush1.xpose.msra.mxu0 0.0
    %2032 = vmatprep.subr.mxu0 0.0
    %2033 = vmatpush1.xpose.msra.mxu0 0.0
    %2034 = vmatprep.subr.mxu0 0.0
    %2035 = vmatpush1.xpose.msra.mxu0 0.0
    %2036 = vmatprep.subr.mxu0 0.0
    %2037 = vmatpush1.xpose.msra.mxu0 0.0
    %2038 = vmatprep.subr.mxu0 0.0
    %2039 = vmatpush1.xpose.msra.mxu0 0.0
    %2040 = vmatprep.subr.mxu0 0.0
    %2041 = vmatpush1.xpose.msra.mxu0 0.0
    %2042 = vmatprep.subr.mxu0 0.0
    %2043 = vmatpush1.xpose.msra.mxu0 0.0
    %2044 = vmatprep.subr.mxu0 0.0
    %2045 = vmatpush1.xpose.msra.mxu0 0.0
    %2046 = vmatprep.subr.mxu0 0.0
    %2047 = vmatpush1.xpose.msra.mxu0 0.0
    %2048 = vmatprep.subr.mxu0 0.0
    %2049 = vmatpush1.xpose.msra.mxu0 0.0
    %2050 = vmatprep.subr.mxu0 0.0
    %2051 = vmatpush1.xpose.msra.mxu0 0.0
    %2052 = vmatprep.subr.mxu0 0.0
    %2053 = vmatpush1.xpose.msra.mxu0 0.0
    %2054 = vmatprep.subr.mxu0 0.0
    %2055 = vmatpush1.xpose.msra.mxu0 0.0
    %2056 = vmatprep.subr.mxu0 0.0
    %2057 = vmatpush1.xpose.msra.mxu0 0.0
    %2058 = vmatprep.subr.mxu0 0.0
    %2059 = vmatpush1.xpose.msra.mxu0 0.0
    %2060 = vmatprep.subr.mxu0 0.0
    %2061 = vmatpush1.xpose.msra.mxu0 0.0
    %2062 = vmatprep.subr.mxu0 0.0
    %2063 = vmatpush1.xpose.msra.mxu0 0.0
    %2064 = vmatprep.subr.mxu0 0.0
    %2065 = vmatpush1.xpose.msra.mxu0 0.0
    %2066 = vmatprep.subr.mxu0 0.0
    %2067 = vmatpush1.xpose.msra.mxu0 0.0
    %2068 = vmatprep.subr.mxu0 0.0
    %2069 = vmatpush1.xpose.msra.mxu0 0.0
    %2070 = vmatprep.subr.mxu0 0.0
    %2071 = vmatpush1.xpose.msra.mxu0 0.0
    %2072 = vmatprep.subr.mxu0 0.0
    %2073 = vmatpush1.xpose.msra.mxu0 0.0
    %2074 = vmatprep.subr.mxu0 0.0
    %2075 = vmatpush1.xpose.msra.mxu0 0.0
    %2076 = vmatprep.subr.mxu0 0.0
    %2077 = vmatpush1.xpose.msra.mxu0 0.0
    %2078 = vmatprep.subr.mxu0 0.0
    %2079 = vmatpush1.xpose.msra.mxu0 0.0
    %2080 = vmatprep.subr.mxu0 0.0
    %2081 = vmatpush1.xpose.msra.mxu0 0.0
    %2082 = vmatprep.subr.mxu0 0.0
    %2083 = vmatpush1.xpose.msra.mxu0 0.0
    %2084 = vmatprep.subr.mxu0 0.0
    %2085 = vmatpush1.xpose.msra.mxu0 0.0
    %2086 = vmatprep.mubr.f32.mxu0 0.0
    %2087 = vmatmul.mubr.f32.gmra.mrb[0].mxu0 %v2018
    %v2088 = vpop.f32.mrb[0].mxu0
    %v2089 = vadd.f32 %v55, %v2088
    %v2090 = vpop.f32.mrb[0].mxu0
    %2091 = vdwg.mxu0
    %2092 = vrot.lane.b32.xlu0 %v1999, 96
    %v2093 = vpop.permute.xlu0 %2092
    %v2094 = vsel %vm203, %v1999, 0
    %v2096 = vsel %vm203, %v2093, 0
    %2098 = vmatprep.subr.mxu0 0.0
    %2099 = vmatpush1.xpose.msra.mxu0 %v2096
    %2100 = vmatprep.subr.mxu0 0.0
    %2101 = vmatpush1.xpose.msra.mxu0 0.0
    %2102 = vmatprep.subr.mxu0 0.0
    %2103 = vmatpush1.xpose.msra.mxu0 0.0
    %2104 = vmatprep.subr.mxu0 0.0
    %2105 = vmatpush1.xpose.msra.mxu0 0.0
    %2106 = vmatprep.subr.mxu0 0.0
    %2107 = vmatpush1.xpose.msra.mxu0 0.0
    %2108 = vmatprep.subr.mxu0 0.0
    %2109 = vmatpush1.xpose.msra.mxu0 0.0
    %2110 = vmatprep.subr.mxu0 0.0
    %2111 = vmatpush1.xpose.msra.mxu0 0.0
    %2112 = vmatprep.subr.mxu0 0.0
    %2113 = vmatpush1.xpose.msra.mxu0 0.0
    %2114 = vmatprep.subr.mxu0 0.0
    %2115 = vmatpush1.xpose.msra.mxu0 0.0
    %2116 = vmatprep.subr.mxu0 0.0
    %2117 = vmatpush1.xpose.msra.mxu0 0.0
    %2118 = vmatprep.subr.mxu0 0.0
    %2119 = vmatpush1.xpose.msra.mxu0 0.0
    %2120 = vmatprep.subr.mxu0 0.0
    %2121 = vmatpush1.xpose.msra.mxu0 0.0
    %2122 = vmatprep.subr.mxu0 0.0
    %2123 = vmatpush1.xpose.msra.mxu0 0.0
    %2124 = vmatprep.subr.mxu0 0.0
    %2125 = vmatpush1.xpose.msra.mxu0 0.0
    %2126 = vmatprep.subr.mxu0 0.0
    %2127 = vmatpush1.xpose.msra.mxu0 0.0
    %2128 = vmatprep.subr.mxu0 0.0
    %2129 = vmatpush1.xpose.msra.mxu0 0.0
    %2130 = vmatprep.subr.mxu0 0.0
    %2131 = vmatpush1.xpose.msra.mxu0 0.0
    %2132 = vmatprep.subr.mxu0 0.0
    %2133 = vmatpush1.xpose.msra.mxu0 0.0
    %2134 = vmatprep.subr.mxu0 0.0
    %2135 = vmatpush1.xpose.msra.mxu0 0.0
    %2136 = vmatprep.subr.mxu0 0.0
    %2137 = vmatpush1.xpose.msra.mxu0 0.0
    %2138 = vmatprep.subr.mxu0 0.0
    %2139 = vmatpush1.xpose.msra.mxu0 0.0
    %2140 = vmatprep.subr.mxu0 0.0
    %2141 = vmatpush1.xpose.msra.mxu0 0.0
    %2142 = vmatprep.subr.mxu0 0.0
    %2143 = vmatpush1.xpose.msra.mxu0 0.0
    %2144 = vmatprep.subr.mxu0 0.0
    %2145 = vmatpush1.xpose.msra.mxu0 0.0
    %2146 = vmatprep.subr.mxu0 0.0
    %2147 = vmatpush1.xpose.msra.mxu0 0.0
    %2148 = vmatprep.subr.mxu0 0.0
    %2149 = vmatpush1.xpose.msra.mxu0 0.0
    %2150 = vmatprep.subr.mxu0 0.0
    %2151 = vmatpush1.xpose.msra.mxu0 0.0
    %2152 = vmatprep.subr.mxu0 0.0
    %2153 = vmatpush1.xpose.msra.mxu0 0.0
    %2154 = vmatprep.subr.mxu0 0.0
    %2155 = vmatpush1.xpose.msra.mxu0 0.0
    %2156 = vmatprep.subr.mxu0 0.0
    %2157 = vmatpush1.xpose.msra.mxu0 0.0
    %2158 = vmatprep.subr.mxu0 0.0
    %2159 = vmatpush1.xpose.msra.mxu0 0.0
    %2160 = vmatprep.subr.mxu0 0.0
    %2161 = vmatpush1.xpose.msra.mxu0 0.0
    %2162 = vmatprep.mubr.f32.mxu0 0.0
    %2163 = vmatmul.mubr.f32.gmra.mrb[0].mxu0 %v2094
    %v2164 = vpop.f32.mrb[0].mxu0
    %v2165 = vadd.f32 %v55, %v2164
    %v2166 = vpop.f32.mrb[0].mxu0
    %2167 = vdwg.mxu0
    %2168 = vrot.lane.b32.xlu0 %v2005, 96
    %v2169 = vpop.permute.xlu0 %2168
    %v2170 = vsel %vm203, %v2005, 0
    %v2172 = vsel %vm203, %v2169, 0
    %2174 = vmatprep.subr.mxu0 0.0
    %2175 = vmatpush1.xpose.msra.mxu0 %v2172
    %2176 = vmatprep.subr.mxu0 0.0
    %2177 = vmatpush1.xpose.msra.mxu0 0.0
    %2178 = vmatprep.subr.mxu0 0.0
    %2179 = vmatpush1.xpose.msra.mxu0 0.0
    %2180 = vmatprep.subr.mxu0 0.0
    %2181 = vmatpush1.xpose.msra.mxu0 0.0
    %2182 = vmatprep.subr.mxu0 0.0
    %2183 = vmatpush1.xpose.msra.mxu0 0.0
    %2184 = vmatprep.subr.mxu0 0.0
    %2185 = vmatpush1.xpose.msra.mxu0 0.0
    %2186 = vmatprep.subr.mxu0 0.0
    %2187 = vmatpush1.xpose.msra.mxu0 0.0
    %2188 = vmatprep.subr.mxu0 0.0
    %2189 = vmatpush1.xpose.msra.mxu0 0.0
    %2190 = vmatprep.subr.mxu0 0.0
    %2191 = vmatpush1.xpose.msra.mxu0 0.0
    %2192 = vmatprep.subr.mxu0 0.0
    %2193 = vmatpush1.xpose.msra.mxu0 0.0
    %2194 = vmatprep.subr.mxu0 0.0
    %2195 = vmatpush1.xpose.msra.mxu0 0.0
    %2196 = vmatprep.subr.mxu0 0.0
    %2197 = vmatpush1.xpose.msra.mxu0 0.0
    %2198 = vmatprep.subr.mxu0 0.0
    %2199 = vmatpush1.xpose.msra.mxu0 0.0
    %2200 = vmatprep.subr.mxu0 0.0
    %2201 = vmatpush1.xpose.msra.mxu0 0.0
    %2202 = vmatprep.subr.mxu0 0.0
    %2203 = vmatpush1.xpose.msra.mxu0 0.0
    %2204 = vmatprep.subr.mxu0 0.0
    %2205 = vmatpush1.xpose.msra.mxu0 0.0
    %2206 = vmatprep.subr.mxu0 0.0
    %2207 = vmatpush1.xpose.msra.mxu0 0.0
    %2208 = vmatprep.subr.mxu0 0.0
    %2209 = vmatpush1.xpose.msra.mxu0 0.0
    %2210 = vmatprep.subr.mxu0 0.0
    %2211 = vmatpush1.xpose.msra.mxu0 0.0
    %2212 = vmatprep.subr.mxu0 0.0
    %2213 = vmatpush1.xpose.msra.mxu0 0.0
    %2214 = vmatprep.subr.mxu0 0.0
    %2215 = vmatpush1.xpose.msra.mxu0 0.0
    %2216 = vmatprep.subr.mxu0 0.0
    %2217 = vmatpush1.xpose.msra.mxu0 0.0
    %2218 = vmatprep.subr.mxu0 0.0
    %2219 = vmatpush1.xpose.msra.mxu0 0.0
    %2220 = vmatprep.subr.mxu0 0.0
    %2221 = vmatpush1.xpose.msra.mxu0 0.0
    %2222 = vmatprep.subr.mxu0 0.0
    %2223 = vmatpush1.xpose.msra.mxu0 0.0
    %2224 = vmatprep.subr.mxu0 0.0
    %2225 = vmatpush1.xpose.msra.mxu0 0.0
    %2226 = vmatprep.subr.mxu0 0.0
    %2227 = vmatpush1.xpose.msra.mxu0 0.0
    %2228 = vmatprep.subr.mxu0 0.0
    %2229 = vmatpush1.xpose.msra.mxu0 0.0
    %2230 = vmatprep.subr.mxu0 0.0
    %2231 = vmatpush1.xpose.msra.mxu0 0.0
    %2232 = vmatprep.subr.mxu0 0.0
    %2233 = vmatpush1.xpose.msra.mxu0 0.0
    %2234 = vmatprep.subr.mxu0 0.0
    %2235 = vmatpush1.xpose.msra.mxu0 0.0
    %2236 = vmatprep.subr.mxu0 0.0
    %2237 = vmatpush1.xpose.msra.mxu0 0.0
    %2238 = vmatprep.mubr.f32.mxu0 0.0
    %2239 = vmatmul.mubr.f32.gmra.mrb[0].mxu0 %v2170
    %v2240 = vpop.f32.mrb[0].mxu0
    %v2241 = vadd.f32 %v55, %v2240
    %v2242 = vpop.f32.mrb[0].mxu0
    %2243 = vdwg.mxu0
    %2244 = vrot.lane.b32.xlu0 %v2007, 96
    %v2245 = vpop.permute.xlu0 %2244
    %v2246 = vsel %vm203, %v2007, 0
    %v2248 = vsel %vm203, %v2245, 0
    %2250 = vmatprep.subr.mxu0 0.0
    %2251 = vmatpush1.xpose.msra.mxu0 %v2248
    %2252 = vmatprep.subr.mxu0 0.0
    %2253 = vmatpush1.xpose.msra.mxu0 0.0
    %2254 = vmatprep.subr.mxu0 0.0
    %2255 = vmatpush1.xpose.msra.mxu0 0.0
    %2256 = vmatprep.subr.mxu0 0.0
    %2257 = vmatpush1.xpose.msra.mxu0 0.0
    %2258 = vmatprep.subr.mxu0 0.0
    %2259 = vmatpush1.xpose.msra.mxu0 0.0
    %2260 = vmatprep.subr.mxu0 0.0
    %2261 = vmatpush1.xpose.msra.mxu0 0.0
    %2262 = vmatprep.subr.mxu0 0.0
    %2263 = vmatpush1.xpose.msra.mxu0 0.0
    %2264 = vmatprep.subr.mxu0 0.0
    %2265 = vmatpush1.xpose.msra.mxu0 0.0
    %2266 = vmatprep.subr.mxu0 0.0
    %2267 = vmatpush1.xpose.msra.mxu0 0.0
    %2268 = vmatprep.subr.mxu0 0.0
    %2269 = vmatpush1.xpose.msra.mxu0 0.0
    %2270 = vmatprep.subr.mxu0 0.0
    %2271 = vmatpush1.xpose.msra.mxu0 0.0
    %2272 = vmatprep.subr.mxu0 0.0
    %2273 = vmatpush1.xpose.msra.mxu0 0.0
    %2274 = vmatprep.subr.mxu0 0.0
    %2275 = vmatpush1.xpose.msra.mxu0 0.0
    %2276 = vmatprep.subr.mxu0 0.0
    %2277 = vmatpush1.xpose.msra.mxu0 0.0
    %2278 = vmatprep.subr.mxu0 0.0
    %2279 = vmatpush1.xpose.msra.mxu0 0.0
    %2280 = vmatprep.subr.mxu0 0.0
    %2281 = vmatpush1.xpose.msra.mxu0 0.0
    %2282 = vmatprep.subr.mxu0 0.0
    %2283 = vmatpush1.xpose.msra.mxu0 0.0
    %2284 = vmatprep.subr.mxu0 0.0
    %2285 = vmatpush1.xpose.msra.mxu0 0.0
    %2286 = vmatprep.subr.mxu0 0.0
    %2287 = vmatpush1.xpose.msra.mxu0 0.0
    %2288 = vmatprep.subr.mxu0 0.0
    %2289 = vmatpush1.xpose.msra.mxu0 0.0
    %2290 = vmatprep.subr.mxu0 0.0
    %2291 = vmatpush1.xpose.msra.mxu0 0.0
    %2292 = vmatprep.subr.mxu0 0.0
    %2293 = vmatpush1.xpose.msra.mxu0 0.0
    %2294 = vmatprep.subr.mxu0 0.0
    %2295 = vmatpush1.xpose.msra.mxu0 0.0
    %2296 = vmatprep.subr.mxu0 0.0
    %2297 = vmatpush1.xpose.msra.mxu0 0.0
    %2298 = vmatprep.subr.mxu0 0.0
    %2299 = vmatpush1.xpose.msra.mxu0 0.0
    %2300 = vmatprep.subr.mxu0 0.0
    %2301 = vmatpush1.xpose.msra.mxu0 0.0
    %2302 = vmatprep.subr.mxu0 0.0
    %2303 = vmatpush1.xpose.msra.mxu0 0.0
    %2304 = vmatprep.subr.mxu0 0.0
    %2305 = vmatpush1.xpose.msra.mxu0 0.0
    %2306 = vmatprep.subr.mxu0 0.0
    %2307 = vmatpush1.xpose.msra.mxu0 0.0
    %2308 = vmatprep.subr.mxu0 0.0
    %2309 = vmatpush1.xpose.msra.mxu0 0.0
    %2310 = vmatprep.subr.mxu0 0.0
    %2311 = vmatpush1.xpose.msra.mxu0 0.0
    %2312 = vmatprep.subr.mxu0 0.0
    %2313 = vmatpush1.xpose.msra.mxu0 0.0
    %2314 = vmatprep.mubr.f32.mxu0 0.0
    %2315 = vmatmul.mubr.f32.gmra.mrb[0].mxu0 %v2246
    %v2316 = vpop.f32.mrb[0].mxu0
    %v2317 = vadd.f32 %v55, %v2316
    %v2318 = vpop.f32.mrb[0].mxu0
    %2319 = vdwg.mxu0
    %2320 = vrot.lane.b32.xlu0 %v2009, 96
    %v2321 = vpop.permute.xlu0 %2320
    %v2322 = vsel %vm203, %v2009, 0
    %v2324 = vsel %vm203, %v2321, 0
    %2326 = vmatprep.subr.mxu0 0.0
    %2327 = vmatpush1.xpose.msra.mxu0 %v2324
    %2328 = vmatprep.subr.mxu0 0.0
    %2329 = vmatpush1.xpose.msra.mxu0 0.0
    %2330 = vmatprep.subr.mxu0 0.0
    %2331 = vmatpush1.xpose.msra.mxu0 0.0
    %2332 = vmatprep.subr.mxu0 0.0
    %2333 = vmatpush1.xpose.msra.mxu0 0.0
    %2334 = vmatprep.subr.mxu0 0.0
    %2335 = vmatpush1.xpose.msra.mxu0 0.0
    %2336 = vmatprep.subr.mxu0 0.0
    %2337 = vmatpush1.xpose.msra.mxu0 0.0
    %2338 = vmatprep.subr.mxu0 0.0
    %2339 = vmatpush1.xpose.msra.mxu0 0.0
    %2340 = vmatprep.subr.mxu0 0.0
    %2341 = vmatpush1.xpose.msra.mxu0 0.0
    %2342 = vmatprep.subr.mxu0 0.0
    %2343 = vmatpush1.xpose.msra.mxu0 0.0
    %2344 = vmatprep.subr.mxu0 0.0
    %2345 = vmatpush1.xpose.msra.mxu0 0.0
    %2346 = vmatprep.subr.mxu0 0.0
    %2347 = vmatpush1.xpose.msra.mxu0 0.0
    %2348 = vmatprep.subr.mxu0 0.0
    %2349 = vmatpush1.xpose.msra.mxu0 0.0
    %2350 = vmatprep.subr.mxu0 0.0
    %2351 = vmatpush1.xpose.msra.mxu0 0.0
    %2352 = vmatprep.subr.mxu0 0.0
    %2353 = vmatpush1.xpose.msra.mxu0 0.0
    %2354 = vmatprep.subr.mxu0 0.0
    %2355 = vmatpush1.xpose.msra.mxu0 0.0
    %2356 = vmatprep.subr.mxu0 0.0
    %2357 = vmatpush1.xpose.msra.mxu0 0.0
    %2358 = vmatprep.subr.mxu0 0.0
    %2359 = vmatpush1.xpose.msra.mxu0 0.0
    %2360 = vmatprep.subr.mxu0 0.0
    %2361 = vmatpush1.xpose.msra.mxu0 0.0
    %2362 = vmatprep.subr.mxu0 0.0
    %2363 = vmatpush1.xpose.msra.mxu0 0.0
    %2364 = vmatprep.subr.mxu0 0.0
    %2365 = vmatpush1.xpose.msra.mxu0 0.0
    %2366 = vmatprep.subr.mxu0 0.0
    %2367 = vmatpush1.xpose.msra.mxu0 0.0
    %2368 = vmatprep.subr.mxu0 0.0
    %2369 = vmatpush1.xpose.msra.mxu0 0.0
    %2370 = vmatprep.subr.mxu0 0.0
    %2371 = vmatpush1.xpose.msra.mxu0 0.0
    %2372 = vmatprep.subr.mxu0 0.0
    %2373 = vmatpush1.xpose.msra.mxu0 0.0
    %2374 = vmatprep.subr.mxu0 0.0
    %2375 = vmatpush1.xpose.msra.mxu0 0.0
    %2376 = vmatprep.subr.mxu0 0.0
    %2377 = vmatpush1.xpose.msra.mxu0 0.0
    %2378 = vmatprep.subr.mxu0 0.0
    %2379 = vmatpush1.xpose.msra.mxu0 0.0
    %2380 = vmatprep.subr.mxu0 0.0
    %2381 = vmatpush1.xpose.msra.mxu0 0.0
    %2382 = vmatprep.subr.mxu0 0.0
    %2383 = vmatpush1.xpose.msra.mxu0 0.0
    %2384 = vmatprep.subr.mxu0 0.0
    %2385 = vmatpush1.xpose.msra.mxu0 0.0
    %2386 = vmatprep.subr.mxu0 0.0
    %2387 = vmatpush1.xpose.msra.mxu0 0.0
    %2388 = vmatprep.subr.mxu0 0.0
    %2389 = vmatpush1.xpose.msra.mxu0 0.0
    %2390 = vmatprep.mubr.f32.mxu0 0.0
    %2391 = vmatmul.mubr.f32.gmra.mrb[0].mxu0 %v2322
    %v2392 = vpop.f32.mrb[0].mxu0
    %v2393 = vadd.f32 %v55, %v2392
    %v2394 = vpop.f32.mrb[0].mxu0
    %2395 = vdwg.mxu0
    %2396 = vrot.lane.b32.xlu0 %v2011, 96
    %v2397 = vpop.permute.xlu0 %2396
    %v2398 = vsel %vm203, %v2011, 0
    %v2400 = vsel %vm203, %v2397, 0
    %2402 = vmatprep.subr.mxu0 0.0
    %2403 = vmatpush1.xpose.msra.mxu0 %v2400
    %2404 = vmatprep.subr.mxu0 0.0
    %2405 = vmatpush1.xpose.msra.mxu0 0.0
    %2406 = vmatprep.subr.mxu0 0.0
    %2407 = vmatpush1.xpose.msra.mxu0 0.0
    %2408 = vmatprep.subr.mxu0 0.0
    %2409 = vmatpush1.xpose.msra.mxu0 0.0
    %2410 = vmatprep.subr.mxu0 0.0
    %2411 = vmatpush1.xpose.msra.mxu0 0.0
    %2412 = vmatprep.subr.mxu0 0.0
    %2413 = vmatpush1.xpose.msra.mxu0 0.0
    %2414 = vmatprep.subr.mxu0 0.0
    %2415 = vmatpush1.xpose.msra.mxu0 0.0
    %2416 = vmatprep.subr.mxu0 0.0
    %2417 = vmatpush1.xpose.msra.mxu0 0.0
    %2418 = vmatprep.subr.mxu0 0.0
    %2419 = vmatpush1.xpose.msra.mxu0 0.0
    %2420 = vmatprep.subr.mxu0 0.0
    %2421 = vmatpush1.xpose.msra.mxu0 0.0
    %2422 = vmatprep.subr.mxu0 0.0
    %2423 = vmatpush1.xpose.msra.mxu0 0.0
    %2424 = vmatprep.subr.mxu0 0.0
    %2425 = vmatpush1.xpose.msra.mxu0 0.0
    %2426 = vmatprep.subr.mxu0 0.0
    %2427 = vmatpush1.xpose.msra.mxu0 0.0
    %2428 = vmatprep.subr.mxu0 0.0
    %2429 = vmatpush1.xpose.msra.mxu0 0.0
    %2430 = vmatprep.subr.mxu0 0.0
    %2431 = vmatpush1.xpose.msra.mxu0 0.0
    %2432 = vmatprep.subr.mxu0 0.0
    %2433 = vmatpush1.xpose.msra.mxu0 0.0
    %2434 = vmatprep.subr.mxu0 0.0
    %2435 = vmatpush1.xpose.msra.mxu0 0.0
    %2436 = vmatprep.subr.mxu0 0.0
    %2437 = vmatpush1.xpose.msra.mxu0 0.0
    %2438 = vmatprep.subr.mxu0 0.0
    %2439 = vmatpush1.xpose.msra.mxu0 0.0
    %2440 = vmatprep.subr.mxu0 0.0
    %2441 = vmatpush1.xpose.msra.mxu0 0.0
    %2442 = vmatprep.subr.mxu0 0.0
    %2443 = vmatpush1.xpose.msra.mxu0 0.0
    %2444 = vmatprep.subr.mxu0 0.0
    %2445 = vmatpush1.xpose.msra.mxu0 0.0
    %2446 = vmatprep.subr.mxu0 0.0
    %2447 = vmatpush1.xpose.msra.mxu0 0.0
    %2448 = vmatprep.subr.mxu0 0.0
    %2449 = vmatpush1.xpose.msra.mxu0 0.0
    %2450 = vmatprep.subr.mxu0 0.0
    %2451 = vmatpush1.xpose.msra.mxu0 0.0
    %2452 = vmatprep.subr.mxu0 0.0
    %2453 = vmatpush1.xpose.msra.mxu0 0.0
    %2454 = vmatprep.subr.mxu0 0.0
    %2455 = vmatpush1.xpose.msra.mxu0 0.0
    %2456 = vmatprep.subr.mxu0 0.0
    %2457 = vmatpush1.xpose.msra.mxu0 0.0
    %2458 = vmatprep.subr.mxu0 0.0
    %2459 = vmatpush1.xpose.msra.mxu0 0.0
    %2460 = vmatprep.subr.mxu0 0.0
    %2461 = vmatpush1.xpose.msra.mxu0 0.0
    %2462 = vmatprep.subr.mxu0 0.0
    %2463 = vmatpush1.xpose.msra.mxu0 0.0
    %2464 = vmatprep.subr.mxu0 0.0
    %2465 = vmatpush1.xpose.msra.mxu0 0.0
    %2466 = vmatprep.mubr.f32.mxu0 0.0
    %2467 = vmatmul.mubr.f32.gmra.mrb[0].mxu0 %v2398
    %v2468 = vpop.f32.mrb[0].mxu0
    %v2469 = vadd.f32 %v55, %v2468
    %v2470 = vpop.f32.mrb[0].mxu0
    %2471 = vdwg.mxu0
    %2472 = vrot.lane.b32.xlu0 %v2013, 96
    %v2473 = vpop.permute.xlu0 %2472
    %v2474 = vsel %vm203, %v2013, 0
    %v2476 = vsel %vm203, %v2473, 0
    %2478 = vmatprep.subr.mxu0 0.0
    %2479 = vmatpush1.xpose.msra.mxu0 %v2476
    %2480 = vmatprep.subr.mxu0 0.0
    %2481 = vmatpush1.xpose.msra.mxu0 0.0
    %2482 = vmatprep.subr.mxu0 0.0
    %2483 = vmatpush1.xpose.msra.mxu0 0.0
    %2484 = vmatprep.subr.mxu0 0.0
    %2485 = vmatpush1.xpose.msra.mxu0 0.0
    %2486 = vmatprep.subr.mxu0 0.0
    %2487 = vmatpush1.xpose.msra.mxu0 0.0
    %2488 = vmatprep.subr.mxu0 0.0
    %2489 = vmatpush1.xpose.msra.mxu0 0.0
    %2490 = vmatprep.subr.mxu0 0.0
    %2491 = vmatpush1.xpose.msra.mxu0 0.0
    %2492 = vmatprep.subr.mxu0 0.0
    %2493 = vmatpush1.xpose.msra.mxu0 0.0
    %2494 = vmatprep.subr.mxu0 0.0
    %2495 = vmatpush1.xpose.msra.mxu0 0.0
    %2496 = vmatprep.subr.mxu0 0.0
    %2497 = vmatpush1.xpose.msra.mxu0 0.0
    %2498 = vmatprep.subr.mxu0 0.0
    %2499 = vmatpush1.xpose.msra.mxu0 0.0
    %2500 = vmatprep.subr.mxu0 0.0
    %2501 = vmatpush1.xpose.msra.mxu0 0.0
    %2502 = vmatprep.subr.mxu0 0.0
    %2503 = vmatpush1.xpose.msra.mxu0 0.0
    %2504 = vmatprep.subr.mxu0 0.0
    %2505 = vmatpush1.xpose.msra.mxu0 0.0
    %2506 = vmatprep.subr.mxu0 0.0
    %2507 = vmatpush1.xpose.msra.mxu0 0.0
    %2508 = vmatprep.subr.mxu0 0.0
    %2509 = vmatpush1.xpose.msra.mxu0 0.0
    %2510 = vmatprep.subr.mxu0 0.0
    %2511 = vmatpush1.xpose.msra.mxu0 0.0
    %2512 = vmatprep.subr.mxu0 0.0
    %2513 = vmatpush1.xpose.msra.mxu0 0.0
    %2514 = vmatprep.subr.mxu0 0.0
    %2515 = vmatpush1.xpose.msra.mxu0 0.0
    %2516 = vmatprep.subr.mxu0 0.0
    %2517 = vmatpush1.xpose.msra.mxu0 0.0
    %2518 = vmatprep.subr.mxu0 0.0
    %2519 = vmatpush1.xpose.msra.mxu0 0.0
    %2520 = vmatprep.subr.mxu0 0.0
    %2521 = vmatpush1.xpose.msra.mxu0 0.0
    %2522 = vmatprep.subr.mxu0 0.0
    %2523 = vmatpush1.xpose.msra.mxu0 0.0
    %2524 = vmatprep.subr.mxu0 0.0
    %2525 = vmatpush1.xpose.msra.mxu0 0.0
    %2526 = vmatprep.subr.mxu0 0.0
    %2527 = vmatpush1.xpose.msra.mxu0 0.0
    %2528 = vmatprep.subr.mxu0 0.0
    %2529 = vmatpush1.xpose.msra.mxu0 0.0
    %2530 = vmatprep.subr.mxu0 0.0
    %2531 = vmatpush1.xpose.msra.mxu0 0.0
    %2532 = vmatprep.subr.mxu0 0.0
    %2533 = vmatpush1.xpose.msra.mxu0 0.0
    %2534 = vmatprep.subr.mxu0 0.0
    %2535 = vmatpush1.xpose.msra.mxu0 0.0
    %2536 = vmatprep.subr.mxu0 0.0
    %2537 = vmatpush1.xpose.msra.mxu0 0.0
    %2538 = vmatprep.subr.mxu0 0.0
    %2539 = vmatpush1.xpose.msra.mxu0 0.0
    %2540 = vmatprep.subr.mxu0 0.0
    %2541 = vmatpush1.xpose.msra.mxu0 0.0
    %2542 = vmatprep.mubr.f32.mxu0 0.0
    %2543 = vmatmul.mubr.f32.gmra.mrb[0].mxu0 %v2474
    %v2544 = vpop.f32.mrb[0].mxu0
    %v2545 = vadd.f32 %v55, %v2544
    %v2546 = vpop.f32.mrb[0].mxu0
    %2547 = vdwg.mxu0
    %2548 = vrot.lane.b32.xlu0 %v2015, 96
    %v2549 = vpop.permute.xlu0 %2548
    %v2550 = vsel %vm203, %v2015, 0
    %v2552 = vsel %vm203, %v2549, 0
    %2554 = vmatprep.subr.mxu0 0.0
    %2555 = vmatpush1.xpose.msra.mxu0 %v2552
    %2556 = vmatprep.subr.mxu0 0.0
    %2557 = vmatpush1.xpose.msra.mxu0 0.0
    %2558 = vmatprep.subr.mxu0 0.0
    %2559 = vmatpush1.xpose.msra.mxu0 0.0
    %2560 = vmatprep.subr.mxu0 0.0
    %2561 = vmatpush1.xpose.msra.mxu0 0.0
    %2562 = vmatprep.subr.mxu0 0.0
    %2563 = vmatpush1.xpose.msra.mxu0 0.0
    %2564 = vmatprep.subr.mxu0 0.0
    %2565 = vmatpush1.xpose.msra.mxu0 0.0
    %2566 = vmatprep.subr.mxu0 0.0
    %2567 = vmatpush1.xpose.msra.mxu0 0.0
    %2568 = vmatprep.subr.mxu0 0.0
    %2569 = vmatpush1.xpose.msra.mxu0 0.0
    %2570 = vmatprep.subr.mxu0 0.0
    %2571 = vmatpush1.xpose.msra.mxu0 0.0
    %2572 = vmatprep.subr.mxu0 0.0
    %2573 = vmatpush1.xpose.msra.mxu0 0.0
    %2574 = vmatprep.subr.mxu0 0.0
    %2575 = vmatpush1.xpose.msra.mxu0 0.0
    %2576 = vmatprep.subr.mxu0 0.0
    %2577 = vmatpush1.xpose.msra.mxu0 0.0
    %2578 = vmatprep.subr.mxu0 0.0
    %2579 = vmatpush1.xpose.msra.mxu0 0.0
    %2580 = vmatprep.subr.mxu0 0.0
    %2581 = vmatpush1.xpose.msra.mxu0 0.0
    %2582 = vmatprep.subr.mxu0 0.0
    %2583 = vmatpush1.xpose.msra.mxu0 0.0
    %2584 = vmatprep.subr.mxu0 0.0
    %2585 = vmatpush1.xpose.msra.mxu0 0.0
    %2586 = vmatprep.subr.mxu0 0.0
    %2587 = vmatpush1.xpose.msra.mxu0 0.0
    %2588 = vmatprep.subr.mxu0 0.0
    %2589 = vmatpush1.xpose.msra.mxu0 0.0
    %2590 = vmatprep.subr.mxu0 0.0
    %2591 = vmatpush1.xpose.msra.mxu0 0.0
    %2592 = vmatprep.subr.mxu0 0.0
    %2593 = vmatpush1.xpose.msra.mxu0 0.0
    %2594 = vmatprep.subr.mxu0 0.0
    %2595 = vmatpush1.xpose.msra.mxu0 0.0
    %2596 = vmatprep.subr.mxu0 0.0
    %2597 = vmatpush1.xpose.msra.mxu0 0.0
    %2598 = vmatprep.subr.mxu0 0.0
    %2599 = vmatpush1.xpose.msra.mxu0 0.0
    %2600 = vmatprep.subr.mxu0 0.0
    %2601 = vmatpush1.xpose.msra.mxu0 0.0
    %2602 = vmatprep.subr.mxu0 0.0
    %2603 = vmatpush1.xpose.msra.mxu0 0.0
    %2604 = vmatprep.subr.mxu0 0.0
    %2605 = vmatpush1.xpose.msra.mxu0 0.0
    %2606 = vmatprep.subr.mxu0 0.0
    %2607 = vmatpush1.xpose.msra.mxu0 0.0
    %2608 = vmatprep.subr.mxu0 0.0
    %2609 = vmatpush1.xpose.msra.mxu0 0.0
    %2610 = vmatprep.subr.mxu0 0.0
    %2611 = vmatpush1.xpose.msra.mxu0 0.0
    %2612 = vmatprep.subr.mxu0 0.0
    %2613 = vmatpush1.xpose.msra.mxu0 0.0
    %2614 = vmatprep.subr.mxu0 0.0
    %2615 = vmatpush1.xpose.msra.mxu0 0.0
    %2616 = vmatprep.subr.mxu0 0.0
    %2617 = vmatpush1.xpose.msra.mxu0 0.0
    %2618 = vmatprep.mubr.f32.mxu0 0.0
    %2619 = vmatmul.mubr.f32.gmra.mrb[0].mxu0 %v2550
    %v2620 = vpop.f32.mrb[0].mxu0
    %v2621 = vadd.f32 %v55, %v2620
    %v2622 = vpop.f32.mrb[0].mxu0
    %2623 = vdwg.mxu0
    %v2624 = vsel %vm203, %v2089, -inf
    %2625 = vmax.xlane.f32.xlu0 %v2624
    %v2626 = vpop.xlane.xlu0 %2625
    %v2627 = vsel %vm203, %v2165, -inf
    %2628 = vmax.xlane.f32.xlu0 %v2627
    %v2629 = vpop.xlane.xlu0 %2628
    %v2630 = vsel %vm203, %v2241, -inf
    %2631 = vmax.xlane.f32.xlu0 %v2630
    %v2632 = vpop.xlane.xlu0 %2631
    %v2633 = vsel %vm203, %v2317, -inf
    %2634 = vmax.xlane.f32.xlu0 %v2633
    %v2635 = vpop.xlane.xlu0 %2634
    %v2636 = vsel %vm203, %v2393, -inf
    %2637 = vmax.xlane.f32.xlu0 %v2636
    %v2638 = vpop.xlane.xlu0 %2637
    %v2639 = vsel %vm203, %v2469, -inf
    %2640 = vmax.xlane.f32.xlu0 %v2639
    %v2641 = vpop.xlane.xlu0 %2640
    %v2642 = vsel %vm203, %v2545, -inf
    %2643 = vmax.xlane.f32.xlu0 %v2642
    %v2644 = vpop.xlane.xlu0 %2643
    %v2645 = vsel %vm203, %v2621, -inf
    %2646 = vmax.xlane.f32.xlu0 %v2645
    %v2647 = vpop.xlane.xlu0 %2646
    %v2648 = vsub.f32 %v2089, %v2626
    %v2649 = vsub.f32 %v2165, %v2629
    %v2650 = vsub.f32 %v2241, %v2632
    %v2651 = vsub.f32 %v2317, %v2635
    %v2652 = vsub.f32 %v2393, %v2638
    %v2653 = vsub.f32 %v2469, %v2641
    %v2654 = vsub.f32 %v2545, %v2644
    %v2655 = vsub.f32 %v2621, %v2647
    %v2656 = vmul.f32 %v2648, 1.442695
    %v2657 = vpow.pop %v2656
    %v2658 = vmul.f32 %v2649, 1.442695
    %v2659 = vpow.pop %v2658
    %v2660 = vmul.f32 %v2650, 1.442695
    %v2661 = vpow.pop %v2660
    %v2662 = vmul.f32 %v2651, 1.442695
    %v2663 = vpow.pop %v2662
    %v2664 = vmul.f32 %v2652, 1.442695
    %v2665 = vpow.pop %v2664
    %v2666 = vmul.f32 %v2653, 1.442695
    %v2667 = vpow.pop %v2666
    %v2668 = vmul.f32 %v2654, 1.442695
    %v2669 = vpow.pop %v2668
    %v2670 = vmul.f32 %v2655, 1.442695
    %v2671 = vpow.pop %v2670
    %v2672 = vsel %vm203, %v2657, 0.0
    %2673 = vadd.xlane.f32.xlu0 %v2672
    %v2674 = vpop.xlane.xlu0 %2673
    %v2675 = vsel %vm203, %v2659, 0.0
    %2676 = vadd.xlane.f32.xlu0 %v2675
    %v2677 = vpop.xlane.xlu0 %2676
    %v2678 = vsel %vm203, %v2661, 0.0
    %2679 = vadd.xlane.f32.xlu0 %v2678
    %v2680 = vpop.xlane.xlu0 %2679
    %v2681 = vsel %vm203, %v2663, 0.0
    %2682 = vadd.xlane.f32.xlu0 %v2681
    %v2683 = vpop.xlane.xlu0 %2682
    %v2684 = vsel %vm203, %v2665, 0.0
    %2685 = vadd.xlane.f32.xlu0 %v2684
    %v2686 = vpop.xlane.xlu0 %2685
    %v2687 = vsel %vm203, %v2667, 0.0
    %2688 = vadd.xlane.f32.xlu0 %v2687
    %v2689 = vpop.xlane.xlu0 %2688
    %v2690 = vsel %vm203, %v2669, 0.0
    %2691 = vadd.xlane.f32.xlu0 %v2690
    %v2692 = vpop.xlane.xlu0 %2691
    %v2693 = vsel %vm203, %v2671, 0.0
    %2694 = vadd.xlane.f32.xlu0 %v2693
    %v2695 = vpop.xlane.xlu0 %2694
    %v2696 = vrcp.pop %v2674
    %v2697 = vmul.f32 %v2657, %v2696
    %v2698 = vrcp.pop %v2677
    %v2699 = vmul.f32 %v2659, %v2698
    %v2700 = vrcp.pop %v2680
    %v2701 = vmul.f32 %v2661, %v2700
    %v2702 = vrcp.pop %v2683
    %v2703 = vmul.f32 %v2663, %v2702
    %v2704 = vrcp.pop %v2686
    %v2705 = vmul.f32 %v2665, %v2704
    %v2706 = vrcp.pop %v2689
    %v2707 = vmul.f32 %v2667, %v2706
    %v2708 = vrcp.pop %v2692
    %v2709 = vmul.f32 %v2669, %v2708
    %v2710 = vrcp.pop %v2695
    %v2711 = vmul.f32 %v2671, %v2710
    %2712 = vrot.lane.b32.xlu0 %v1994, 64
    %v2713 = vpop.permute.xlu0 %2712
    %v2716 = vsel %vm203, %v2697, 0
    %2718 = vmatprep.subr.mxu0 0.0
    %2719 = vmatpush1.msra.mxu0 %v2713
    %2720 = vmatprep.subr.mxu0 0.0
    %2721 = vmatpush1.msra.mxu0 0.0
    %2722 = vmatprep.subr.mxu0 0.0
    %2723 = vmatpush1.msra.mxu0 0.0
    %2724 = vmatprep.subr.mxu0 0.0
    %2725 = vmatpush1.msra.mxu0 0.0
    %2726 = vmatprep.subr.mxu0 0.0
    %2727 = vmatpush1.msra.mxu0 0.0
    %2728 = vmatprep.subr.mxu0 0.0
    %2729 = vmatpush1.msra.mxu0 0.0
    %2730 = vmatprep.subr.mxu0 0.0
    %2731 = vmatpush1.msra.mxu0 0.0
    %2732 = vmatprep.subr.mxu0 0.0
    %2733 = vmatpush1.msra.mxu0 0.0
    %2734 = vmatprep.subr.mxu0 0.0
    %2735 = vmatpush1.msra.mxu0 0.0
    %2736 = vmatprep.subr.mxu0 0.0
    %2737 = vmatpush1.msra.mxu0 0.0
    %2738 = vmatprep.subr.mxu0 0.0
    %2739 = vmatpush1.msra.mxu0 0.0
    %2740 = vmatprep.subr.mxu0 0.0
    %2741 = vmatpush1.msra.mxu0 0.0
    %2742 = vmatprep.subr.mxu0 0.0
    %2743 = vmatpush1.msra.mxu0 0.0
    %2744 = vmatprep.subr.mxu0 0.0
    %2745 = vmatpush1.msra.mxu0 0.0
    %2746 = vmatprep.subr.mxu0 0.0
    %2747 = vmatpush1.msra.mxu0 0.0
    %2748 = vmatprep.subr.mxu0 0.0
    %2749 = vmatpush1.msra.mxu0 0.0
    %2750 = vmatprep.subr.mxu0 0.0
    %2751 = vmatpush1.msra.mxu0 0.0
    %2752 = vmatprep.subr.mxu0 0.0
    %2753 = vmatpush1.msra.mxu0 0.0
    %2754 = vmatprep.subr.mxu0 0.0
    %2755 = vmatpush1.msra.mxu0 0.0
    %2756 = vmatprep.subr.mxu0 0.0
    %2757 = vmatpush1.msra.mxu0 0.0
    %2758 = vmatprep.subr.mxu0 0.0
    %2759 = vmatpush1.msra.mxu0 0.0
    %2760 = vmatprep.subr.mxu0 0.0
    %2761 = vmatpush1.msra.mxu0 0.0
    %2762 = vmatprep.subr.mxu0 0.0
    %2763 = vmatpush1.msra.mxu0 0.0
    %2764 = vmatprep.subr.mxu0 0.0
    %2765 = vmatpush1.msra.mxu0 0.0
    %2766 = vmatprep.subr.mxu0 0.0
    %2767 = vmatpush1.msra.mxu0 0.0
    %2768 = vmatprep.subr.mxu0 0.0
    %2769 = vmatpush1.msra.mxu0 0.0
    %2770 = vmatprep.subr.mxu0 0.0
    %2771 = vmatpush1.msra.mxu0 0.0
    %2772 = vmatprep.subr.mxu0 0.0
    %2773 = vmatpush1.msra.mxu0 0.0
    %2774 = vmatprep.subr.mxu0 0.0
    %2775 = vmatpush1.msra.mxu0 0.0
    %2776 = vmatprep.subr.mxu0 0.0
    %2777 = vmatpush1.msra.mxu0 0.0
    %2778 = vmatprep.subr.mxu0 0.0
    %2779 = vmatpush1.msra.mxu0 0.0
    %2780 = vmatprep.subr.mxu0 0.0
    %2781 = vmatpush1.msra.mxu0 0.0
    %2782 = vmatprep.mubr.f32.mxu0 0.0
    %2783 = vmatmul.mubr.f32.gmra.mrb[0].mxu0 %v2716
    %v2784 = vpop.f32.mrb[0].mxu0
    %v2785 = vadd.f32 0.0, %v2784
    %v2786 = vpop.f32.mrb[0].mxu0
    %2787 = vdwg.mxu0
    %2788 = vrot.lane.b32.xlu0 %v1999, 64
    %v2789 = vpop.permute.xlu0 %2788
    %v2792 = vsel %vm203, %v2699, 0
    %2794 = vmatprep.subr.mxu0 0.0
    %2795 = vmatpush1.msra.mxu0 %v2789
    %2796 = vmatprep.subr.mxu0 0.0
    %2797 = vmatpush1.msra.mxu0 0.0
    %2798 = vmatprep.subr.mxu0 0.0
    %2799 = vmatpush1.msra.mxu0 0.0
    %2800 = vmatprep.subr.mxu0 0.0
    %2801 = vmatpush1.msra.mxu0 0.0
    %2802 = vmatprep.subr.mxu0 0.0
    %2803 = vmatpush1.msra.mxu0 0.0
    %2804 = vmatprep.subr.mxu0 0.0
    %2805 = vmatpush1.msra.mxu0 0.0
    %2806 = vmatprep.subr.mxu0 0.0
    %2807 = vmatpush1.msra.mxu0 0.0
    %2808 = vmatprep.subr.mxu0 0.0
    %2809 = vmatpush1.msra.mxu0 0.0
    %2810 = vmatprep.subr.mxu0 0.0
    %2811 = vmatpush1.msra.mxu0 0.0
    %2812 = vmatprep.subr.mxu0 0.0
    %2813 = vmatpush1.msra.mxu0 0.0
    %2814 = vmatprep.subr.mxu0 0.0
    %2815 = vmatpush1.msra.mxu0 0.0
    %2816 = vmatprep.subr.mxu0 0.0
    %2817 = vmatpush1.msra.mxu0 0.0
    %2818 = vmatprep.subr.mxu0 0.0
    %2819 = vmatpush1.msra.mxu0 0.0
    %2820 = vmatprep.subr.mxu0 0.0
    %2821 = vmatpush1.msra.mxu0 0.0
    %2822 = vmatprep.subr.mxu0 0.0
    %2823 = vmatpush1.msra.mxu0 0.0
    %2824 = vmatprep.subr.mxu0 0.0
    %2825 = vmatpush1.msra.mxu0 0.0
    %2826 = vmatprep.subr.mxu0 0.0
    %2827 = vmatpush1.msra.mxu0 0.0
    %2828 = vmatprep.subr.mxu0 0.0
    %2829 = vmatpush1.msra.mxu0 0.0
    %2830 = vmatprep.subr.mxu0 0.0
    %2831 = vmatpush1.msra.mxu0 0.0
    %2832 = vmatprep.subr.mxu0 0.0
    %2833 = vmatpush1.msra.mxu0 0.0
    %2834 = vmatprep.subr.mxu0 0.0
    %2835 = vmatpush1.msra.mxu0 0.0
    %2836 = vmatprep.subr.mxu0 0.0
    %2837 = vmatpush1.msra.mxu0 0.0
    %2838 = vmatprep.subr.mxu0 0.0
    %2839 = vmatpush1.msra.mxu0 0.0
    %2840 = vmatprep.subr.mxu0 0.0
    %2841 = vmatpush1.msra.mxu0 0.0
    %2842 = vmatprep.subr.mxu0 0.0
    %2843 = vmatpush1.msra.mxu0 0.0
    %2844 = vmatprep.subr.mxu0 0.0
    %2845 = vmatpush1.msra.mxu0 0.0
    %2846 = vmatprep.subr.mxu0 0.0
    %2847 = vmatpush1.msra.mxu0 0.0
    %2848 = vmatprep.subr.mxu0 0.0
    %2849 = vmatpush1.msra.mxu0 0.0
    %2850 = vmatprep.subr.mxu0 0.0
    %2851 = vmatpush1.msra.mxu0 0.0
    %2852 = vmatprep.subr.mxu0 0.0
    %2853 = vmatpush1.msra.mxu0 0.0
    %2854 = vmatprep.subr.mxu0 0.0
    %2855 = vmatpush1.msra.mxu0 0.0
    %2856 = vmatprep.subr.mxu0 0.0
    %2857 = vmatpush1.msra.mxu0 0.0
    %2858 = vmatprep.mubr.f32.mxu0 0.0
    %2859 = vmatmul.mubr.f32.gmra.mrb[0].mxu0 %v2792
    %v2860 = vpop.f32.mrb[0].mxu0
    %v2861 = vadd.f32 0.0, %v2860
    %v2862 = vpop.f32.mrb[0].mxu0
    %2863 = vdwg.mxu0
    %2864 = vrot.lane.b32.xlu0 %v2005, 64
    %v2865 = vpop.permute.xlu0 %2864
    %v2868 = vsel %vm203, %v2701, 0
    %2870 = vmatprep.subr.mxu0 0.0
    %2871 = vmatpush1.msra.mxu0 %v2865
    %2872 = vmatprep.subr.mxu0 0.0
    %2873 = vmatpush1.msra.mxu0 0.0
    %2874 = vmatprep.subr.mxu0 0.0
    %2875 = vmatpush1.msra.mxu0 0.0
    %2876 = vmatprep.subr.mxu0 0.0
    %2877 = vmatpush1.msra.mxu0 0.0
    %2878 = vmatprep.subr.mxu0 0.0
    %2879 = vmatpush1.msra.mxu0 0.0
    %2880 = vmatprep.subr.mxu0 0.0
    %2881 = vmatpush1.msra.mxu0 0.0
    %2882 = vmatprep.subr.mxu0 0.0
    %2883 = vmatpush1.msra.mxu0 0.0
    %2884 = vmatprep.subr.mxu0 0.0
    %2885 = vmatpush1.msra.mxu0 0.0
    %2886 = vmatprep.subr.mxu0 0.0
    %2887 = vmatpush1.msra.mxu0 0.0
    %2888 = vmatprep.subr.mxu0 0.0
    %2889 = vmatpush1.msra.mxu0 0.0
    %2890 = vmatprep.subr.mxu0 0.0
    %2891 = vmatpush1.msra.mxu0 0.0
    %2892 = vmatprep.subr.mxu0 0.0
    %2893 = vmatpush1.msra.mxu0 0.0
    %2894 = vmatprep.subr.mxu0 0.0
    %2895 = vmatpush1.msra.mxu0 0.0
    %2896 = vmatprep.subr.mxu0 0.0
    %2897 = vmatpush1.msra.mxu0 0.0
    %2898 = vmatprep.subr.mxu0 0.0
    %2899 = vmatpush1.msra.mxu0 0.0
    %2900 = vmatprep.subr.mxu0 0.0
    %2901 = vmatpush1.msra.mxu0 0.0
    %2902 = vmatprep.subr.mxu0 0.0
    %2903 = vmatpush1.msra.mxu0 0.0
    %2904 = vmatprep.subr.mxu0 0.0
    %2905 = vmatpush1.msra.mxu0 0.0
    %2906 = vmatprep.subr.mxu0 0.0
    %2907 = vmatpush1.msra.mxu0 0.0
    %2908 = vmatprep.subr.mxu0 0.0
    %2909 = vmatpush1.msra.mxu0 0.0
    %2910 = vmatprep.subr.mxu0 0.0
    %2911 = vmatpush1.msra.mxu0 0.0
    %2912 = vmatprep.subr.mxu0 0.0
    %2913 = vmatpush1.msra.mxu0 0.0
    %2914 = vmatprep.subr.mxu0 0.0
    %2915 = vmatpush1.msra.mxu0 0.0
    %2916 = vmatprep.subr.mxu0 0.0
    %2917 = vmatpush1.msra.mxu0 0.0
    %2918 = vmatprep.subr.mxu0 0.0
    %2919 = vmatpush1.msra.mxu0 0.0
    %2920 = vmatprep.subr.mxu0 0.0
    %2921 = vmatpush1.msra.mxu0 0.0
    %2922 = vmatprep.subr.mxu0 0.0
    %2923 = vmatpush1.msra.mxu0 0.0
    %2924 = vmatprep.subr.mxu0 0.0
    %2925 = vmatpush1.msra.mxu0 0.0
    %2926 = vmatprep.subr.mxu0 0.0
    %2927 = vmatpush1.msra.mxu0 0.0
    %2928 = vmatprep.subr.mxu0 0.0
    %2929 = vmatpush1.msra.mxu0 0.0
    %2930 = vmatprep.subr.mxu0 0.0
    %2931 = vmatpush1.msra.mxu0 0.0
    %2932 = vmatprep.subr.mxu0 0.0
    %2933 = vmatpush1.msra.mxu0 0.0
    %2934 = vmatprep.mubr.f32.mxu0 0.0
    %2935 = vmatmul.mubr.f32.gmra.mrb[0].mxu0 %v2868
    %v2936 = vpop.f32.mrb[0].mxu0
    %v2937 = vadd.f32 0.0, %v2936
    %v2938 = vpop.f32.mrb[0].mxu0
    %2939 = vdwg.mxu0
    %2940 = vrot.lane.b32.xlu0 %v2007, 64
    %v2941 = vpop.permute.xlu0 %2940
    %v2944 = vsel %vm203, %v2703, 0
    %2946 = vmatprep.subr.mxu0 0.0
    %2947 = vmatpush1.msra.mxu0 %v2941
    %2948 = vmatprep.subr.mxu0 0.0
    %2949 = vmatpush1.msra.mxu0 0.0
    %2950 = vmatprep.subr.mxu0 0.0
    %2951 = vmatpush1.msra.mxu0 0.0
    %2952 = vmatprep.subr.mxu0 0.0
    %2953 = vmatpush1.msra.mxu0 0.0
    %2954 = vmatprep.subr.mxu0 0.0
    %2955 = vmatpush1.msra.mxu0 0.0
    %2956 = vmatprep.subr.mxu0 0.0
    %2957 = vmatpush1.msra.mxu0 0.0
    %2958 = vmatprep.subr.mxu0 0.0
    %2959 = vmatpush1.msra.mxu0 0.0
    %2960 = vmatprep.subr.mxu0 0.0
    %2961 = vmatpush1.msra.mxu0 0.0
    %2962 = vmatprep.subr.mxu0 0.0
    %2963 = vmatpush1.msra.mxu0 0.0
    %2964 = vmatprep.subr.mxu0 0.0
    %2965 = vmatpush1.msra.mxu0 0.0
    %2966 = vmatprep.subr.mxu0 0.0
    %2967 = vmatpush1.msra.mxu0 0.0
    %2968 = vmatprep.subr.mxu0 0.0
    %2969 = vmatpush1.msra.mxu0 0.0
    %2970 = vmatprep.subr.mxu0 0.0
    %2971 = vmatpush1.msra.mxu0 0.0
    %2972 = vmatprep.subr.mxu0 0.0
    %2973 = vmatpush1.msra.mxu0 0.0
    %2974 = vmatprep.subr.mxu0 0.0
    %2975 = vmatpush1.msra.mxu0 0.0
    %2976 = vmatprep.subr.mxu0 0.0
    %2977 = vmatpush1.msra.mxu0 0.0
    %2978 = vmatprep.subr.mxu0 0.0
    %2979 = vmatpush1.msra.mxu0 0.0
    %2980 = vmatprep.subr.mxu0 0.0
    %2981 = vmatpush1.msra.mxu0 0.0
    %2982 = vmatprep.subr.mxu0 0.0
    %2983 = vmatpush1.msra.mxu0 0.0
    %2984 = vmatprep.subr.mxu0 0.0
    %2985 = vmatpush1.msra.mxu0 0.0
    %2986 = vmatprep.subr.mxu0 0.0
    %2987 = vmatpush1.msra.mxu0 0.0
    %2988 = vmatprep.subr.mxu0 0.0
    %2989 = vmatpush1.msra.mxu0 0.0
    %2990 = vmatprep.subr.mxu0 0.0
    %2991 = vmatpush1.msra.mxu0 0.0
    %2992 = vmatprep.subr.mxu0 0.0
    %2993 = vmatpush1.msra.mxu0 0.0
    %2994 = vmatprep.subr.mxu0 0.0
    %2995 = vmatpush1.msra.mxu0 0.0
    %2996 = vmatprep.subr.mxu0 0.0
    %2997 = vmatpush1.msra.mxu0 0.0
    %2998 = vmatprep.subr.mxu0 0.0
    %2999 = vmatpush1.msra.mxu0 0.0
    %3000 = vmatprep.subr.mxu0 0.0
    %3001 = vmatpush1.msra.mxu0 0.0
    %3002 = vmatprep.subr.mxu0 0.0
    %3003 = vmatpush1.msra.mxu0 0.0
    %3004 = vmatprep.subr.mxu0 0.0
    %3005 = vmatpush1.msra.mxu0 0.0
    %3006 = vmatprep.subr.mxu0 0.0
    %3007 = vmatpush1.msra.mxu0 0.0
    %3008 = vmatprep.subr.mxu0 0.0
    %3009 = vmatpush1.msra.mxu0 0.0
    %3010 = vmatprep.mubr.f32.mxu0 0.0
    %3011 = vmatmul.mubr.f32.gmra.mrb[0].mxu0 %v2944
    %v3012 = vpop.f32.mrb[0].mxu0
    %v3013 = vadd.f32 0.0, %v3012
    %v3014 = vpop.f32.mrb[0].mxu0
    %3015 = vdwg.mxu0
    %3016 = vrot.lane.b32.xlu0 %v2009, 64
    %v3017 = vpop.permute.xlu0 %3016
    %v3020 = vsel %vm203, %v2705, 0
    %3022 = vmatprep.subr.mxu0 0.0
    %3023 = vmatpush1.msra.mxu0 %v3017
    %3024 = vmatprep.subr.mxu0 0.0
    %3025 = vmatpush1.msra.mxu0 0.0
    %3026 = vmatprep.subr.mxu0 0.0
    %3027 = vmatpush1.msra.mxu0 0.0
    %3028 = vmatprep.subr.mxu0 0.0
    %3029 = vmatpush1.msra.mxu0 0.0
    %3030 = vmatprep.subr.mxu0 0.0
    %3031 = vmatpush1.msra.mxu0 0.0
    %3032 = vmatprep.subr.mxu0 0.0
    %3033 = vmatpush1.msra.mxu0 0.0
    %3034 = vmatprep.subr.mxu0 0.0
    %3035 = vmatpush1.msra.mxu0 0.0
    %3036 = vmatprep.subr.mxu0 0.0
    %3037 = vmatpush1.msra.mxu0 0.0
    %3038 = vmatprep.subr.mxu0 0.0
    %3039 = vmatpush1.msra.mxu0 0.0
    %3040 = vmatprep.subr.mxu0 0.0
    %3041 = vmatpush1.msra.mxu0 0.0
    %3042 = vmatprep.subr.mxu0 0.0
    %3043 = vmatpush1.msra.mxu0 0.0
    %3044 = vmatprep.subr.mxu0 0.0
    %3045 = vmatpush1.msra.mxu0 0.0
    %3046 = vmatprep.subr.mxu0 0.0
    %3047 = vmatpush1.msra.mxu0 0.0
    %3048 = vmatprep.subr.mxu0 0.0
    %3049 = vmatpush1.msra.mxu0 0.0
    %3050 = vmatprep.subr.mxu0 0.0
    %3051 = vmatpush1.msra.mxu0 0.0
    %3052 = vmatprep.subr.mxu0 0.0
    %3053 = vmatpush1.msra.mxu0 0.0
    %3054 = vmatprep.subr.mxu0 0.0
    %3055 = vmatpush1.msra.mxu0 0.0
    %3056 = vmatprep.subr.mxu0 0.0
    %3057 = vmatpush1.msra.mxu0 0.0
    %3058 = vmatprep.subr.mxu0 0.0
    %3059 = vmatpush1.msra.mxu0 0.0
    %3060 = vmatprep.subr.mxu0 0.0
    %3061 = vmatpush1.msra.mxu0 0.0
    %3062 = vmatprep.subr.mxu0 0.0
    %3063 = vmatpush1.msra.mxu0 0.0
    %3064 = vmatprep.subr.mxu0 0.0
    %3065 = vmatpush1.msra.mxu0 0.0
    %3066 = vmatprep.subr.mxu0 0.0
    %3067 = vmatpush1.msra.mxu0 0.0
    %3068 = vmatprep.subr.mxu0 0.0
    %3069 = vmatpush1.msra.mxu0 0.0
    %3070 = vmatprep.subr.mxu0 0.0
    %3071 = vmatpush1.msra.mxu0 0.0
    %3072 = vmatprep.subr.mxu0 0.0
    %3073 = vmatpush1.msra.mxu0 0.0
    %3074 = vmatprep.subr.mxu0 0.0
    %3075 = vmatpush1.msra.mxu0 0.0
    %3076 = vmatprep.subr.mxu0 0.0
    %3077 = vmatpush1.msra.mxu0 0.0
    %3078 = vmatprep.subr.mxu0 0.0
    %3079 = vmatpush1.msra.mxu0 0.0
    %3080 = vmatprep.subr.mxu0 0.0
    %3081 = vmatpush1.msra.mxu0 0.0
    %3082 = vmatprep.subr.mxu0 0.0
    %3083 = vmatpush1.msra.mxu0 0.0
    %3084 = vmatprep.subr.mxu0 0.0
    %3085 = vmatpush1.msra.mxu0 0.0
    %3086 = vmatprep.mubr.f32.mxu0 0.0
    %3087 = vmatmul.mubr.f32.gmra.mrb[0].mxu0 %v3020
    %v3088 = vpop.f32.mrb[0].mxu0
    %v3089 = vadd.f32 0.0, %v3088
    %v3090 = vpop.f32.mrb[0].mxu0
    %3091 = vdwg.mxu0
    %3092 = vrot.lane.b32.xlu0 %v2011, 64
    %v3093 = vpop.permute.xlu0 %3092
    %v3096 = vsel %vm203, %v2707, 0
    %3098 = vmatprep.subr.mxu0 0.0
    %3099 = vmatpush1.msra.mxu0 %v3093
    %3100 = vmatprep.subr.mxu0 0.0
    %3101 = vmatpush1.msra.mxu0 0.0
    %3102 = vmatprep.subr.mxu0 0.0
    %3103 = vmatpush1.msra.mxu0 0.0
    %3104 = vmatprep.subr.mxu0 0.0
    %3105 = vmatpush1.msra.mxu0 0.0
    %3106 = vmatprep.subr.mxu0 0.0
    %3107 = vmatpush1.msra.mxu0 0.0
    %3108 = vmatprep.subr.mxu0 0.0
    %3109 = vmatpush1.msra.mxu0 0.0
    %3110 = vmatprep.subr.mxu0 0.0
    %3111 = vmatpush1.msra.mxu0 0.0
    %3112 = vmatprep.subr.mxu0 0.0
    %3113 = vmatpush1.msra.mxu0 0.0
    %3114 = vmatprep.subr.mxu0 0.0
    %3115 = vmatpush1.msra.mxu0 0.0
    %3116 = vmatprep.subr.mxu0 0.0
    %3117 = vmatpush1.msra.mxu0 0.0
    %3118 = vmatprep.subr.mxu0 0.0
    %3119 = vmatpush1.msra.mxu0 0.0
    %3120 = vmatprep.subr.mxu0 0.0
    %3121 = vmatpush1.msra.mxu0 0.0
    %3122 = vmatprep.subr.mxu0 0.0
    %3123 = vmatpush1.msra.mxu0 0.0
    %3124 = vmatprep.subr.mxu0 0.0
    %3125 = vmatpush1.msra.mxu0 0.0
    %3126 = vmatprep.subr.mxu0 0.0
    %3127 = vmatpush1.msra.mxu0 0.0
    %3128 = vmatprep.subr.mxu0 0.0
    %3129 = vmatpush1.msra.mxu0 0.0
    %3130 = vmatprep.subr.mxu0 0.0
    %3131 = vmatpush1.msra.mxu0 0.0
    %3132 = vmatprep.subr.mxu0 0.0
    %3133 = vmatpush1.msra.mxu0 0.0
    %3134 = vmatprep.subr.mxu0 0.0
    %3135 = vmatpush1.msra.mxu0 0.0
    %3136 = vmatprep.subr.mxu0 0.0
    %3137 = vmatpush1.msra.mxu0 0.0
    %3138 = vmatprep.subr.mxu0 0.0
    %3139 = vmatpush1.msra.mxu0 0.0
    %3140 = vmatprep.subr.mxu0 0.0
    %3141 = vmatpush1.msra.mxu0 0.0
    %3142 = vmatprep.subr.mxu0 0.0
    %3143 = vmatpush1.msra.mxu0 0.0
    %3144 = vmatprep.subr.mxu0 0.0
    %3145 = vmatpush1.msra.mxu0 0.0
    %3146 = vmatprep.subr.mxu0 0.0
    %3147 = vmatpush1.msra.mxu0 0.0
    %3148 = vmatprep.subr.mxu0 0.0
    %3149 = vmatpush1.msra.mxu0 0.0
    %3150 = vmatprep.subr.mxu0 0.0
    %3151 = vmatpush1.msra.mxu0 0.0
    %3152 = vmatprep.subr.mxu0 0.0
    %3153 = vmatpush1.msra.mxu0 0.0
    %3154 = vmatprep.subr.mxu0 0.0
    %3155 = vmatpush1.msra.mxu0 0.0
    %3156 = vmatprep.subr.mxu0 0.0
    %3157 = vmatpush1.msra.mxu0 0.0
    %3158 = vmatprep.subr.mxu0 0.0
    %3159 = vmatpush1.msra.mxu0 0.0
    %3160 = vmatprep.subr.mxu0 0.0
    %3161 = vmatpush1.msra.mxu0 0.0
    %3162 = vmatprep.mubr.f32.mxu0 0.0
    %3163 = vmatmul.mubr.f32.gmra.mrb[0].mxu0 %v3096
    %v3164 = vpop.f32.mrb[0].mxu0
    %v3165 = vadd.f32 0.0, %v3164
    %v3166 = vpop.f32.mrb[0].mxu0
    %3167 = vdwg.mxu0
    %3168 = vrot.lane.b32.xlu0 %v2013, 64
    %v3169 = vpop.permute.xlu0 %3168
    %v3172 = vsel %vm203, %v2709, 0
    %3174 = vmatprep.subr.mxu0 0.0
    %3175 = vmatpush1.msra.mxu0 %v3169
    %3176 = vmatprep.subr.mxu0 0.0
    %3177 = vmatpush1.msra.mxu0 0.0
    %3178 = vmatprep.subr.mxu0 0.0
    %3179 = vmatpush1.msra.mxu0 0.0
    %3180 = vmatprep.subr.mxu0 0.0
    %3181 = vmatpush1.msra.mxu0 0.0
    %3182 = vmatprep.subr.mxu0 0.0
    %3183 = vmatpush1.msra.mxu0 0.0
    %3184 = vmatprep.subr.mxu0 0.0
    %3185 = vmatpush1.msra.mxu0 0.0
    %3186 = vmatprep.subr.mxu0 0.0
    %3187 = vmatpush1.msra.mxu0 0.0
    %3188 = vmatprep.subr.mxu0 0.0
    %3189 = vmatpush1.msra.mxu0 0.0
    %3190 = vmatprep.subr.mxu0 0.0
    %3191 = vmatpush1.msra.mxu0 0.0
    %3192 = vmatprep.subr.mxu0 0.0
    %3193 = vmatpush1.msra.mxu0 0.0
    %3194 = vmatprep.subr.mxu0 0.0
    %3195 = vmatpush1.msra.mxu0 0.0
    %3196 = vmatprep.subr.mxu0 0.0
    %3197 = vmatpush1.msra.mxu0 0.0
    %3198 = vmatprep.subr.mxu0 0.0
    %3199 = vmatpush1.msra.mxu0 0.0
    %3200 = vmatprep.subr.mxu0 0.0
    %3201 = vmatpush1.msra.mxu0 0.0
    %3202 = vmatprep.subr.mxu0 0.0
    %3203 = vmatpush1.msra.mxu0 0.0
    %3204 = vmatprep.subr.mxu0 0.0
    %3205 = vmatpush1.msra.mxu0 0.0
    %3206 = vmatprep.subr.mxu0 0.0
    %3207 = vmatpush1.msra.mxu0 0.0
    %3208 = vmatprep.subr.mxu0 0.0
    %3209 = vmatpush1.msra.mxu0 0.0
    %3210 = vmatprep.subr.mxu0 0.0
    %3211 = vmatpush1.msra.mxu0 0.0
    %3212 = vmatprep.subr.mxu0 0.0
    %3213 = vmatpush1.msra.mxu0 0.0
    %3214 = vmatprep.subr.mxu0 0.0
    %3215 = vmatpush1.msra.mxu0 0.0
    %3216 = vmatprep.subr.mxu0 0.0
    %3217 = vmatpush1.msra.mxu0 0.0
    %3218 = vmatprep.subr.mxu0 0.0
    %3219 = vmatpush1.msra.mxu0 0.0
    %3220 = vmatprep.subr.mxu0 0.0
    %3221 = vmatpush1.msra.mxu0 0.0
    %3222 = vmatprep.subr.mxu0 0.0
    %3223 = vmatpush1.msra.mxu0 0.0
    %3224 = vmatprep.subr.mxu0 0.0
    %3225 = vmatpush1.msra.mxu0 0.0
    %3226 = vmatprep.subr.mxu0 0.0
    %3227 = vmatpush1.msra.mxu0 0.0
    %3228 = vmatprep.subr.mxu0 0.0
    %3229 = vmatpush1.msra.mxu0 0.0
    %3230 = vmatprep.subr.mxu0 0.0
    %3231 = vmatpush1.msra.mxu0 0.0
    %3232 = vmatprep.subr.mxu0 0.0
    %3233 = vmatpush1.msra.mxu0 0.0
    %3234 = vmatprep.subr.mxu0 0.0
    %3235 = vmatpush1.msra.mxu0 0.0
    %3236 = vmatprep.subr.mxu0 0.0
    %3237 = vmatpush1.msra.mxu0 0.0
    %3238 = vmatprep.mubr.f32.mxu0 0.0
    %3239 = vmatmul.mubr.f32.gmra.mrb[0].mxu0 %v3172
    %v3240 = vpop.f32.mrb[0].mxu0
    %v3241 = vadd.f32 0.0, %v3240
    %v3242 = vpop.f32.mrb[0].mxu0
    %3243 = vdwg.mxu0
    %3244 = vrot.lane.b32.xlu0 %v2015, 64
    %v3245 = vpop.permute.xlu0 %3244
    %v3248 = vsel %vm203, %v2711, 0
    %3250 = vmatprep.subr.mxu0 0.0
    %3251 = vmatpush1.msra.mxu0 %v3245
    %3252 = vmatprep.subr.mxu0 0.0
    %3253 = vmatpush1.msra.mxu0 0.0
    %3254 = vmatprep.subr.mxu0 0.0
    %3255 = vmatpush1.msra.mxu0 0.0
    %3256 = vmatprep.subr.mxu0 0.0
    %3257 = vmatpush1.msra.mxu0 0.0
    %3258 = vmatprep.subr.mxu0 0.0
    %3259 = vmatpush1.msra.mxu0 0.0
    %3260 = vmatprep.subr.mxu0 0.0
    %3261 = vmatpush1.msra.mxu0 0.0
    %3262 = vmatprep.subr.mxu0 0.0
    %3263 = vmatpush1.msra.mxu0 0.0
    %3264 = vmatprep.subr.mxu0 0.0
    %3265 = vmatpush1.msra.mxu0 0.0
    %3266 = vmatprep.subr.mxu0 0.0
    %3267 = vmatpush1.msra.mxu0 0.0
    %3268 = vmatprep.subr.mxu0 0.0
    %3269 = vmatpush1.msra.mxu0 0.0
    %3270 = vmatprep.subr.mxu0 0.0
    %3271 = vmatpush1.msra.mxu0 0.0
    %3272 = vmatprep.subr.mxu0 0.0
    %3273 = vmatpush1.msra.mxu0 0.0
    %3274 = vmatprep.subr.mxu0 0.0
    %3275 = vmatpush1.msra.mxu0 0.0
    %3276 = vmatprep.subr.mxu0 0.0
    %3277 = vmatpush1.msra.mxu0 0.0
    %3278 = vmatprep.subr.mxu0 0.0
    %3279 = vmatpush1.msra.mxu0 0.0
    %3280 = vmatprep.subr.mxu0 0.0
    %3281 = vmatpush1.msra.mxu0 0.0
    %3282 = vmatprep.subr.mxu0 0.0
    %3283 = vmatpush1.msra.mxu0 0.0
    %3284 = vmatprep.subr.mxu0 0.0
    %3285 = vmatpush1.msra.mxu0 0.0
    %3286 = vmatprep.subr.mxu0 0.0
    %3287 = vmatpush1.msra.mxu0 0.0
    %3288 = vmatprep.subr.mxu0 0.0
    %3289 = vmatpush1.msra.mxu0 0.0
    %3290 = vmatprep.subr.mxu0 0.0
    %3291 = vmatpush1.msra.mxu0 0.0
    %3292 = vmatprep.subr.mxu0 0.0
    %3293 = vmatpush1.msra.mxu0 0.0
    %3294 = vmatprep.subr.mxu0 0.0
    %3295 = vmatpush1.msra.mxu0 0.0
    %3296 = vmatprep.subr.mxu0 0.0
    %3297 = vmatpush1.msra.mxu0 0.0
    %3298 = vmatprep.subr.mxu0 0.0
    %3299 = vmatpush1.msra.mxu0 0.0
    %3300 = vmatprep.subr.mxu0 0.0
    %3301 = vmatpush1.msra.mxu0 0.0
    %3302 = vmatprep.subr.mxu0 0.0
    %3303 = vmatpush1.msra.mxu0 0.0
    %3304 = vmatprep.subr.mxu0 0.0
    %3305 = vmatpush1.msra.mxu0 0.0
    %3306 = vmatprep.subr.mxu0 0.0
    %3307 = vmatpush1.msra.mxu0 0.0
    %3308 = vmatprep.subr.mxu0 0.0
    %3309 = vmatpush1.msra.mxu0 0.0
    %3310 = vmatprep.subr.mxu0 0.0
    %3311 = vmatpush1.msra.mxu0 0.0
    %3312 = vmatprep.subr.mxu0 0.0
    %3313 = vmatpush1.msra.mxu0 0.0
    %3314 = vmatprep.mubr.f32.mxu0 0.0
    %3315 = vmatmul.mubr.f32.gmra.mrb[0].mxu0 %v3248
    %v3316 = vpop.f32.mrb[0].mxu0
    %v3317 = vadd.f32 0.0, %v3316
    %v3318 = vpop.f32.mrb[0].mxu0
    %3319 = vdwg.mxu0
    %3322 = vrot.lane.b32.xlu0 %v2937, 8
    %v3323 = vpop.permute.xlu0 %3322
    %3324 = vrot.lane.b32.xlu0 %v3013, 8
    %v3325 = vpop.permute.xlu0 %3324
    %3330 = vrot.lane.b32.xlu0 %v3089, 16
    %v3331 = vpop.permute.xlu0 %3330
    %3332 = vrot.lane.b32.xlu0 %v3165, 16
    %v3333 = vpop.permute.xlu0 %3332
    %3338 = vrot.lane.b32.xlu0 %v3241, 24
    %v3339 = vpop.permute.xlu0 %3338
    %3340 = vrot.lane.b32.xlu0 %v3317, 24
    %v3341 = vpop.permute.xlu0 %3340
    %v3344 = vsel %vm203, %v2785, %v3323
    %v3345 = vsel %vm203, %v2861, %v3325
    %v3346 = vsel %vm1532, %v3344, %v3331
    %v3347 = vsel %vm1532, %v3345, %v3333
    %v3348 = vsel %vm1535, %v3346, %v3339
    %v3349 = vsel %vm1535, %v3347, %v3341
    %s3350 = scalar_lea.vmem %s4, 32
    %v3351 = vld [vmem:[%s3350] sm:$0xff]
    %v3352 = vld [vmem:[%s3350 + $0x8] sm:$0xff]
    %v3353 = vld [vmem:[%s3350 + $0x10] sm:$0xff]
    %v3354 = vld [vmem:[%s3350 + $0x18] sm:$0xff]
    %s3355 = scalar_lea.vmem %s5, 1
    %v3356 = vld [vmem:[%s3355] sm:$0x1]
    %v3358 = vlaneseq
    %v3359 = vshrl.u32 %v3358, 7
    %v3360 = vsub.s32 0, %v3359
    %v3361 = vrot.slane %v3356, %v3360
    %v3364 = vsel %vm58, %v3348, 0
    %v3367 = vsel %vm58, %v3349, 0
    %3369 = vmatprep.subr.mxu0 0.0
    %3370 = vmatpush1.msra.mxu0 %v3351
    %3371 = vmatprep.subr.mxu0 0.0
    %3372 = vmatpush1.msra.mxu0 %v3352
    %3373 = vmatprep.subr.mxu0 0.0
    %3374 = vmatpush1.msra.mxu0 %v3353
    %3375 = vmatprep.subr.mxu0 0.0
    %3376 = vmatpush1.msra.mxu0 %v3354
    %3377 = vmatprep.subr.mxu0 0.0
    %3378 = vmatpush1.msra.mxu0 0.0
    %3379 = vmatprep.subr.mxu0 0.0
    %3380 = vmatpush1.msra.mxu0 0.0
    %3381 = vmatprep.subr.mxu0 0.0
    %3382 = vmatpush1.msra.mxu0 0.0
    %3383 = vmatprep.subr.mxu0 0.0
    %3384 = vmatpush1.msra.mxu0 0.0
    %3385 = vmatprep.subr.mxu0 0.0
    %3386 = vmatpush1.msra.mxu0 0.0
    %3387 = vmatprep.subr.mxu0 0.0
    %3388 = vmatpush1.msra.mxu0 0.0
    %3389 = vmatprep.subr.mxu0 0.0
    %3390 = vmatpush1.msra.mxu0 0.0
    %3391 = vmatprep.subr.mxu0 0.0
    %3392 = vmatpush1.msra.mxu0 0.0
    %3393 = vmatprep.subr.mxu0 0.0
    %3394 = vmatpush1.msra.mxu0 0.0
    %3395 = vmatprep.subr.mxu0 0.0
    %3396 = vmatpush1.msra.mxu0 0.0
    %3397 = vmatprep.subr.mxu0 0.0
    %3398 = vmatpush1.msra.mxu0 0.0
    %3399 = vmatprep.subr.mxu0 0.0
    %3400 = vmatpush1.msra.mxu0 0.0
    %3401 = vmatprep.subr.mxu0 0.0
    %3402 = vmatpush1.msra.mxu0 0.0
    %3403 = vmatprep.subr.mxu0 0.0
    %3404 = vmatpush1.msra.mxu0 0.0
    %3405 = vmatprep.subr.mxu0 0.0
    %3406 = vmatpush1.msra.mxu0 0.0
    %3407 = vmatprep.subr.mxu0 0.0
    %3408 = vmatpush1.msra.mxu0 0.0
    %3409 = vmatprep.subr.mxu0 0.0
    %3410 = vmatpush1.msra.mxu0 0.0
    %3411 = vmatprep.subr.mxu0 0.0
    %3412 = vmatpush1.msra.mxu0 0.0
    %3413 = vmatprep.subr.mxu0 0.0
    %3414 = vmatpush1.msra.mxu0 0.0
    %3415 = vmatprep.subr.mxu0 0.0
    %3416 = vmatpush1.msra.mxu0 0.0
    %3417 = vmatprep.subr.mxu0 0.0
    %3418 = vmatpush1.msra.mxu0 0.0
    %3419 = vmatprep.subr.mxu0 0.0
    %3420 = vmatpush1.msra.mxu0 0.0
    %3421 = vmatprep.subr.mxu0 0.0
    %3422 = vmatpush1.msra.mxu0 0.0
    %3423 = vmatprep.subr.mxu0 0.0
    %3424 = vmatpush1.msra.mxu0 0.0
    %3425 = vmatprep.subr.mxu0 0.0
    %3426 = vmatpush1.msra.mxu0 0.0
    %3427 = vmatprep.subr.mxu0 0.0
    %3428 = vmatpush1.msra.mxu0 0.0
    %3429 = vmatprep.subr.mxu0 0.0
    %3430 = vmatpush1.msra.mxu0 0.0
    %3431 = vmatprep.subr.mxu0 0.0
    %3432 = vmatpush1.msra.mxu0 0.0
    %3433 = vmatprep.mubr.f32.mxu0 0.0
    %3434 = vmatmul.mubr.f32.gmra.mrb[0].mxu0 %v3364
    %v3435 = vpop.f32.mrb[0].mxu0
    %v3436 = vadd.f32 %v3361, %v3435
    %v3437 = vpop.f32.mrb[0].mxu0
    %3438 = vmatprep.mubr.f32.mxu0 0.0
    %3439 = vmatmul.mubr.f32.gmra.mrb[0].mxu0 %v3367
    %v3440 = vpop.f32.mrb[0].mxu0
    %v3441 = vadd.f32 %v3361, %v3440
    %v3442 = vpop.f32.mrb[0].mxu0
    %3443 = vdwg.mxu0
    %v3444 = vadd.f32 %v1868, %v3436
    %v3445 = vadd.f32 %v1869, %v3441
    %s3446 = scalar_lea.vmem %s6, 1
    %v3447 = vld [vmem:[%s3446] sm:$0x1]
    %s3448 = scalar_lea.vmem %s7, 1
    %v3449 = vld [vmem:[%s3448] sm:$0x1]
    %v3450 = vsel %vm58, %v3444, 0.0
    %3451 = vadd.xlane.f32.xlu0 %v3450
    %v3452 = vpop.xlane.xlu0 %3451
    %v3453 = vsel %vm58, %v3445, 0.0
    %3454 = vadd.xlane.f32.xlu0 %v3453
    %v3455 = vpop.xlane.xlu0 %3454
    %v3456 = vmul.f32 %v3452, %v65
    %v3457 = vmul.f32 %v3455, %v65
    %v3458 = vsub.f32 %v3444, %v3456
    %v3459 = vsub.f32 %v3445, %v3457
    %v3460 = vmul.f32 %v3458, %v3458
    %v3461 = vmul.f32 %v3459, %v3459
    %v3462 = vsel %vm58, %v3460, 0.0
    %3463 = vadd.xlane.f32.xlu0 %v3462
    %v3464 = vpop.xlane.xlu0 %3463
    %v3465 = vsel %vm58, %v3461, 0.0
    %3466 = vadd.xlane.f32.xlu0 %v3465
    %v3467 = vpop.xlane.xlu0 %3466
    %v3468 = vmul.f32 %v3464, %v65
    %v3469 = vmul.f32 %v3467, %v65
    %v3470 = vadd.f32 %v3468, 1e-05
    %v3471 = vadd.f32 %v3469, 1e-05
    %v3472 = vrsqrt.pop %v3470
    %v3473 = vrsqrt.pop %v3471
    %v3474 = vmul.f32 %v3458, %v3472
    %v3475 = vmul.f32 %v3459, %v3473
    %v3477 = vlaneseq
    %v3478 = vshrl.u32 %v3477, 7
    %v3479 = vsub.s32 0, %v3478
    %v3480 = vrot.slane %v3447, %v3479
    %v3482 = vmul.f32 %v3474, %v3480
    %v3483 = vmul.f32 %v3475, %v3480
    %v3485 = vlaneseq
    %v3486 = vshrl.u32 %v3485, 7
    %v3487 = vsub.s32 0, %v3486
    %v3488 = vrot.slane %v3449, %v3487
    %v3490 = vadd.f32 %v3482, %v3488
    %v3491 = vadd.f32 %v3483, %v3488
    %s3492 = scalar_lea.vmem %s8, 32
    %v3493 = vld [vmem:[%s3492] sm:$0xff]
    %v3494 = vld [vmem:[%s3492 + $0x8] sm:$0xff]
    %v3495 = vld [vmem:[%s3492 + $0x10] sm:$0xff]
    %v3496 = vld [vmem:[%s3492 + $0x18] sm:$0xff]
    %s3497 = scalar_lea.vmem %s9, 1
    %v3498 = vld [vmem:[%s3497] sm:$0x1]
    %v3500 = vlaneseq
    %v3501 = vshrl.u32 %v3500, 7
    %v3502 = vsub.s32 0, %v3501
    %v3503 = vrot.slane %v3498, %v3502
    %v3506 = vsel %vm58, %v3490, 0
    %v3509 = vsel %vm58, %v3491, 0
    %3511 = vmatprep.subr.mxu0 0.0
    %3512 = vmatpush1.msra.mxu0 %v3493
    %3513 = vmatprep.subr.mxu0 0.0
    %3514 = vmatpush1.msra.mxu0 %v3494
    %3515 = vmatprep.subr.mxu0 0.0
    %3516 = vmatpush1.msra.mxu0 %v3495
    %3517 = vmatprep.subr.mxu0 0.0
    %3518 = vmatpush1.msra.mxu0 %v3496
    %3519 = vmatprep.subr.mxu0 0.0
    %3520 = vmatpush1.msra.mxu0 0.0
    %3521 = vmatprep.subr.mxu0 0.0
    %3522 = vmatpush1.msra.mxu0 0.0
    %3523 = vmatprep.subr.mxu0 0.0
    %3524 = vmatpush1.msra.mxu0 0.0
    %3525 = vmatprep.subr.mxu0 0.0
    %3526 = vmatpush1.msra.mxu0 0.0
    %3527 = vmatprep.subr.mxu0 0.0
    %3528 = vmatpush1.msra.mxu0 0.0
    %3529 = vmatprep.subr.mxu0 0.0
    %3530 = vmatpush1.msra.mxu0 0.0
    %3531 = vmatprep.subr.mxu0 0.0
    %3532 = vmatpush1.msra.mxu0 0.0
    %3533 = vmatprep.subr.mxu0 0.0
    %3534 = vmatpush1.msra.mxu0 0.0
    %3535 = vmatprep.subr.mxu0 0.0
    %3536 = vmatpush1.msra.mxu0 0.0
    %3537 = vmatprep.subr.mxu0 0.0
    %3538 = vmatpush1.msra.mxu0 0.0
    %3539 = vmatprep.subr.mxu0 0.0
    %3540 = vmatpush1.msra.mxu0 0.0
    %3541 = vmatprep.subr.mxu0 0.0
    %3542 = vmatpush1.msra.mxu0 0.0
    %3543 = vmatprep.subr.mxu0 0.0
    %3544 = vmatpush1.msra.mxu0 0.0
    %3545 = vmatprep.subr.mxu0 0.0
    %3546 = vmatpush1.msra.mxu0 0.0
    %3547 = vmatprep.subr.mxu0 0.0
    %3548 = vmatpush1.msra.mxu0 0.0
    %3549 = vmatprep.subr.mxu0 0.0
    %3550 = vmatpush1.msra.mxu0 0.0
    %3551 = vmatprep.subr.mxu0 0.0
    %3552 = vmatpush1.msra.mxu0 0.0
    %3553 = vmatprep.subr.mxu0 0.0
    %3554 = vmatpush1.msra.mxu0 0.0
    %3555 = vmatprep.subr.mxu0 0.0
    %3556 = vmatpush1.msra.mxu0 0.0
    %3557 = vmatprep.subr.mxu0 0.0
    %3558 = vmatpush1.msra.mxu0 0.0
    %3559 = vmatprep.subr.mxu0 0.0
    %3560 = vmatpush1.msra.mxu0 0.0
    %3561 = vmatprep.subr.mxu0 0.0
    %3562 = vmatpush1.msra.mxu0 0.0
    %3563 = vmatprep.subr.mxu0 0.0
    %3564 = vmatpush1.msra.mxu0 0.0
    %3565 = vmatprep.subr.mxu0 0.0
    %3566 = vmatpush1.msra.mxu0 0.0
    %3567 = vmatprep.subr.mxu0 0.0
    %3568 = vmatpush1.msra.mxu0 0.0
    %3569 = vmatprep.subr.mxu0 0.0
    %3570 = vmatpush1.msra.mxu0 0.0
    %3571 = vmatprep.subr.mxu0 0.0
    %3572 = vmatpush1.msra.mxu0 0.0
    %3573 = vmatprep.subr.mxu0 0.0
    %3574 = vmatpush1.msra.mxu0 0.0
    %3575 = vmatprep.mubr.f32.mxu0 0.0
    %3576 = vmatmul.mubr.f32.gmra.mrb[0].mxu0 %v3506
    %v3577 = vpop.f32.mrb[0].mxu0
    %v3578 = vadd.f32 %v3503, %v3577
    %v3579 = vpop.f32.mrb[0].mxu0
    %3580 = vmatprep.mubr.f32.mxu0 0.0
    %3581 = vmatmul.mubr.f32.gmra.mrb[0].mxu0 %v3509
    %v3582 = vpop.f32.mrb[0].mxu0
    %v3583 = vadd.f32 %v3503, %v3582
    %v3584 = vpop.f32.mrb[0].mxu0
    %3585 = vdwg.mxu0
    %v3586 = vmax.f32 %v3578, 0.0
    %v3587 = vmax.f32 %v3583, 0.0
    %s3588 = scalar_lea.vmem %s10, 128
    %v3589 = vld [vmem:[%s3588] sm:$0xff]
    %v3590 = vld [vmem:[%s3588 + $0x8] sm:$0xff]
    %v3591 = vld [vmem:[%s3588 + $0x10] sm:$0xff]
    %v3592 = vld [vmem:[%s3588 + $0x18] sm:$0xff]
    %v3593 = vld [vmem:[%s3588 + $0x20] sm:$0xff]
    %v3594 = vld [vmem:[%s3588 + $0x28] sm:$0xff]
    %v3595 = vld [vmem:[%s3588 + $0x30] sm:$0xff]
    %v3596 = vld [vmem:[%s3588 + $0x38] sm:$0xff]
    %v3597 = vld [vmem:[%s3588 + $0x40] sm:$0xff]
    %v3598 = vld [vmem:[%s3588 + $0x48] sm:$0xff]
    %v3599 = vld [vmem:[%s3588 + $0x50] sm:$0xff]
    %v3600 = vld [vmem:[%s3588 + $0x58] sm:$0xff]
    %v3601 = vld [vmem:[%s3588 + $0x60] sm:$0xff]
    %v3602 = vld [vmem:[%s3588 + $0x68] sm:$0xff]
    %v3603 = vld [vmem:[%s3588 + $0x70] sm:$0xff]
    %v3604 = vld [vmem:[%s3588 + $0x78] sm:$0xff]
    %s3605 = scalar_lea.vmem %s11, 1
    %v3606 = vld [vmem:[%s3605] sm:$0x1]
    %v3608 = vlaneseq
    %v3609 = vshrl.u32 %v3608, 7
    %v3610 = vsub.s32 0, %v3609
    %v3611 = vrot.slane %v3606, %v3610
    %3613 = vmatprep.subr.mxu0 0.0
    %3614 = vmatpush1.msra.mxu0 %v3589
    %3615 = vmatprep.subr.mxu0 0.0
    %3616 = vmatpush1.msra.mxu0 %v3590
    %3617 = vmatprep.subr.mxu0 0.0
    %3618 = vmatpush1.msra.mxu0 %v3591
    %3619 = vmatprep.subr.mxu0 0.0
    %3620 = vmatpush1.msra.mxu0 %v3592
    %3621 = vmatprep.subr.mxu0 0.0
    %3622 = vmatpush1.msra.mxu0 %v3593
    %3623 = vmatprep.subr.mxu0 0.0
    %3624 = vmatpush1.msra.mxu0 %v3594
    %3625 = vmatprep.subr.mxu0 0.0
    %3626 = vmatpush1.msra.mxu0 %v3595
    %3627 = vmatprep.subr.mxu0 0.0
    %3628 = vmatpush1.msra.mxu0 %v3596
    %3629 = vmatprep.subr.mxu0 0.0
    %3630 = vmatpush1.msra.mxu0 %v3597
    %3631 = vmatprep.subr.mxu0 0.0
    %3632 = vmatpush1.msra.mxu0 %v3598
    %3633 = vmatprep.subr.mxu0 0.0
    %3634 = vmatpush1.msra.mxu0 %v3599
    %3635 = vmatprep.subr.mxu0 0.0
    %3636 = vmatpush1.msra.mxu0 %v3600
    %3637 = vmatprep.subr.mxu0 0.0
    %3638 = vmatpush1.msra.mxu0 %v3601
    %3639 = vmatprep.subr.mxu0 0.0
    %3640 = vmatpush1.msra.mxu0 %v3602
    %3641 = vmatprep.subr.mxu0 0.0
    %3642 = vmatpush1.msra.mxu0 %v3603
    %3643 = vmatprep.subr.mxu0 0.0
    %3644 = vmatpush1.msra.mxu0 %v3604
    %3645 = vmatprep.subr.mxu0 0.0
    %3646 = vmatpush1.msra.mxu0 0.0
    %3647 = vmatprep.subr.mxu0 0.0
    %3648 = vmatpush1.msra.mxu0 0.0
    %3649 = vmatprep.subr.mxu0 0.0
    %3650 = vmatpush1.msra.mxu0 0.0
    %3651 = vmatprep.subr.mxu0 0.0
    %3652 = vmatpush1.msra.mxu0 0.0
    %3653 = vmatprep.subr.mxu0 0.0
    %3654 = vmatpush1.msra.mxu0 0.0
    %3655 = vmatprep.subr.mxu0 0.0
    %3656 = vmatpush1.msra.mxu0 0.0
    %3657 = vmatprep.subr.mxu0 0.0
    %3658 = vmatpush1.msra.mxu0 0.0
    %3659 = vmatprep.subr.mxu0 0.0
    %3660 = vmatpush1.msra.mxu0 0.0
    %3661 = vmatprep.subr.mxu0 0.0
    %3662 = vmatpush1.msra.mxu0 0.0
    %3663 = vmatprep.subr.mxu0 0.0
    %3664 = vmatpush1.msra.mxu0 0.0
    %3665 = vmatprep.subr.mxu0 0.0
    %3666 = vmatpush1.msra.mxu0 0.0
    %3667 = vmatprep.subr.mxu0 0.0
    %3668 = vmatpush1.msra.mxu0 0.0
    %3669 = vmatprep.subr.mxu0 0.0
    %3670 = vmatpush1.msra.mxu0 0.0
    %3671 = vmatprep.subr.mxu0 0.0
    %3672 = vmatpush1.msra.mxu0 0.0
    %3673 = vmatprep.subr.mxu0 0.0
    %3674 = vmatpush1.msra.mxu0 0.0
    %3675 = vmatprep.subr.mxu0 0.0
    %3676 = vmatpush1.msra.mxu0 0.0
    %3677 = vmatprep.mubr.f32.mxu0 0.0
    %3678 = vmatmul.mubr.f32.gmra.mrb[0].mxu0 %v3586
    %v3679 = vpop.f32.mrb[0].mxu0
    %v3680 = vadd.f32 %v3611, %v3679
    %v3681 = vpop.f32.mrb[0].mxu0
    %3682 = vmatprep.mubr.f32.mxu0 0.0
    %3683 = vmatmul.mubr.f32.gmra.mrb[0].mxu0 %v3587
    %v3684 = vpop.f32.mrb[0].mxu0
    %v3685 = vadd.f32 %v3611, %v3684
    %v3686 = vpop.f32.mrb[0].mxu0
    %3687 = vdwg.mxu0
    %v3688 = vadd.f32 %v3444, %v3680
    %v3689 = vadd.f32 %v3445, %v3685
    %v3690 = vld [vmem:[%s12] sm:$0xff]
    %v3691 = vld [vmem:[%s12 + $0x8] sm:$0xff]
    %v3692 = vld [vmem:[%s12 + $0x10] sm:$0xff]
    %v3693 = vld [vmem:[%s12 + $0x18] sm:$0xff]
    %v3694 = vld [vmem:[%s13] sm:$0x1]
    %v3696 = vlaneseq
    %v3697 = vshrl.u32 %v3696, 7
    %v3698 = vsub.s32 0, %v3697
    %v3699 = vrot.slane %v3694, %v3698
    %v3702 = vsel %vm58, %v3688, 0
    %v3705 = vsel %vm58, %v3689, 0
    %3707 = vmatprep.subr.mxu0 0.0
    %3708 = vmatpush1.msra.mxu0 %v3690
    %3709 = vmatprep.subr.mxu0 0.0
    %3710 = vmatpush1.msra.mxu0 %v3691
    %3711 = vmatprep.subr.mxu0 0.0
    %3712 = vmatpush1.msra.mxu0 %v3692
    %3713 = vmatprep.subr.mxu0 0.0
    %3714 = vmatpush1.msra.mxu0 %v3693
    %3715 = vmatprep.subr.mxu0 0.0
    %3716 = vmatpush1.msra.mxu0 0.0
    %3717 = vmatprep.subr.mxu0 0.0
    %3718 = vmatpush1.msra.mxu0 0.0
    %3719 = vmatprep.subr.mxu0 0.0
    %3720 = vmatpush1.msra.mxu0 0.0
    %3721 = vmatprep.subr.mxu0 0.0
    %3722 = vmatpush1.msra.mxu0 0.0
    %3723 = vmatprep.subr.mxu0 0.0
    %3724 = vmatpush1.msra.mxu0 0.0
    %3725 = vmatprep.subr.mxu0 0.0
    %3726 = vmatpush1.msra.mxu0 0.0
    %3727 = vmatprep.subr.mxu0 0.0
    %3728 = vmatpush1.msra.mxu0 0.0
    %3729 = vmatprep.subr.mxu0 0.0
    %3730 = vmatpush1.msra.mxu0 0.0
    %3731 = vmatprep.subr.mxu0 0.0
    %3732 = vmatpush1.msra.mxu0 0.0
    %3733 = vmatprep.subr.mxu0 0.0
    %3734 = vmatpush1.msra.mxu0 0.0
    %3735 = vmatprep.subr.mxu0 0.0
    %3736 = vmatpush1.msra.mxu0 0.0
    %3737 = vmatprep.subr.mxu0 0.0
    %3738 = vmatpush1.msra.mxu0 0.0
    %3739 = vmatprep.subr.mxu0 0.0
    %3740 = vmatpush1.msra.mxu0 0.0
    %3741 = vmatprep.subr.mxu0 0.0
    %3742 = vmatpush1.msra.mxu0 0.0
    %3743 = vmatprep.subr.mxu0 0.0
    %3744 = vmatpush1.msra.mxu0 0.0
    %3745 = vmatprep.subr.mxu0 0.0
    %3746 = vmatpush1.msra.mxu0 0.0
    %3747 = vmatprep.subr.mxu0 0.0
    %3748 = vmatpush1.msra.mxu0 0.0
    %3749 = vmatprep.subr.mxu0 0.0
    %3750 = vmatpush1.msra.mxu0 0.0
    %3751 = vmatprep.subr.mxu0 0.0
    %3752 = vmatpush1.msra.mxu0 0.0
    %3753 = vmatprep.subr.mxu0 0.0
    %3754 = vmatpush1.msra.mxu0 0.0
    %3755 = vmatprep.subr.mxu0 0.0
    %3756 = vmatpush1.msra.mxu0 0.0
    %3757 = vmatprep.subr.mxu0 0.0
    %3758 = vmatpush1.msra.mxu0 0.0
    %3759 = vmatprep.subr.mxu0 0.0
    %3760 = vmatpush1.msra.mxu0 0.0
    %3761 = vmatprep.subr.mxu0 0.0
    %3762 = vmatpush1.msra.mxu0 0.0
    %3763 = vmatprep.subr.mxu0 0.0
    %3764 = vmatpush1.msra.mxu0 0.0
    %3765 = vmatprep.subr.mxu0 0.0
    %3766 = vmatpush1.msra.mxu0 0.0
    %3767 = vmatprep.subr.mxu0 0.0
    %3768 = vmatpush1.msra.mxu0 0.0
    %3769 = vmatprep.subr.mxu0 0.0
    %3770 = vmatpush1.msra.mxu0 0.0
    %3771 = vmatprep.mubr.f32.mxu0 0.0
    %3772 = vmatmul.mubr.f32.gmra.mrb[0].mxu0 %v3702
    %v3773 = vpop.f32.mrb[0].mxu0
    %v3774 = vadd.f32 %v3699, %v3773
    %v3775 = vpop.f32.mrb[0].mxu0
    %3776 = vmatprep.mubr.f32.mxu0 0.0
    %3777 = vmatmul.mubr.f32.gmra.mrb[0].mxu0 %v3705
    %v3778 = vpop.f32.mrb[0].mxu0
    %v3779 = vadd.f32 %v3699, %v3778
    %v3780 = vpop.f32.mrb[0].mxu0
    %3781 = vdwg.mxu0
    %3782 = vst [vmem:[#allocation2] sm:$0xff] %v3774
    %3783 = vst [vmem:[#allocation2 + $0x8] sm:$0xff] %v3779
    // Predicated region
    $region58: #{gpt_forward.1} parent=1 // pred_check
      _
    $region59: #{gpt_forward.1} parent=1 // pred_check_branch
      %3785 = sbr.rel (0) target = $region61
    $region60: #{gpt_forward.1} parent=1 // pred_region
      %s3787 = ssub.s32 256, 256
      %3788 = vsyncadd [#allocation3], %s3787
      %s3789 = sshll.u32 [#allocation2], 4
      %s3790 = int_to_ptr.vmem [resolvable:$true] %s3789
      %3795 = dma.vmem_to_hbm [thread:$0]  %s3790, 256, %s14, [#allocation3], 128, 128, 8
    $region61: #{gpt_forward.1} parent=1 // pred_fallthru
      _
    // Predicated region
    $region62: #{gpt_forward.1} parent=1 // pred_check
      _
    $region63: #{gpt_forward.1} parent=1 // pred_check_branch
      %3797 = sbr.rel (0) target = $region65
    $region64: #{gpt_forward.1} parent=1 // pred_region
      %3798 = dma.done [#allocation3], 256
    $region65: #{gpt_forward.1} parent=1 // pred_fallthru
      _
    %3799 = vsyncpa [#allocation3], 1

</llo_original>
